<compile_context>
chip_gen: v6e
topology: v6e:2x2x1
jax: 0.10.0
libtpu: 0.0.40
codegen_flags: <defaults>
</compile_context>

<pallas_src>
import math

import jax
import jax.numpy as jnp
from jax.experimental import pallas as pl
from jax.experimental.pallas import tpu as pltpu


# -------------------- relative position bias (param-derived glue, plain JAX) ------------

def _relative_position_bucket(relative_position, bidirectional=True, n_buckets=32,
                              max_distance=128):
    # Faithfully mirrors the provided PyTorch module (including its max_exact/n_buckets
    # decrements before the log), NOT the canonical HF T5 bucketing.
    relative_buckets = jnp.zeros_like(relative_position)
    if bidirectional:
        n_buckets //= 2
        relative_buckets = relative_buckets + (relative_position > 0).astype(jnp.int32) * n_buckets
        relative_position = jnp.abs(relative_position)
    else:
        relative_position = -jnp.minimum(relative_position, jnp.zeros_like(relative_position))
    max_exact = n_buckets // 2
    is_small = relative_position < max_exact
    max_exact -= 1
    n_buckets -= 1
    # Guard log(0): values < max_exact are masked by `is_small` below anyway.
    safe_rel = jnp.maximum(relative_position, 1)
    rel_if_large = max_exact + (
        jnp.log(safe_rel.astype(jnp.float32) / max_exact)
        / math.log(max_distance / max_exact) * (n_buckets - max_exact)
    ).astype(jnp.int32)
    rel_if_large = jnp.minimum(rel_if_large, jnp.full_like(rel_if_large, n_buckets))
    relative_buckets = relative_buckets + jnp.where(is_small, relative_position, rel_if_large)
    return relative_buckets


def compute_position_bias(rel_emb, q_len, k_len, n_head, n_buckets, max_distance):
    ctx = jnp.arange(q_len, dtype=jnp.int32)[:, None]
    mem = jnp.arange(k_len, dtype=jnp.int32)[None, :]
    rel_pos = mem - ctx
    buckets = _relative_position_bucket(rel_pos, bidirectional=True,
                                        n_buckets=n_buckets, max_distance=max_distance)
    vals = rel_emb[buckets]                       # (Q, K, n_head)
    return jnp.transpose(vals, (2, 0, 1))         # (n_head, Q, K) f32


# -------------------- Pallas kernel ------------------------------------------------------

def _encoder_block_kernel(xf_ref, ln1_ref, wq_ref, wk_ref, wv_ref, wo_ref,
                          bias_ref, ln2_ref, w1_ref, w2_ref, out_ref,
                          k_scr, v_scr):
    f32 = jnp.float32
    bf16 = jnp.bfloat16
    n_head, t_full, hs = k_scr.shape
    tq = out_ref.shape[0]

    qi = pl.program_id(1)
    ln1 = ln1_ref[...]                                        # (1, D) f32

    # ---- K / V for the whole sequence: computed once per batch element with full-width
    #      (T,D)x(D,D) matmuls, head-split into persistent bf16 VMEM scratch and reused
    #      across query tiles ("arbitrary" axis). ----
    @pl.when(qi == 0)
    def _():
        xf = xf_ref[...]                                      # (T, D) f32
        var = jnp.mean(xf * xf, axis=-1, keepdims=True)
        hf = (ln1 * (xf * jax.lax.rsqrt(var + 1e-6))).astype(bf16)
        kf = jnp.dot(hf, wk_ref[...], preferred_element_type=f32)   # (T, D) full MXU width
        vf = jnp.dot(hf, wv_ref[...], preferred_element_type=f32)   # (T, D)
        for h in range(n_head):                               # head split = lane slices (XLU)
            k_scr[h] = kf[:, h * hs:(h + 1) * hs].astype(bf16)
            v_scr[h] = vf[:, h * hs:(h + 1) * hs].astype(bf16)

    # ---- query tile: sliced from the resident full-seq block (x read from HBM once) ----
    q_start = pl.multiple_of(qi * tq, tq)
    xq = xf_ref[pl.ds(q_start, tq), :]                        # (tq, D) f32, free VMEM slice
    var = jnp.mean(xq * xq, axis=-1, keepdims=True)
    hq = (ln1 * (xq * jax.lax.rsqrt(var + 1e-6))).astype(bf16)
    # 1/sqrt(hs) is folded into Wq on the host; one (tq,D)x(D,D) matmul, then head split.
    q2 = jnp.dot(hq, wq_ref[...], preferred_element_type=f32)            # (tq, D)
    q3 = jnp.stack([q2[:, h * hs:(h + 1) * hs] for h in range(n_head)],
                   axis=0).astype(bf16)                                  # (H, tq, hs)

    k3 = k_scr[...]                                           # (H, T, hs) bf16
    v3 = v_scr[...]                                           # (H, T, hs) bf16

    # ---- head-batched attention (head = batch dim 0) ----
    s = jnp.einsum('hqc,hkc->hqk', q3, k3,
                   preferred_element_type=f32)                # (H, tq, T) f32 (already scaled)
    s = s + bias_ref[...].astype(f32)                         # bf16 rel-pos bias tile
    s = s - jnp.max(s, axis=-1, keepdims=True)
    p = jnp.exp(s)                                            # unnormalized probs in (0, 1]
    denom = jnp.sum(p, axis=-1, keepdims=True)                # (H, tq, 1)
    ctx = jnp.einsum('hqk,hkc->hqc', p.astype(bf16), v3,
                     preferred_element_type=f32)              # (H, tq, hs) f32
    # Normalize AFTER PV: (H,tq,hs) multiplies instead of (H,tq,T); EUP reciprocal.
    ctx = ctx * pl.reciprocal(denom, approx=True)

    # Output projection as ONE (tq,D)x(D,D) matmul (K = D depth): merge heads via lane concat.
    ctx_flat = jnp.concatenate([ctx[h] for h in range(n_head)], axis=-1).astype(bf16)  # (tq, D)
    attn_out = jnp.dot(ctx_flat, wo_ref[...], preferred_element_type=f32)

    y = xq + attn_out                                         # residual 1 (dropout = identity)

    # ---- RMSNorm 2 + MLP (ReLU); two dense full-width matmuls, no chunking ----
    var2 = jnp.mean(y * y, axis=-1, keepdims=True)
    h2 = (ln2_ref[...] * (y * jax.lax.rsqrt(var2 + 1e-6))).astype(bf16)
    m = jnp.maximum(jnp.dot(h2, w1_ref[...], preferred_element_type=f32), 0.0).astype(bf16)
    out_ref[...] = y + jnp.dot(m, w2_ref[...], preferred_element_type=f32)  # residual 2


# -------------------- wrapper ------------------------------------------------------------

def encoder_block_pallas(x, params, *, n_head, n_buckets=32, max_distance=128,
                         single_buffer_weights=True):
    B, T, D = x.shape
    hs = D // n_head
    bf16 = jnp.bfloat16

    # TODO(synk): on v6e (128 MiB VMEM, 256-wide MXU) tq=256 + ~100 MiB vmem_limit is better;
    # on v7x consider tq=64 / head-chunked scores at very large T.
    tq = T if T <= 128 else 128
    assert T % tq == 0
    n_qt = T // tq
    hidden = params["w1"].shape[0]            # 4 * D

    # Host-side weight prep: (in, out) orientation, bf16 MXU operands, softmax scale in Wq.
    scale = 1.0 / math.sqrt(hs)
    wq_t = (params["wq"].T * scale).astype(bf16)       # (D, D), scale folded in
    wk_t = params["wk"].T.astype(bf16)                  # (D, D)
    wv_t = params["wv"].T.astype(bf16)                  # (D, D)
    wo_t = params["wo"].T.astype(bf16)                  # (D, D)
    w1_t = params["w1"].T.astype(bf16)                  # (D, 4D)
    w2_t = params["w2"].T.astype(bf16)                  # (4D, D)
    ln1 = params["ln1"].reshape(1, D).astype(jnp.float32)
    ln2 = params["ln2"].reshape(1, D).astype(jnp.float32)
    bias = compute_position_bias(params["rel_emb"], T, T, n_head,
                                 n_buckets, max_distance).astype(bf16)   # (H, T, T) bf16

    flops = (8 * B * T * D * D              # q/k/v/out projections
             + 4 * B * n_head * T * T * hs  # QK^T and PV
             + 4 * B * T * D * hidden)      # MLP
    bytes_accessed = (4 * B * T * D                    # x (read once)
                      + 4 * B * T * D                  # output
                      + 2 * B * n_head * T * T         # bf16 bias, streamed per batch element
                      + 2 * (4 * D * D + 2 * D * hidden)   # bf16 weights
                      + 2 * 4 * D)                     # LN scales (f32)
    cost = pl.CostEstimate(flops=flops, transcendentals=B * n_head * T * T,
                           bytes_accessed=bytes_accessed)

    # Constant-index operands: single-buffer to save VMEM (no throughput cost).
    if single_buffer_weights:
        def const(shape):
            return pl.BlockSpec(shape, lambda b, qi: (0,) * len(shape),
                                pipeline_mode=pl.Buffered(1))
        xf_spec = pl.BlockSpec((None, T, D), lambda b, qi: (b, 0, 0),
                               pipeline_mode=pl.Buffered(1))
    else:
        def const(shape):
            return pl.BlockSpec(shape, lambda b, qi: (0,) * len(shape))
        xf_spec = pl.BlockSpec((None, T, D), lambda b, qi: (b, 0, 0))

    return pl.pallas_call(
        _encoder_block_kernel,
        out_shape=jax.ShapeDtypeStruct((B, T, D), jnp.float32),
        grid=(B, n_qt),
        in_specs=[
            xf_spec,                                                  # x, full sequence
            const((1, D)),                                            # ln_1 weight
            const((D, D)),                                            # Wq (scaled, bf16)
            const((D, D)),                                            # Wk
            const((D, D)),                                            # Wv
            const((D, D)),                                            # Wo
            pl.BlockSpec((n_head, tq, T), lambda b, qi: (0, qi, 0)),  # rel-pos bias tile (bf16)
            const((1, D)),                                            # ln_2 weight
            const((D, hidden)),                                       # W1
            const((hidden, D)),                                       # W2
        ],
        out_specs=pl.BlockSpec((None, tq, D), lambda b, qi: (b, qi, 0)),
        scratch_shapes=[
            pltpu.VMEM((n_head, T, hs), bf16),   # K (persists across the q-tile axis)
            pltpu.VMEM((n_head, T, hs), bf16),   # V
        ],
        compiler_params=pltpu.CompilerParams(
            dimension_semantics=("parallel", "arbitrary"),
            vmem_limit_bytes=64 * 1024 * 1024),
        cost_estimate=cost,
    )(x, ln1, wq_t, wk_t, wv_t, wo_t, bias, ln2, w1_t, w2_t)


# -------------------- pure-JAX reference (mirrors the PyTorch forward) -------------------

def encoder_block_ref(x, params, *, n_head, n_buckets=32, max_distance=128):
    B, T, D = x.shape
    hs = D // n_head

    def rms(x, w):
        var = jnp.mean(x * x, axis=-1, keepdims=True)
        return w * (x * jax.lax.rsqrt(var + 1e-6))

    h = rms(x, params["ln1"])
    q = h @ params["wq"].T
    k = h @ params["wk"].T
    v = h @ params["wv"].T
    q, k, v = [t.reshape(B, T, n_head, hs).transpose(0, 2, 1, 3) for t in (q, k, v)]
    att = jnp.einsum("bhqd,bhkd->bhqk", q, k) / math.sqrt(hs)
    att = att + compute_position_bias(params["rel_emb"], T, T, n_head, n_buckets, max_distance)[None]
    att = jax.nn.softmax(att, axis=-1)
    o = jnp.einsum("bhqk,bhkd->bhqd", att, v).transpose(0, 2, 1, 3).reshape(B, T, D)
    o = o @ params["wo"].T
    x = x + o
    h2 = rms(x, params["ln2"])
    m = jnp.maximum(h2 @ params["w1"].T, 0.0) @ params["w2"].T
    return x + m


# -------------------- main ---------------------------------------------------------------

if __name__ == "__main__":
    B, T, D, n_head = 2, 8, 32, 4

    key = jax.random.PRNGKey(0)
    ks = jax.random.split(key, 9)
    params = {
        "ln1": jnp.ones((D,), jnp.float32),
        "wq": 0.02 * jax.random.normal(ks[0], (D, D), jnp.float32),
        "wk": 0.02 * jax.random.normal(ks[1], (D, D), jnp.float32),
        "wv": 0.02 * jax.random.normal(ks[2], (D, D), jnp.float32),
        "wo": 0.02 * jax.random.normal(ks[3], (D, D), jnp.float32),
        "rel_emb": 0.02 * jax.random.normal(ks[4], (32, n_head), jnp.float32),
        "ln2": jnp.ones((D,), jnp.float32),
        "w1": 0.02 * jax.random.normal(ks[5], (4 * D, D), jnp.float32),
        "w2": 0.02 * jax.random.normal(ks[6], (D, 4 * D), jnp.float32),
    }
    x = jax.random.normal(ks[7], (B, T, D), jnp.float32)

    try:
        out = jax.block_until_ready(
            encoder_block_pallas(x, params, n_head=n_head, single_buffer_weights=True))
    except Exception:
        # Fallback in case this JAX build does not plumb pipeline_mode=pl.Buffered(1)
        # through the top-level pallas_call pipeliner; kernel is otherwise identical.
        out = jax.block_until_ready(
            encoder_block_pallas(x, params, n_head=n_head, single_buffer_weights=False))

    ref = encoder_block_ref(x, params, n_head=n_head)
    assert out.shape == (B, T, D)
    err = float(jnp.max(jnp.abs(out - ref)))
    # bf16 MXU operands / bf16 bias + approx reciprocal vs. pure-f32 reference -> relaxed tol.
    assert err < 2e-2, f"mismatch vs JAX reference, max abs err = {err}"
    print("KERNEL_OK")
</pallas_src>

<mosaic_0001>
module attributes {stable_mosaic.version = 11 : i64} {
  func.func @_encoder_block_kernel(%arg0: i32, %arg1: i32, %arg2: memref<1x8x32xf32, #tpu.memory_space<vmem>>, %arg3: memref<1x32xf32, #tpu.memory_space<vmem>>, %arg4: memref<32x32xbf16, #tpu.memory_space<vmem>>, %arg5: memref<32x32xbf16, #tpu.memory_space<vmem>>, %arg6: memref<32x32xbf16, #tpu.memory_space<vmem>>, %arg7: memref<32x32xbf16, #tpu.memory_space<vmem>>, %arg8: memref<4x8x8xbf16, #tpu.memory_space<vmem>>, %arg9: memref<1x32xf32, #tpu.memory_space<vmem>>, %arg10: memref<32x128xbf16, #tpu.memory_space<vmem>>, %arg11: memref<128x32xbf16, #tpu.memory_space<vmem>>, %arg12: memref<1x8x32xf32, #tpu.memory_space<vmem>>, %arg13: memref<4x8x8xbf16, #tpu.memory_space<vmem>>, %arg14: memref<4x8x8xbf16, #tpu.memory_space<vmem>>) attributes {dimension_semantics = [#tpu.dimension_semantics<parallel>, #tpu.dimension_semantics<arbitrary>], iteration_bounds = array<i64: 2, 1>, scalar_prefetch = 0 : i64, scratch_operands = 2 : i64, tpu.core_type = #tpu.core_type<tc>, window_params = [{pipeline_mode = #tpu.pipeline_mode<synchronous>, transform_indices = @transform_0, window_bounds = array<i64: 1, 8, 32>}, {pipeline_mode = #tpu.pipeline_mode<synchronous>, transform_indices = @transform_1, window_bounds = array<i64: 1, 32>}, {pipeline_mode = #tpu.pipeline_mode<synchronous>, transform_indices = @transform_2, window_bounds = array<i64: 32, 32>}, {pipeline_mode = #tpu.pipeline_mode<synchronous>, transform_indices = @transform_3, window_bounds = array<i64: 32, 32>}, {pipeline_mode = #tpu.pipeline_mode<synchronous>, transform_indices = @transform_4, window_bounds = array<i64: 32, 32>}, {pipeline_mode = #tpu.pipeline_mode<synchronous>, transform_indices = @transform_5, window_bounds = array<i64: 32, 32>}, {transform_indices = @transform_6, window_bounds = array<i64: 4, 8, 8>}, {pipeline_mode = #tpu.pipeline_mode<synchronous>, transform_indices = @transform_7, window_bounds = array<i64: 1, 32>}, {pipeline_mode = #tpu.pipeline_mode<synchronous>, transform_indices = @transform_8, window_bounds = array<i64: 32, 128>}, {pipeline_mode = #tpu.pipeline_mode<synchronous>, transform_indices = @transform_9, window_bounds = array<i64: 128, 32>}, {transform_indices = @transform_10, window_bounds = array<i64: 1, 8, 32>}]} {
    %c0 = arith.constant 0 : index
    %c0_0 = arith.constant 0 : index
    %0 = vector.load %arg3[%c0, %c0_0] : memref<1x32xf32, #tpu.memory_space<vmem>>, vector<1x32xf32>
    %c0_i32 = arith.constant 0 : i32
    %1 = arith.cmpi eq, %arg1, %c0_i32 : i32
    %2 = arith.extui %1 : i1 to i32
    %c0_i32_1 = arith.constant 0 : i32
    %3 = arith.cmpi ne, %2, %c0_i32_1 : i32
    scf.if %3 {
      %c0_40 = arith.constant 0 : index
      %c0_41 = arith.constant 0 : index
      %c0_42 = arith.constant 0 : index
      %90 = vector.load %arg2[%c0_40, %c0_41, %c0_42] : memref<1x8x32xf32, #tpu.memory_space<vmem>>, vector<1x8x32xf32>
      %91 = vector.shape_cast %90 : vector<1x8x32xf32> to vector<8x32xf32>
      %92 = arith.mulf %91, %91 : vector<8x32xf32>
      %cst_43 = arith.constant dense<0.000000e+00> : vector<8xf32>
      %93 = vector.multi_reduction <add>, %92, %cst_43 [1] : vector<8x32xf32> to vector<8xf32>
      %94 = vector.shape_cast %93 : vector<8xf32> to vector<8x1xf32>
      %cst_44 = arith.constant 3.200000e+01 : f32
      %95 = vector.broadcast %cst_44 : f32 to vector<8x1xf32>
      %96 = arith.divf %94, %95 : vector<8x1xf32>
      %cst_45 = arith.constant 9.99999997E-7 : f32
      %97 = vector.broadcast %cst_45 : f32 to vector<8x1xf32>
      %98 = arith.addf %96, %97 : vector<8x1xf32>
      %99 = math.rsqrt %98 : vector<8x1xf32>
      %100 = vector.broadcast %99 : vector<8x1xf32> to vector<8x32xf32>
      %101 = arith.mulf %91, %100 : vector<8x32xf32>
      %102 = vector.broadcast %0 : vector<1x32xf32> to vector<8x32xf32>
      %103 = arith.mulf %102, %101 : vector<8x32xf32>
      %104 = arith.truncf %103 : vector<8x32xf32> to vector<8x32xbf16>
      %c0_46 = arith.constant 0 : index
      %c0_47 = arith.constant 0 : index
      %105 = vector.load %arg5[%c0_46, %c0_47] : memref<32x32xbf16, #tpu.memory_space<vmem>>, vector<32x32xbf16>
      %cst_48 = arith.constant dense<0.000000e+00> : vector<8x32xf32>
      %106 = tpu.matmul %104, %105, %cst_48 {dimension_numbers = #tpu.dot_dimension_numbers<[1], [0], [0], [1], [0, 0, 1, 1], [], []>} : vector<8x32xbf16>, vector<32x32xbf16>, vector<8x32xf32> -> vector<8x32xf32>
      %c0_49 = arith.constant 0 : index
      %c0_50 = arith.constant 0 : index
      %107 = vector.load %arg6[%c0_49, %c0_50] : memref<32x32xbf16, #tpu.memory_space<vmem>>, vector<32x32xbf16>
      %cst_51 = arith.constant dense<0.000000e+00> : vector<8x32xf32>
      %108 = tpu.matmul %104, %107, %cst_51 {dimension_numbers = #tpu.dot_dimension_numbers<[1], [0], [0], [1], [0, 0, 1, 1], [], []>} : vector<8x32xbf16>, vector<32x32xbf16>, vector<8x32xf32> -> vector<8x32xf32>
      %109 = vector.extract_strided_slice %106 {offsets = [0, 0], sizes = [8, 8], strides = [1, 1]} : vector<8x32xf32> to vector<8x8xf32>
      %110 = arith.truncf %109 : vector<8x8xf32> to vector<8x8xbf16>
      %c0_52 = arith.constant 0 : index
      %c0_53 = arith.constant 0 : index
      %c0_54 = arith.constant 0 : index
      %111 = vector.load %arg13[%c0_52, %c0_53, %c0_54] : memref<4x8x8xbf16, #tpu.memory_space<vmem>>, vector<1x8x8xbf16>
      %112 = vector.shape_cast %111 : vector<1x8x8xbf16> to vector<8x8xbf16>
      %113 = vector.shape_cast %110 : vector<8x8xbf16> to vector<1x8x8xbf16>
      tpu.vector_store %arg13[%c0_52, %c0_53, %c0_54], %113 {strides = array<i32>} : memref<4x8x8xbf16, #tpu.memory_space<vmem>>, vector<1x8x8xbf16>,
      %114 = vector.extract_strided_slice %108 {offsets = [0, 0], sizes = [8, 8], strides = [1, 1]} : vector<8x32xf32> to vector<8x8xf32>
      %115 = arith.truncf %114 : vector<8x8xf32> to vector<8x8xbf16>
      %c0_55 = arith.constant 0 : index
      %c0_56 = arith.constant 0 : index
      %c0_57 = arith.constant 0 : index
      %116 = vector.load %arg14[%c0_55, %c0_56, %c0_57] : memref<4x8x8xbf16, #tpu.memory_space<vmem>>, vector<1x8x8xbf16>
      %117 = vector.shape_cast %116 : vector<1x8x8xbf16> to vector<8x8xbf16>
      %118 = vector.shape_cast %115 : vector<8x8xbf16> to vector<1x8x8xbf16>
      tpu.vector_store %arg14[%c0_55, %c0_56, %c0_57], %118 {strides = array<i32>} : memref<4x8x8xbf16, #tpu.memory_space<vmem>>, vector<1x8x8xbf16>,
      %119 = vector.extract_strided_slice %106 {offsets = [0, 8], sizes = [8, 8], strides = [1, 1]} : vector<8x32xf32> to vector<8x8xf32>
      %120 = arith.truncf %119 : vector<8x8xf32> to vector<8x8xbf16>
      %c1 = arith.constant 1 : index
      %c0_58 = arith.constant 0 : index
      %c0_59 = arith.constant 0 : index
      %121 = vector.load %arg13[%c1, %c0_58, %c0_59] : memref<4x8x8xbf16, #tpu.memory_space<vmem>>, vector<1x8x8xbf16>
      %122 = vector.shape_cast %121 : vector<1x8x8xbf16> to vector<8x8xbf16>
      %123 = vector.shape_cast %120 : vector<8x8xbf16> to vector<1x8x8xbf16>
      tpu.vector_store %arg13[%c1, %c0_58, %c0_59], %123 {strides = array<i32>} : memref<4x8x8xbf16, #tpu.memory_space<vmem>>, vector<1x8x8xbf16>,
      %124 = vector.extract_strided_slice %108 {offsets = [0, 8], sizes = [8, 8], strides = [1, 1]} : vector<8x32xf32> to vector<8x8xf32>
      %125 = arith.truncf %124 : vector<8x8xf32> to vector<8x8xbf16>
      %c1_60 = arith.constant 1 : index
      %c0_61 = arith.constant 0 : index
      %c0_62 = arith.constant 0 : index
      %126 = vector.load %arg14[%c1_60, %c0_61, %c0_62] : memref<4x8x8xbf16, #tpu.memory_space<vmem>>, vector<1x8x8xbf16>
      %127 = vector.shape_cast %126 : vector<1x8x8xbf16> to vector<8x8xbf16>
      %128 = vector.shape_cast %125 : vector<8x8xbf16> to vector<1x8x8xbf16>
      tpu.vector_store %arg14[%c1_60, %c0_61, %c0_62], %128 {strides = array<i32>} : memref<4x8x8xbf16, #tpu.memory_space<vmem>>, vector<1x8x8xbf16>,
      %129 = vector.extract_strided_slice %106 {offsets = [0, 16], sizes = [8, 8], strides = [1, 1]} : vector<8x32xf32> to vector<8x8xf32>
      %130 = arith.truncf %129 : vector<8x8xf32> to vector<8x8xbf16>
      %c2 = arith.constant 2 : index
      %c0_63 = arith.constant 0 : index
      %c0_64 = arith.constant 0 : index
      %131 = vector.load %arg13[%c2, %c0_63, %c0_64] : memref<4x8x8xbf16, #tpu.memory_space<vmem>>, vector<1x8x8xbf16>
      %132 = vector.shape_cast %131 : vector<1x8x8xbf16> to vector<8x8xbf16>
      %133 = vector.shape_cast %130 : vector<8x8xbf16> to vector<1x8x8xbf16>
      tpu.vector_store %arg13[%c2, %c0_63, %c0_64], %133 {strides = array<i32>} : memref<4x8x8xbf16, #tpu.memory_space<vmem>>, vector<1x8x8xbf16>,
      %134 = vector.extract_strided_slice %108 {offsets = [0, 16], sizes = [8, 8], strides = [1, 1]} : vector<8x32xf32> to vector<8x8xf32>
      %135 = arith.truncf %134 : vector<8x8xf32> to vector<8x8xbf16>
      %c2_65 = arith.constant 2 : index
      %c0_66 = arith.constant 0 : index
      %c0_67 = arith.constant 0 : index
      %136 = vector.load %arg14[%c2_65, %c0_66, %c0_67] : memref<4x8x8xbf16, #tpu.memory_space<vmem>>, vector<1x8x8xbf16>
      %137 = vector.shape_cast %136 : vector<1x8x8xbf16> to vector<8x8xbf16>
      %138 = vector.shape_cast %135 : vector<8x8xbf16> to vector<1x8x8xbf16>
      tpu.vector_store %arg14[%c2_65, %c0_66, %c0_67], %138 {strides = array<i32>} : memref<4x8x8xbf16, #tpu.memory_space<vmem>>, vector<1x8x8xbf16>,
      %139 = vector.extract_strided_slice %106 {offsets = [0, 24], sizes = [8, 8], strides = [1, 1]} : vector<8x32xf32> to vector<8x8xf32>
      %140 = arith.truncf %139 : vector<8x8xf32> to vector<8x8xbf16>
      %c3 = arith.constant 3 : index
      %c0_68 = arith.constant 0 : index
      %c0_69 = arith.constant 0 : index
      %141 = vector.load %arg13[%c3, %c0_68, %c0_69] : memref<4x8x8xbf16, #tpu.memory_space<vmem>>, vector<1x8x8xbf16>
      %142 = vector.shape_cast %141 : vector<1x8x8xbf16> to vector<8x8xbf16>
      %143 = vector.shape_cast %140 : vector<8x8xbf16> to vector<1x8x8xbf16>
      tpu.vector_store %arg13[%c3, %c0_68, %c0_69], %143 {strides = array<i32>} : memref<4x8x8xbf16, #tpu.memory_space<vmem>>, vector<1x8x8xbf16>,
      %144 = vector.extract_strided_slice %108 {offsets = [0, 24], sizes = [8, 8], strides = [1, 1]} : vector<8x32xf32> to vector<8x8xf32>
      %145 = arith.truncf %144 : vector<8x8xf32> to vector<8x8xbf16>
      %c3_70 = arith.constant 3 : index
      %c0_71 = arith.constant 0 : index
      %c0_72 = arith.constant 0 : index
      %146 = vector.load %arg14[%c3_70, %c0_71, %c0_72] : memref<4x8x8xbf16, #tpu.memory_space<vmem>>, vector<1x8x8xbf16>
      %147 = vector.shape_cast %146 : vector<1x8x8xbf16> to vector<8x8xbf16>
      %148 = vector.shape_cast %145 : vector<8x8xbf16> to vector<1x8x8xbf16>
      tpu.vector_store %arg14[%c3_70, %c0_71, %c0_72], %148 {strides = array<i32>} : memref<4x8x8xbf16, #tpu.memory_space<vmem>>, vector<1x8x8xbf16>,
    } else {
    }
    %c8_i32 = arith.constant 8 : i32
    %4 = arith.muli %arg1, %c8_i32 : i32
    %5 = tpu.assume_multiple %4, 8 : i32
    %c0_2 = arith.constant 0 : index
    %6 = arith.index_cast %5 : i32 to index
    %c0_3 = arith.constant 0 : index
    %7 = vector.load %arg2[%c0_2, %6, %c0_3] : memref<1x8x32xf32, #tpu.memory_space<vmem>>, vector<1x8x32xf32>
    %8 = vector.shape_cast %7 : vector<1x8x32xf32> to vector<8x32xf32>
    %9 = arith.mulf %8, %8 : vector<8x32xf32>
    %cst = arith.constant dense<0.000000e+00> : vector<8xf32>
    %10 = vector.multi_reduction <add>, %9, %cst [1] : vector<8x32xf32> to vector<8xf32>
    %11 = vector.shape_cast %10 : vector<8xf32> to vector<8x1xf32>
    %cst_4 = arith.constant 3.200000e+01 : f32
    %12 = vector.broadcast %cst_4 : f32 to vector<8x1xf32>
    %13 = arith.divf %11, %12 : vector<8x1xf32>
    %cst_5 = arith.constant 9.99999997E-7 : f32
    %14 = vector.broadcast %cst_5 : f32 to vector<8x1xf32>
    %15 = arith.addf %13, %14 : vector<8x1xf32>
    %16 = math.rsqrt %15 : vector<8x1xf32>
    %17 = vector.broadcast %16 : vector<8x1xf32> to vector<8x32xf32>
    %18 = arith.mulf %8, %17 : vector<8x32xf32>
    %19 = vector.broadcast %0 : vector<1x32xf32> to vector<8x32xf32>
    %20 = arith.mulf %19, %18 : vector<8x32xf32>
    %21 = arith.truncf %20 : vector<8x32xf32> to vector<8x32xbf16>
    %c0_6 = arith.constant 0 : index
    %c0_7 = arith.constant 0 : index
    %22 = vector.load %arg4[%c0_6, %c0_7] : memref<32x32xbf16, #tpu.memory_space<vmem>>, vector<32x32xbf16>
    %cst_8 = arith.constant dense<0.000000e+00> : vector<8x32xf32>
    %23 = tpu.matmul %21, %22, %cst_8 {dimension_numbers = #tpu.dot_dimension_numbers<[1], [0], [0], [1], [0, 0, 1, 1], [], []>} : vector<8x32xbf16>, vector<32x32xbf16>, vector<8x32xf32> -> vector<8x32xf32>
    %24 = vector.extract_strided_slice %23 {offsets = [0, 0], sizes = [8, 8], strides = [1, 1]} : vector<8x32xf32> to vector<8x8xf32>
    %25 = vector.extract_strided_slice %23 {offsets = [0, 8], sizes = [8, 8], strides = [1, 1]} : vector<8x32xf32> to vector<8x8xf32>
    %26 = vector.extract_strided_slice %23 {offsets = [0, 16], sizes = [8, 8], strides = [1, 1]} : vector<8x32xf32> to vector<8x8xf32>
    %27 = vector.extract_strided_slice %23 {offsets = [0, 24], sizes = [8, 8], strides = [1, 1]} : vector<8x32xf32> to vector<8x8xf32>
    %28 = vector.shape_cast %24 : vector<8x8xf32> to vector<1x8x8xf32>
    %29 = vector.shape_cast %25 : vector<8x8xf32> to vector<1x8x8xf32>
    %30 = vector.shape_cast %26 : vector<8x8xf32> to vector<1x8x8xf32>
    %31 = vector.shape_cast %27 : vector<8x8xf32> to vector<1x8x8xf32>
    %32 = tpu.concatenate %28, %29, %30, %31 in 0 : vector<1x8x8xf32>, vector<1x8x8xf32>, vector<1x8x8xf32>, vector<1x8x8xf32> -> vector<4x8x8xf32>
    %33 = arith.truncf %32 : vector<4x8x8xf32> to vector<4x8x8xbf16>
    %c0_9 = arith.constant 0 : index
    %c0_10 = arith.constant 0 : index
    %c0_11 = arith.constant 0 : index
    %34 = vector.load %arg13[%c0_9, %c0_10, %c0_11] : memref<4x8x8xbf16, #tpu.memory_space<vmem>>, vector<4x8x8xbf16>
    %c0_12 = arith.constant 0 : index
    %c0_13 = arith.constant 0 : index
    %c0_14 = arith.constant 0 : index
    %35 = vector.load %arg14[%c0_12, %c0_13, %c0_14] : memref<4x8x8xbf16, #tpu.memory_space<vmem>>, vector<4x8x8xbf16>
    "tpu.trace_start"() <{level = 10 : i32, message = "hqc,hkc->hqk"}> : () -> ()
    %cst_15 = arith.constant dense<0.000000e+00> : vector<4x8x8xf32>
    %36 = tpu.matmul %33, %34, %cst_15 {dimension_numbers = #tpu.dot_dimension_numbers<[2], [2], [1], [1], [0, 0, 0, 1, 1, 1], [0], [0]>} : vector<4x8x8xbf16>, vector<4x8x8xbf16>, vector<4x8x8xf32> -> vector<4x8x8xf32>
    "tpu.trace_stop"() : () -> ()
    %c0_16 = arith.constant 0 : index
    %c0_17 = arith.constant 0 : index
    %c0_18 = arith.constant 0 : index
    %37 = vector.load %arg8[%c0_16, %c0_17, %c0_18] : memref<4x8x8xbf16, #tpu.memory_space<vmem>>, vector<4x8x8xbf16>
    %38 = arith.extf %37 : vector<4x8x8xbf16> to vector<4x8x8xf32>
    %39 = arith.addf %36, %38 : vector<4x8x8xf32>
    %cst_19 = arith.constant dense<0xFF800000> : vector<4x8xf32>
    %40 = vector.multi_reduction <maximumf>, %39, %cst_19 [2] : vector<4x8x8xf32> to vector<4x8xf32>
    %41 = vector.shape_cast %40 : vector<4x8xf32> to vector<4x8x1xf32>
    %42 = vector.broadcast %41 : vector<4x8x1xf32> to vector<4x8x8xf32>
    %43 = arith.subf %39, %42 : vector<4x8x8xf32>
    %44 = math.exp %43 : vector<4x8x8xf32>
    %cst_20 = arith.constant dense<0.000000e+00> : vector<4x8xf32>
    %45 = vector.multi_reduction <add>, %44, %cst_20 [2] : vector<4x8x8xf32> to vector<4x8xf32>
    %46 = vector.shape_cast %45 : vector<4x8xf32> to vector<4x8x1xf32>
    %47 = arith.truncf %44 : vector<4x8x8xf32> to vector<4x8x8xbf16>
    "tpu.trace_start"() <{level = 10 : i32, message = "hqk,hkc->hqc"}> : () -> ()
    %cst_21 = arith.constant dense<0.000000e+00> : vector<4x8x8xf32>
    %48 = tpu.matmul %47, %35, %cst_21 {dimension_numbers = #tpu.dot_dimension_numbers<[2], [1], [1], [2], [0, 0, 0, 1, 1, 2], [0], [0]>} : vector<4x8x8xbf16>, vector<4x8x8xbf16>, vector<4x8x8xf32> -> vector<4x8x8xf32>
    "tpu.trace_stop"() : () -> ()
    %49 = tpu.reciprocal %46 {approx = true} : vector<4x8x1xf32> -> vector<4x8x1xf32>
    %50 = vector.broadcast %49 : vector<4x8x1xf32> to vector<4x8x8xf32>
    %51 = arith.mulf %48, %50 : vector<4x8x8xf32>
    %52 = vector.extract_strided_slice %51 {offsets = [0, 0, 0], sizes = [1, 8, 8], strides = [1, 1, 1]} : vector<4x8x8xf32> to vector<1x8x8xf32>
    %53 = vector.shape_cast %52 : vector<1x8x8xf32> to vector<8x8xf32>
    %54 = vector.extract_strided_slice %51 {offsets = [1, 0, 0], sizes = [1, 8, 8], strides = [1, 1, 1]} : vector<4x8x8xf32> to vector<1x8x8xf32>
    %55 = vector.shape_cast %54 : vector<1x8x8xf32> to vector<8x8xf32>
    %56 = vector.extract_strided_slice %51 {offsets = [2, 0, 0], sizes = [1, 8, 8], strides = [1, 1, 1]} : vector<4x8x8xf32> to vector<1x8x8xf32>
    %57 = vector.shape_cast %56 : vector<1x8x8xf32> to vector<8x8xf32>
    %58 = vector.extract_strided_slice %51 {offsets = [3, 0, 0], sizes = [1, 8, 8], strides = [1, 1, 1]} : vector<4x8x8xf32> to vector<1x8x8xf32>
    %59 = vector.shape_cast %58 : vector<1x8x8xf32> to vector<8x8xf32>
    %60 = tpu.concatenate %53, %55, %57, %59 in 1 : vector<8x8xf32>, vector<8x8xf32>, vector<8x8xf32>, vector<8x8xf32> -> vector<8x32xf32>
    %61 = arith.truncf %60 : vector<8x32xf32> to vector<8x32xbf16>
    %c0_22 = arith.constant 0 : index
    %c0_23 = arith.constant 0 : index
    %62 = vector.load %arg7[%c0_22, %c0_23] : memref<32x32xbf16, #tpu.memory_space<vmem>>, vector<32x32xbf16>
    %cst_24 = arith.constant dense<0.000000e+00> : vector<8x32xf32>
    %63 = tpu.matmul %61, %62, %cst_24 {dimension_numbers = #tpu.dot_dimension_numbers<[1], [0], [0], [1], [0, 0, 1, 1], [], []>} : vector<8x32xbf16>, vector<32x32xbf16>, vector<8x32xf32> -> vector<8x32xf32>
    %64 = arith.addf %8, %63 : vector<8x32xf32>
    %65 = arith.mulf %64, %64 : vector<8x32xf32>
    %cst_25 = arith.constant dense<0.000000e+00> : vector<8xf32>
    %66 = vector.multi_reduction <add>, %65, %cst_25 [1] : vector<8x32xf32> to vector<8xf32>
    %67 = vector.shape_cast %66 : vector<8xf32> to vector<8x1xf32>
    %cst_26 = arith.constant 3.200000e+01 : f32
    %68 = vector.broadcast %cst_26 : f32 to vector<8x1xf32>
    %69 = arith.divf %67, %68 : vector<8x1xf32>
    %c0_27 = arith.constant 0 : index
    %c0_28 = arith.constant 0 : index
    %70 = vector.load %arg9[%c0_27, %c0_28] : memref<1x32xf32, #tpu.memory_space<vmem>>, vector<1x32xf32>
    %cst_29 = arith.constant 9.99999997E-7 : f32
    %71 = vector.broadcast %cst_29 : f32 to vector<8x1xf32>
    %72 = arith.addf %69, %71 : vector<8x1xf32>
    %73 = math.rsqrt %72 : vector<8x1xf32>
    %74 = vector.broadcast %73 : vector<8x1xf32> to vector<8x32xf32>
    %75 = arith.mulf %64, %74 : vector<8x32xf32>
    %76 = vector.broadcast %70 : vector<1x32xf32> to vector<8x32xf32>
    %77 = arith.mulf %76, %75 : vector<8x32xf32>
    %78 = arith.truncf %77 : vector<8x32xf32> to vector<8x32xbf16>
    %c0_30 = arith.constant 0 : index
    %c0_31 = arith.constant 0 : index
    %79 = vector.load %arg10[%c0_30, %c0_31] : memref<32x128xbf16, #tpu.memory_space<vmem>>, vector<32x128xbf16>
    %cst_32 = arith.constant dense<0.000000e+00> : vector<8x128xf32>
    %80 = tpu.matmul %78, %79, %cst_32 {dimension_numbers = #tpu.dot_dimension_numbers<[1], [0], [0], [1], [0, 0, 1, 1], [], []>} : vector<8x32xbf16>, vector<32x128xbf16>, vector<8x128xf32> -> vector<8x128xf32>
    %cst_33 = arith.constant 0.000000e+00 : f32
    %81 = vector.broadcast %cst_33 : f32 to vector<8x128xf32>
    %82 = arith.maximumf %80, %81 : vector<8x128xf32>
    %83 = arith.truncf %82 : vector<8x128xf32> to vector<8x128xbf16>
    %c0_34 = arith.constant 0 : index
    %c0_35 = arith.constant 0 : index
    %84 = vector.load %arg11[%c0_34, %c0_35] : memref<128x32xbf16, #tpu.memory_space<vmem>>, vector<128x32xbf16>
    %cst_36 = arith.constant dense<0.000000e+00> : vector<8x32xf32>
    %85 = tpu.matmul %83, %84, %cst_36 {dimension_numbers = #tpu.dot_dimension_numbers<[1], [0], [0], [1], [0, 0, 1, 1], [], []>} : vector<8x128xbf16>, vector<128x32xbf16>, vector<8x32xf32> -> vector<8x32xf32>
    %86 = arith.addf %64, %85 : vector<8x32xf32>
    %c0_37 = arith.constant 0 : index
    %c0_38 = arith.constant 0 : index
    %c0_39 = arith.constant 0 : index
    %87 = vector.load %arg12[%c0_37, %c0_38, %c0_39] : memref<1x8x32xf32, #tpu.memory_space<vmem>>, vector<1x8x32xf32>
    %88 = vector.shape_cast %87 : vector<1x8x32xf32> to vector<8x32xf32>
    %89 = vector.shape_cast %86 : vector<8x32xf32> to vector<1x8x32xf32>
    tpu.vector_store %arg12[%c0_37, %c0_38, %c0_39], %89 {strides = array<i32>} : memref<1x8x32xf32, #tpu.memory_space<vmem>>, vector<1x8x32xf32>,
    return
  }
  func.func @transform_0(%arg0: i32, %arg1: i32) -> (i32, i32, i32) {
    %c0_i32 = arith.constant 0 : i32
    %c0_i32_0 = arith.constant 0 : i32
    %c0_i32_1 = arith.constant 0 : i32
    return %arg0, %c0_i32, %c0_i32_0 : i32, i32, i32
  }
  func.func @transform_1(%arg0: i32, %arg1: i32) -> (i32, i32) {
    %c0_i32 = arith.constant 0 : i32
    %c0_i32_0 = arith.constant 0 : i32
    %c0_i32_1 = arith.constant 0 : i32
    return %c0_i32, %c0_i32_0 : i32, i32
  }
  func.func @transform_2(%arg0: i32, %arg1: i32) -> (i32, i32) {
    %c0_i32 = arith.constant 0 : i32
    %c0_i32_0 = arith.constant 0 : i32
    %c0_i32_1 = arith.constant 0 : i32
    return %c0_i32, %c0_i32_0 : i32, i32
  }
  func.func @transform_3(%arg0: i32, %arg1: i32) -> (i32, i32) {
    %c0_i32 = arith.constant 0 : i32
    %c0_i32_0 = arith.constant 0 : i32
    %c0_i32_1 = arith.constant 0 : i32
    return %c0_i32, %c0_i32_0 : i32, i32
  }
  func.func @transform_4(%arg0: i32, %arg1: i32) -> (i32, i32) {
    %c0_i32 = arith.constant 0 : i32
    %c0_i32_0 = arith.constant 0 : i32
    %c0_i32_1 = arith.constant 0 : i32
    return %c0_i32, %c0_i32_0 : i32, i32
  }
  func.func @transform_5(%arg0: i32, %arg1: i32) -> (i32, i32) {
    %c0_i32 = arith.constant 0 : i32
    %c0_i32_0 = arith.constant 0 : i32
    %c0_i32_1 = arith.constant 0 : i32
    return %c0_i32, %c0_i32_0 : i32, i32
  }
  func.func @transform_6(%arg0: i32, %arg1: i32) -> (i32, i32, i32) {
    %c0_i32 = arith.constant 0 : i32
    %c0_i32_0 = arith.constant 0 : i32
    %c0_i32_1 = arith.constant 0 : i32
    return %c0_i32, %arg1, %c0_i32_0 : i32, i32, i32
  }
  func.func @transform_7(%arg0: i32, %arg1: i32) -> (i32, i32) {
    %c0_i32 = arith.constant 0 : i32
    %c0_i32_0 = arith.constant 0 : i32
    %c0_i32_1 = arith.constant 0 : i32
    return %c0_i32, %c0_i32_0 : i32, i32
  }
  func.func @transform_8(%arg0: i32, %arg1: i32) -> (i32, i32) {
    %c0_i32 = arith.constant 0 : i32
    %c0_i32_0 = arith.constant 0 : i32
    %c0_i32_1 = arith.constant 0 : i32
    return %c0_i32, %c0_i32_0 : i32, i32
  }
  func.func @transform_9(%arg0: i32, %arg1: i32) -> (i32, i32) {
    %c0_i32 = arith.constant 0 : i32
    %c0_i32_0 = arith.constant 0 : i32
    %c0_i32_1 = arith.constant 0 : i32
    return %c0_i32, %c0_i32_0 : i32, i32
  }
  func.func @transform_10(%arg0: i32, %arg1: i32) -> (i32, i32, i32) {
    %c0_i32 = arith.constant 0 : i32
    %c0_i32_0 = arith.constant 0 : i32
    return %arg0, %arg1, %c0_i32 : i32, i32, i32
  }
}

module attributes {stable_mosaic.version = 11 : i64} {
  func.func @_encoder_block_kernel(%arg0: i32, %arg1: i32, %arg2: memref<1x8x32xf32, #tpu.memory_space<vmem>>, %arg3: memref<1x32xf32, #tpu.memory_space<vmem>>, %arg4: memref<32x32xbf16, #tpu.memory_space<vmem>>, %arg5: memref<32x32xbf16, #tpu.memory_space<vmem>>, %arg6: memref<32x32xbf16, #tpu.memory_space<vmem>>, %arg7: memref<32x32xbf16, #tpu.memory_space<vmem>>, %arg8: memref<4x8x8xbf16, #tpu.memory_space<vmem>>, %arg9: memref<1x32xf32, #tpu.memory_space<vmem>>, %arg10: memref<32x128xbf16, #tpu.memory_space<vmem>>, %arg11: memref<128x32xbf16, #tpu.memory_space<vmem>>, %arg12: memref<1x8x32xf32, #tpu.memory_space<vmem>>, %arg13: memref<4x8x8xbf16, #tpu.memory_space<vmem>>, %arg14: memref<4x8x8xbf16, #tpu.memory_space<vmem>>) attributes {dimension_semantics = [#tpu.dimension_semantics<parallel>, #tpu.dimension_semantics<arbitrary>], iteration_bounds = array<i64: 2, 1>, scalar_prefetch = 0 : i64, scratch_operands = 2 : i64, tpu.core_type = #tpu.core_type<tc>, window_params = [{transform_indices = @transform_0, window_bounds = array<i64: 1, 8, 32>}, {pipeline_mode = #tpu.pipeline_mode<synchronous>, transform_indices = @transform_1, window_bounds = array<i64: 1, 32>}, {pipeline_mode = #tpu.pipeline_mode<synchronous>, transform_indices = @transform_2, window_bounds = array<i64: 32, 32>}, {pipeline_mode = #tpu.pipeline_mode<synchronous>, transform_indices = @transform_3, window_bounds = array<i64: 32, 32>}, {pipeline_mode = #tpu.pipeline_mode<synchronous>, transform_indices = @transform_4, window_bounds = array<i64: 32, 32>}, {pipeline_mode = #tpu.pipeline_mode<synchronous>, transform_indices = @transform_5, window_bounds = array<i64: 32, 32>}, {transform_indices = @transform_6, window_bounds = array<i64: 4, 8, 8>}, {pipeline_mode = #tpu.pipeline_mode<synchronous>, transform_indices = @transform_7, window_bounds = array<i64: 1, 32>}, {pipeline_mode = #tpu.pipeline_mode<synchronous>, transform_indices = @transform_8, window_bounds = array<i64: 32, 128>}, {pipeline_mode = #tpu.pipeline_mode<synchronous>, transform_indices = @transform_9, window_bounds = array<i64: 128, 32>}, {transform_indices = @transform_10, window_bounds = array<i64: 1, 8, 32>}]} {
    %c0 = arith.constant 0 : index
    %c0_0 = arith.constant 0 : index
    %0 = vector.load %arg3[%c0, %c0_0] : memref<1x32xf32, #tpu.memory_space<vmem>>, vector<1x32xf32>
    %c0_i32 = arith.constant 0 : i32
    %1 = arith.cmpi eq, %arg1, %c0_i32 : i32
    %2 = arith.extui %1 : i1 to i32
    %c0_i32_1 = arith.constant 0 : i32
    %3 = arith.cmpi ne, %2, %c0_i32_1 : i32
    scf.if %3 {
      %c0_40 = arith.constant 0 : index
      %c0_41 = arith.constant 0 : index
      %c0_42 = arith.constant 0 : index
      %90 = vector.load %arg2[%c0_40, %c0_41, %c0_42] : memref<1x8x32xf32, #tpu.memory_space<vmem>>, vector<1x8x32xf32>
      %91 = vector.shape_cast %90 : vector<1x8x32xf32> to vector<8x32xf32>
      %92 = arith.mulf %91, %91 : vector<8x32xf32>
      %cst_43 = arith.constant dense<0.000000e+00> : vector<8xf32>
      %93 = vector.multi_reduction <add>, %92, %cst_43 [1] : vector<8x32xf32> to vector<8xf32>
      %94 = vector.shape_cast %93 : vector<8xf32> to vector<8x1xf32>
      %cst_44 = arith.constant 3.200000e+01 : f32
      %95 = vector.broadcast %cst_44 : f32 to vector<8x1xf32>
      %96 = arith.divf %94, %95 : vector<8x1xf32>
      %cst_45 = arith.constant 9.99999997E-7 : f32
      %97 = vector.broadcast %cst_45 : f32 to vector<8x1xf32>
      %98 = arith.addf %96, %97 : vector<8x1xf32>
      %99 = math.rsqrt %98 : vector<8x1xf32>
      %100 = vector.broadcast %99 : vector<8x1xf32> to vector<8x32xf32>
      %101 = arith.mulf %91, %100 : vector<8x32xf32>
      %102 = vector.broadcast %0 : vector<1x32xf32> to vector<8x32xf32>
      %103 = arith.mulf %102, %101 : vector<8x32xf32>
      %104 = arith.truncf %103 : vector<8x32xf32> to vector<8x32xbf16>
      %c0_46 = arith.constant 0 : index
      %c0_47 = arith.constant 0 : index
      %105 = vector.load %arg5[%c0_46, %c0_47] : memref<32x32xbf16, #tpu.memory_space<vmem>>, vector<32x32xbf16>
      %cst_48 = arith.constant dense<0.000000e+00> : vector<8x32xf32>
      %106 = tpu.matmul %104, %105, %cst_48 {dimension_numbers = #tpu.dot_dimension_numbers<[1], [0], [0], [1], [0, 0, 1, 1], [], []>} : vector<8x32xbf16>, vector<32x32xbf16>, vector<8x32xf32> -> vector<8x32xf32>
      %c0_49 = arith.constant 0 : index
      %c0_50 = arith.constant 0 : index
      %107 = vector.load %arg6[%c0_49, %c0_50] : memref<32x32xbf16, #tpu.memory_space<vmem>>, vector<32x32xbf16>
      %cst_51 = arith.constant dense<0.000000e+00> : vector<8x32xf32>
      %108 = tpu.matmul %104, %107, %cst_51 {dimension_numbers = #tpu.dot_dimension_numbers<[1], [0], [0], [1], [0, 0, 1, 1], [], []>} : vector<8x32xbf16>, vector<32x32xbf16>, vector<8x32xf32> -> vector<8x32xf32>
      %109 = vector.extract_strided_slice %106 {offsets = [0, 0], sizes = [8, 8], strides = [1, 1]} : vector<8x32xf32> to vector<8x8xf32>
      %110 = arith.truncf %109 : vector<8x8xf32> to vector<8x8xbf16>
      %c0_52 = arith.constant 0 : index
      %c0_53 = arith.constant 0 : index
      %c0_54 = arith.constant 0 : index
      %111 = vector.load %arg13[%c0_52, %c0_53, %c0_54] : memref<4x8x8xbf16, #tpu.memory_space<vmem>>, vector<1x8x8xbf16>
      %112 = vector.shape_cast %111 : vector<1x8x8xbf16> to vector<8x8xbf16>
      %113 = vector.shape_cast %110 : vector<8x8xbf16> to vector<1x8x8xbf16>
      tpu.vector_store %arg13[%c0_52, %c0_53, %c0_54], %113 {strides = array<i32>} : memref<4x8x8xbf16, #tpu.memory_space<vmem>>, vector<1x8x8xbf16>,
      %114 = vector.extract_strided_slice %108 {offsets = [0, 0], sizes = [8, 8], strides = [1, 1]} : vector<8x32xf32> to vector<8x8xf32>
      %115 = arith.truncf %114 : vector<8x8xf32> to vector<8x8xbf16>
      %c0_55 = arith.constant 0 : index
      %c0_56 = arith.constant 0 : index
      %c0_57 = arith.constant 0 : index
      %116 = vector.load %arg14[%c0_55, %c0_56, %c0_57] : memref<4x8x8xbf16, #tpu.memory_space<vmem>>, vector<1x8x8xbf16>
      %117 = vector.shape_cast %116 : vector<1x8x8xbf16> to vector<8x8xbf16>
      %118 = vector.shape_cast %115 : vector<8x8xbf16> to vector<1x8x8xbf16>
      tpu.vector_store %arg14[%c0_55, %c0_56, %c0_57], %118 {strides = array<i32>} : memref<4x8x8xbf16, #tpu.memory_space<vmem>>, vector<1x8x8xbf16>,
      %119 = vector.extract_strided_slice %106 {offsets = [0, 8], sizes = [8, 8], strides = [1, 1]} : vector<8x32xf32> to vector<8x8xf32>
      %120 = arith.truncf %119 : vector<8x8xf32> to vector<8x8xbf16>
      %c1 = arith.constant 1 : index
      %c0_58 = arith.constant 0 : index
      %c0_59 = arith.constant 0 : index
      %121 = vector.load %arg13[%c1, %c0_58, %c0_59] : memref<4x8x8xbf16, #tpu.memory_space<vmem>>, vector<1x8x8xbf16>
      %122 = vector.shape_cast %121 : vector<1x8x8xbf16> to vector<8x8xbf16>
      %123 = vector.shape_cast %120 : vector<8x8xbf16> to vector<1x8x8xbf16>
      tpu.vector_store %arg13[%c1, %c0_58, %c0_59], %123 {strides = array<i32>} : memref<4x8x8xbf16, #tpu.memory_space<vmem>>, vector<1x8x8xbf16>,
      %124 = vector.extract_strided_slice %108 {offsets = [0, 8], sizes = [8, 8], strides = [1, 1]} : vector<8x32xf32> to vector<8x8xf32>
      %125 = arith.truncf %124 : vector<8x8xf32> to vector<8x8xbf16>
      %c1_60 = arith.constant 1 : index
      %c0_61 = arith.constant 0 : index
      %c0_62 = arith.constant 0 : index
      %126 = vector.load %arg14[%c1_60, %c0_61, %c0_62] : memref<4x8x8xbf16, #tpu.memory_space<vmem>>, vector<1x8x8xbf16>
      %127 = vector.shape_cast %126 : vector<1x8x8xbf16> to vector<8x8xbf16>
      %128 = vector.shape_cast %125 : vector<8x8xbf16> to vector<1x8x8xbf16>
      tpu.vector_store %arg14[%c1_60, %c0_61, %c0_62], %128 {strides = array<i32>} : memref<4x8x8xbf16, #tpu.memory_space<vmem>>, vector<1x8x8xbf16>,
      %129 = vector.extract_strided_slice %106 {offsets = [0, 16], sizes = [8, 8], strides = [1, 1]} : vector<8x32xf32> to vector<8x8xf32>
      %130 = arith.truncf %129 : vector<8x8xf32> to vector<8x8xbf16>
      %c2 = arith.constant 2 : index
      %c0_63 = arith.constant 0 : index
      %c0_64 = arith.constant 0 : index
      %131 = vector.load %arg13[%c2, %c0_63, %c0_64] : memref<4x8x8xbf16, #tpu.memory_space<vmem>>, vector<1x8x8xbf16>
      %132 = vector.shape_cast %131 : vector<1x8x8xbf16> to vector<8x8xbf16>
      %133 = vector.shape_cast %130 : vector<8x8xbf16> to vector<1x8x8xbf16>
      tpu.vector_store %arg13[%c2, %c0_63, %c0_64], %133 {strides = array<i32>} : memref<4x8x8xbf16, #tpu.memory_space<vmem>>, vector<1x8x8xbf16>,
      %134 = vector.extract_strided_slice %108 {offsets = [0, 16], sizes = [8, 8], strides = [1, 1]} : vector<8x32xf32> to vector<8x8xf32>
      %135 = arith.truncf %134 : vector<8x8xf32> to vector<8x8xbf16>
      %c2_65 = arith.constant 2 : index
      %c0_66 = arith.constant 0 : index
      %c0_67 = arith.constant 0 : index
      %136 = vector.load %arg14[%c2_65, %c0_66, %c0_67] : memref<4x8x8xbf16, #tpu.memory_space<vmem>>, vector<1x8x8xbf16>
      %137 = vector.shape_cast %136 : vector<1x8x8xbf16> to vector<8x8xbf16>
      %138 = vector.shape_cast %135 : vector<8x8xbf16> to vector<1x8x8xbf16>
      tpu.vector_store %arg14[%c2_65, %c0_66, %c0_67], %138 {strides = array<i32>} : memref<4x8x8xbf16, #tpu.memory_space<vmem>>, vector<1x8x8xbf16>,
      %139 = vector.extract_strided_slice %106 {offsets = [0, 24], sizes = [8, 8], strides = [1, 1]} : vector<8x32xf32> to vector<8x8xf32>
      %140 = arith.truncf %139 : vector<8x8xf32> to vector<8x8xbf16>
      %c3 = arith.constant 3 : index
      %c0_68 = arith.constant 0 : index
      %c0_69 = arith.constant 0 : index
      %141 = vector.load %arg13[%c3, %c0_68, %c0_69] : memref<4x8x8xbf16, #tpu.memory_space<vmem>>, vector<1x8x8xbf16>
      %142 = vector.shape_cast %141 : vector<1x8x8xbf16> to vector<8x8xbf16>
      %143 = vector.shape_cast %140 : vector<8x8xbf16> to vector<1x8x8xbf16>
      tpu.vector_store %arg13[%c3, %c0_68, %c0_69], %143 {strides = array<i32>} : memref<4x8x8xbf16, #tpu.memory_space<vmem>>, vector<1x8x8xbf16>,
      %144 = vector.extract_strided_slice %108 {offsets = [0, 24], sizes = [8, 8], strides = [1, 1]} : vector<8x32xf32> to vector<8x8xf32>
      %145 = arith.truncf %144 : vector<8x8xf32> to vector<8x8xbf16>
      %c3_70 = arith.constant 3 : index
      %c0_71 = arith.constant 0 : index
      %c0_72 = arith.constant 0 : index
      %146 = vector.load %arg14[%c3_70, %c0_71, %c0_72] : memref<4x8x8xbf16, #tpu.memory_space<vmem>>, vector<1x8x8xbf16>
      %147 = vector.shape_cast %146 : vector<1x8x8xbf16> to vector<8x8xbf16>
      %148 = vector.shape_cast %145 : vector<8x8xbf16> to vector<1x8x8xbf16>
      tpu.vector_store %arg14[%c3_70, %c0_71, %c0_72], %148 {strides = array<i32>} : memref<4x8x8xbf16, #tpu.memory_space<vmem>>, vector<1x8x8xbf16>,
    } else {
    }
    %c8_i32 = arith.constant 8 : i32
    %4 = arith.muli %arg1, %c8_i32 : i32
    %5 = tpu.assume_multiple %4, 8 : i32
    %c0_2 = arith.constant 0 : index
    %6 = arith.index_cast %5 : i32 to index
    %c0_3 = arith.constant 0 : index
    %7 = vector.load %arg2[%c0_2, %6, %c0_3] : memref<1x8x32xf32, #tpu.memory_space<vmem>>, vector<1x8x32xf32>
    %8 = vector.shape_cast %7 : vector<1x8x32xf32> to vector<8x32xf32>
    %9 = arith.mulf %8, %8 : vector<8x32xf32>
    %cst = arith.constant dense<0.000000e+00> : vector<8xf32>
    %10 = vector.multi_reduction <add>, %9, %cst [1] : vector<8x32xf32> to vector<8xf32>
    %11 = vector.shape_cast %10 : vector<8xf32> to vector<8x1xf32>
    %cst_4 = arith.constant 3.200000e+01 : f32
    %12 = vector.broadcast %cst_4 : f32 to vector<8x1xf32>
    %13 = arith.divf %11, %12 : vector<8x1xf32>
    %cst_5 = arith.constant 9.99999997E-7 : f32
    %14 = vector.broadcast %cst_5 : f32 to vector<8x1xf32>
    %15 = arith.addf %13, %14 : vector<8x1xf32>
    %16 = math.rsqrt %15 : vector<8x1xf32>
    %17 = vector.broadcast %16 : vector<8x1xf32> to vector<8x32xf32>
    %18 = arith.mulf %8, %17 : vector<8x32xf32>
    %19 = vector.broadcast %0 : vector<1x32xf32> to vector<8x32xf32>
    %20 = arith.mulf %19, %18 : vector<8x32xf32>
    %21 = arith.truncf %20 : vector<8x32xf32> to vector<8x32xbf16>
    %c0_6 = arith.constant 0 : index
    %c0_7 = arith.constant 0 : index
    %22 = vector.load %arg4[%c0_6, %c0_7] : memref<32x32xbf16, #tpu.memory_space<vmem>>, vector<32x32xbf16>
    %cst_8 = arith.constant dense<0.000000e+00> : vector<8x32xf32>
    %23 = tpu.matmul %21, %22, %cst_8 {dimension_numbers = #tpu.dot_dimension_numbers<[1], [0], [0], [1], [0, 0, 1, 1], [], []>} : vector<8x32xbf16>, vector<32x32xbf16>, vector<8x32xf32> -> vector<8x32xf32>
    %24 = vector.extract_strided_slice %23 {offsets = [0, 0], sizes = [8, 8], strides = [1, 1]} : vector<8x32xf32> to vector<8x8xf32>
    %25 = vector.extract_strided_slice %23 {offsets = [0, 8], sizes = [8, 8], strides = [1, 1]} : vector<8x32xf32> to vector<8x8xf32>
    %26 = vector.extract_strided_slice %23 {offsets = [0, 16], sizes = [8, 8], strides = [1, 1]} : vector<8x32xf32> to vector<8x8xf32>
    %27 = vector.extract_strided_slice %23 {offsets = [0, 24], sizes = [8, 8], strides = [1, 1]} : vector<8x32xf32> to vector<8x8xf32>
    %28 = vector.shape_cast %24 : vector<8x8xf32> to vector<1x8x8xf32>
    %29 = vector.shape_cast %25 : vector<8x8xf32> to vector<1x8x8xf32>
    %30 = vector.shape_cast %26 : vector<8x8xf32> to vector<1x8x8xf32>
    %31 = vector.shape_cast %27 : vector<8x8xf32> to vector<1x8x8xf32>
    %32 = tpu.concatenate %28, %29, %30, %31 in 0 : vector<1x8x8xf32>, vector<1x8x8xf32>, vector<1x8x8xf32>, vector<1x8x8xf32> -> vector<4x8x8xf32>
    %33 = arith.truncf %32 : vector<4x8x8xf32> to vector<4x8x8xbf16>
    %c0_9 = arith.constant 0 : index
    %c0_10 = arith.constant 0 : index
    %c0_11 = arith.constant 0 : index
    %34 = vector.load %arg13[%c0_9, %c0_10, %c0_11] : memref<4x8x8xbf16, #tpu.memory_space<vmem>>, vector<4x8x8xbf16>
    %c0_12 = arith.constant 0 : index
    %c0_13 = arith.constant 0 : index
    %c0_14 = arith.constant 0 : index
    %35 = vector.load %arg14[%c0_12, %c0_13, %c0_14] : memref<4x8x8xbf16, #tpu.memory_space<vmem>>, vector<4x8x8xbf16>
    "tpu.trace_start"() <{level = 10 : i32, message = "hqc,hkc->hqk"}> : () -> ()
    %cst_15 = arith.constant dense<0.000000e+00> : vector<4x8x8xf32>
    %36 = tpu.matmul %33, %34, %cst_15 {dimension_numbers = #tpu.dot_dimension_numbers<[2], [2], [1], [1], [0, 0, 0, 1, 1, 1], [0], [0]>} : vector<4x8x8xbf16>, vector<4x8x8xbf16>, vector<4x8x8xf32> -> vector<4x8x8xf32>
    "tpu.trace_stop"() : () -> ()
    %c0_16 = arith.constant 0 : index
    %c0_17 = arith.constant 0 : index
    %c0_18 = arith.constant 0 : index
    %37 = vector.load %arg8[%c0_16, %c0_17, %c0_18] : memref<4x8x8xbf16, #tpu.memory_space<vmem>>, vector<4x8x8xbf16>
    %38 = arith.extf %37 : vector<4x8x8xbf16> to vector<4x8x8xf32>
    %39 = arith.addf %36, %38 : vector<4x8x8xf32>
    %cst_19 = arith.constant dense<0xFF800000> : vector<4x8xf32>
    %40 = vector.multi_reduction <maximumf>, %39, %cst_19 [2] : vector<4x8x8xf32> to vector<4x8xf32>
    %41 = vector.shape_cast %40 : vector<4x8xf32> to vector<4x8x1xf32>
    %42 = vector.broadcast %41 : vector<4x8x1xf32> to vector<4x8x8xf32>
    %43 = arith.subf %39, %42 : vector<4x8x8xf32>
    %44 = math.exp %43 : vector<4x8x8xf32>
    %cst_20 = arith.constant dense<0.000000e+00> : vector<4x8xf32>
    %45 = vector.multi_reduction <add>, %44, %cst_20 [2] : vector<4x8x8xf32> to vector<4x8xf32>
    %46 = vector.shape_cast %45 : vector<4x8xf32> to vector<4x8x1xf32>
    %47 = arith.truncf %44 : vector<4x8x8xf32> to vector<4x8x8xbf16>
    "tpu.trace_start"() <{level = 10 : i32, message = "hqk,hkc->hqc"}> : () -> ()
    %cst_21 = arith.constant dense<0.000000e+00> : vector<4x8x8xf32>
    %48 = tpu.matmul %47, %35, %cst_21 {dimension_numbers = #tpu.dot_dimension_numbers<[2], [1], [1], [2], [0, 0, 0, 1, 1, 2], [0], [0]>} : vector<4x8x8xbf16>, vector<4x8x8xbf16>, vector<4x8x8xf32> -> vector<4x8x8xf32>
    "tpu.trace_stop"() : () -> ()
    %49 = tpu.reciprocal %46 {approx = true} : vector<4x8x1xf32> -> vector<4x8x1xf32>
    %50 = vector.broadcast %49 : vector<4x8x1xf32> to vector<4x8x8xf32>
    %51 = arith.mulf %48, %50 : vector<4x8x8xf32>
    %52 = vector.extract_strided_slice %51 {offsets = [0, 0, 0], sizes = [1, 8, 8], strides = [1, 1, 1]} : vector<4x8x8xf32> to vector<1x8x8xf32>
    %53 = vector.shape_cast %52 : vector<1x8x8xf32> to vector<8x8xf32>
    %54 = vector.extract_strided_slice %51 {offsets = [1, 0, 0], sizes = [1, 8, 8], strides = [1, 1, 1]} : vector<4x8x8xf32> to vector<1x8x8xf32>
    %55 = vector.shape_cast %54 : vector<1x8x8xf32> to vector<8x8xf32>
    %56 = vector.extract_strided_slice %51 {offsets = [2, 0, 0], sizes = [1, 8, 8], strides = [1, 1, 1]} : vector<4x8x8xf32> to vector<1x8x8xf32>
    %57 = vector.shape_cast %56 : vector<1x8x8xf32> to vector<8x8xf32>
    %58 = vector.extract_strided_slice %51 {offsets = [3, 0, 0], sizes = [1, 8, 8], strides = [1, 1, 1]} : vector<4x8x8xf32> to vector<1x8x8xf32>
    %59 = vector.shape_cast %58 : vector<1x8x8xf32> to vector<8x8xf32>
    %60 = tpu.concatenate %53, %55, %57, %59 in 1 : vector<8x8xf32>, vector<8x8xf32>, vector<8x8xf32>, vector<8x8xf32> -> vector<8x32xf32>
    %61 = arith.truncf %60 : vector<8x32xf32> to vector<8x32xbf16>
    %c0_22 = arith.constant 0 : index
    %c0_23 = arith.constant 0 : index
    %62 = vector.load %arg7[%c0_22, %c0_23] : memref<32x32xbf16, #tpu.memory_space<vmem>>, vector<32x32xbf16>
    %cst_24 = arith.constant dense<0.000000e+00> : vector<8x32xf32>
    %63 = tpu.matmul %61, %62, %cst_24 {dimension_numbers = #tpu.dot_dimension_numbers<[1], [0], [0], [1], [0, 0, 1, 1], [], []>} : vector<8x32xbf16>, vector<32x32xbf16>, vector<8x32xf32> -> vector<8x32xf32>
    %64 = arith.addf %8, %63 : vector<8x32xf32>
    %65 = arith.mulf %64, %64 : vector<8x32xf32>
    %cst_25 = arith.constant dense<0.000000e+00> : vector<8xf32>
    %66 = vector.multi_reduction <add>, %65, %cst_25 [1] : vector<8x32xf32> to vector<8xf32>
    %67 = vector.shape_cast %66 : vector<8xf32> to vector<8x1xf32>
    %cst_26 = arith.constant 3.200000e+01 : f32
    %68 = vector.broadcast %cst_26 : f32 to vector<8x1xf32>
    %69 = arith.divf %67, %68 : vector<8x1xf32>
    %c0_27 = arith.constant 0 : index
    %c0_28 = arith.constant 0 : index
    %70 = vector.load %arg9[%c0_27, %c0_28] : memref<1x32xf32, #tpu.memory_space<vmem>>, vector<1x32xf32>
    %cst_29 = arith.constant 9.99999997E-7 : f32
    %71 = vector.broadcast %cst_29 : f32 to vector<8x1xf32>
    %72 = arith.addf %69, %71 : vector<8x1xf32>
    %73 = math.rsqrt %72 : vector<8x1xf32>
    %74 = vector.broadcast %73 : vector<8x1xf32> to vector<8x32xf32>
    %75 = arith.mulf %64, %74 : vector<8x32xf32>
    %76 = vector.broadcast %70 : vector<1x32xf32> to vector<8x32xf32>
    %77 = arith.mulf %76, %75 : vector<8x32xf32>
    %78 = arith.truncf %77 : vector<8x32xf32> to vector<8x32xbf16>
    %c0_30 = arith.constant 0 : index
    %c0_31 = arith.constant 0 : index
    %79 = vector.load %arg10[%c0_30, %c0_31] : memref<32x128xbf16, #tpu.memory_space<vmem>>, vector<32x128xbf16>
    %cst_32 = arith.constant dense<0.000000e+00> : vector<8x128xf32>
    %80 = tpu.matmul %78, %79, %cst_32 {dimension_numbers = #tpu.dot_dimension_numbers<[1], [0], [0], [1], [0, 0, 1, 1], [], []>} : vector<8x32xbf16>, vector<32x128xbf16>, vector<8x128xf32> -> vector<8x128xf32>
    %cst_33 = arith.constant 0.000000e+00 : f32
    %81 = vector.broadcast %cst_33 : f32 to vector<8x128xf32>
    %82 = arith.maximumf %80, %81 : vector<8x128xf32>
    %83 = arith.truncf %82 : vector<8x128xf32> to vector<8x128xbf16>
    %c0_34 = arith.constant 0 : index
    %c0_35 = arith.constant 0 : index
    %84 = vector.load %arg11[%c0_34, %c0_35] : memref<128x32xbf16, #tpu.memory_space<vmem>>, vector<128x32xbf16>
    %cst_36 = arith.constant dense<0.000000e+00> : vector<8x32xf32>
    %85 = tpu.matmul %83, %84, %cst_36 {dimension_numbers = #tpu.dot_dimension_numbers<[1], [0], [0], [1], [0, 0, 1, 1], [], []>} : vector<8x128xbf16>, vector<128x32xbf16>, vector<8x32xf32> -> vector<8x32xf32>
    %86 = arith.addf %64, %85 : vector<8x32xf32>
    %c0_37 = arith.constant 0 : index
    %c0_38 = arith.constant 0 : index
    %c0_39 = arith.constant 0 : index
    %87 = vector.load %arg12[%c0_37, %c0_38, %c0_39] : memref<1x8x32xf32, #tpu.memory_space<vmem>>, vector<1x8x32xf32>
    %88 = vector.shape_cast %87 : vector<1x8x32xf32> to vector<8x32xf32>
    %89 = vector.shape_cast %86 : vector<8x32xf32> to vector<1x8x32xf32>
    tpu.vector_store %arg12[%c0_37, %c0_38, %c0_39], %89 {strides = array<i32>} : memref<1x8x32xf32, #tpu.memory_space<vmem>>, vector<1x8x32xf32>,
    return
  }
  func.func @transform_0(%arg0: i32, %arg1: i32) -> (i32, i32, i32) {
    %c0_i32 = arith.constant 0 : i32
    %c0_i32_0 = arith.constant 0 : i32
    %c0_i32_1 = arith.constant 0 : i32
    return %arg0, %c0_i32, %c0_i32_0 : i32, i32, i32
  }
  func.func @transform_1(%arg0: i32, %arg1: i32) -> (i32, i32) {
    %c0_i32 = arith.constant 0 : i32
    %c0_i32_0 = arith.constant 0 : i32
    %c0_i32_1 = arith.constant 0 : i32
    return %c0_i32, %c0_i32_0 : i32, i32
  }
  func.func @transform_2(%arg0: i32, %arg1: i32) -> (i32, i32) {
    %c0_i32 = arith.constant 0 : i32
    %c0_i32_0 = arith.constant 0 : i32
    %c0_i32_1 = arith.constant 0 : i32
    return %c0_i32, %c0_i32_0 : i32, i32
  }
  func.func @transform_3(%arg0: i32, %arg1: i32) -> (i32, i32) {
    %c0_i32 = arith.constant 0 : i32
    %c0_i32_0 = arith.constant 0 : i32
    %c0_i32_1 = arith.constant 0 : i32
    return %c0_i32, %c0_i32_0 : i32, i32
  }
  func.func @transform_4(%arg0: i32, %arg1: i32) -> (i32, i32) {
    %c0_i32 = arith.constant 0 : i32
    %c0_i32_0 = arith.constant 0 : i32
    %c0_i32_1 = arith.constant 0 : i32
    return %c0_i32, %c0_i32_0 : i32, i32
  }
  func.func @transform_5(%arg0: i32, %arg1: i32) -> (i32, i32) {
    %c0_i32 = arith.constant 0 : i32
    %c0_i32_0 = arith.constant 0 : i32
    %c0_i32_1 = arith.constant 0 : i32
    return %c0_i32, %c0_i32_0 : i32, i32
  }
  func.func @transform_6(%arg0: i32, %arg1: i32) -> (i32, i32, i32) {
    %c0_i32 = arith.constant 0 : i32
    %c0_i32_0 = arith.constant 0 : i32
    %c0_i32_1 = arith.constant 0 : i32
    return %c0_i32, %arg1, %c0_i32_0 : i32, i32, i32
  }
  func.func @transform_7(%arg0: i32, %arg1: i32) -> (i32, i32) {
    %c0_i32 = arith.constant 0 : i32
    %c0_i32_0 = arith.constant 0 : i32
    %c0_i32_1 = arith.constant 0 : i32
    return %c0_i32, %c0_i32_0 : i32, i32
  }
  func.func @transform_8(%arg0: i32, %arg1: i32) -> (i32, i32) {
    %c0_i32 = arith.constant 0 : i32
    %c0_i32_0 = arith.constant 0 : i32
    %c0_i32_1 = arith.constant 0 : i32
    return %c0_i32, %c0_i32_0 : i32, i32
  }
  func.func @transform_9(%arg0: i32, %arg1: i32) -> (i32, i32) {
    %c0_i32 = arith.constant 0 : i32
    %c0_i32_0 = arith.constant 0 : i32
    %c0_i32_1 = arith.constant 0 : i32
    return %c0_i32, %c0_i32_0 : i32, i32
  }
  func.func @transform_10(%arg0: i32, %arg1: i32) -> (i32, i32, i32) {
    %c0_i32 = arith.constant 0 : i32
    %c0_i32_0 = arith.constant 0 : i32
    return %arg0, %arg1, %c0_i32 : i32, i32, i32
  }
}

</mosaic_0001>

<llo_original>
// kernel: tpu_custom_call.1
$region0: #{tpu_custom_call.1}
  #allocation0 [shape = 'u32[]', space=smem, size = 0x4, offset = 0x4, fixed_abs, tag = 'smem constant byte address 0x4 - core index']
  #allocation1 [shape = 'u32[144,128]{1,0:T(1,128)}', space=vmem, size = 0x12000, scoped, tag = 'internal scratch']
  #allocation2 [shape = 'bf16[4,8,8]{2,1,0:T(8,128)(2,1)}', space=vmem, size = 0x2000, scoped, tag = 'scratch operand']
  #allocation3 [shape = 'bf16[4,8,8]{2,1,0:T(8,128)(2,1)}', space=vmem, size = 0x2000, scoped, tag = 'scratch operand']
  %s0 = inlined_call_operand.vmem [shape: f32[2,8,32], index: 0, kind: input, shape index: {}]
  %s1 = inlined_call_operand.hbm [shape: f32[1,32], index: 1, kind: input, shape index: {}]
  %s2 = inlined_call_operand.vmem [shape: bf16[32,32], index: 2, kind: input, shape index: {}]
  %s3 = inlined_call_operand.vmem [shape: bf16[32,32], index: 3, kind: input, shape index: {}]
  %s4 = inlined_call_operand.vmem [shape: bf16[32,32], index: 4, kind: input, shape index: {}]
  %s5 = inlined_call_operand.vmem [shape: bf16[32,32], index: 5, kind: input, shape index: {}]
  %s6 = inlined_call_operand.hbm [shape: bf16[4,8,8], index: 6, kind: input, shape index: {}]
  %s7 = inlined_call_operand.hbm [shape: f32[1,32], index: 7, kind: input, shape index: {}]
  %s8 = inlined_call_operand.hbm [shape: bf16[32,128], index: 8, kind: input, shape index: {}]
  %s9 = inlined_call_operand.vmem [shape: bf16[128,32], index: 9, kind: input, shape index: {}]
  %s10 = inlined_call_operand.hbm [shape: f32[2,8,32], index: 10, kind: output, shape index: {}]
  %s11 = sld [smem:[#allocation0]]
  $region93: #{tpu_custom_call.1} parent=0
    _
  %s13 = ssub.s32 1, %s11
  %s14 = scalar_select 0, %s13, %s11
  $region1: #{tpu_custom_call.1} parent=0
    #allocation4 [shape = 'u8[512]{0}', space=vmem, size = 0x400, scoped, tag = 'input window, operand 1, single buffered']
    #allocation5 [shape = 's32[2]{0}', space=sflag, size = 0x8, scoped, tag = 'scoped memory for tpu_custom_call.1']
    #allocation6 [shape = 's32[2]{0}', space=sflag, size = 0x8, scoped, tag = 'scoped memory for tpu_custom_call.1']
    #allocation7 [shape = 'u8[8192]{0}', space=vmem, size = 0x2000, scoped, tag = 'input window, operand 6, single buffered']
    #allocation8 [shape = 's32[1]{0}', space=sflag, size = 0x4, scoped, tag = 'scoped memory for tpu_custom_call.1']
    #allocation9 [shape = 'u8[512]{0}', space=vmem, size = 0x400, scoped, tag = 'input window, operand 7, single buffered']
    #allocation10 [shape = 'u8[8192]{0}', space=vmem, size = 0x2000, scoped, tag = 'input window, operand 8, single buffered']
    #allocation11 [shape = 's32[1]{0}', space=sflag, size = 0x4, scoped, tag = 'scoped memory for tpu_custom_call.1']
    #allocation12 [shape = 'u8[8192]{0}', space=vmem, size = 0x2000, scoped, tag = 'output window, operand 0']
    %15 = vsyncpa [#allocation5], 0
    %16 = vsyncpa [#allocation8], 0
    %17 = vsyncpa [#allocation11], 0
    %18 = vsyncpa [#allocation6], 0
    %s19 = scalar_lea.sflag [#allocation6], 1
    %20 = vsyncpa %s19, 0
    loop: start=0, step=1, limit=4
    $region2: #{tpu_custom_call.1} parent=1 // loop_pre_header
      _
    $region3: #{tpu_custom_call.1} parent=1 // loop_header
      %s22 = sphi 0, %s26
      %p23 = scmp.ge.s32.totalorder %s22, 4
      %s29 = sphi 0, %s41
      %s30 = sphi 0, %s37
      %s31 = sphi 0, %s29
      %s32 = sphi 0, %s30
      %s33 = sphi 0, %s31
      %s34 = sphi 0, %s32
      %s44 = sphi 0, %s46
      %s47 = sphi 0, %s44
      %s48 = sphi 0, %s47
      %s64 = sphi 0, %s48
      %s68 = sphi 0, %s68
      %s70 = sphi 0, %s68
      %s71 = sphi 0, %s70
      %s85 = sphi 0, %s71
      %s89 = sphi 0, %s89
      %s91 = sphi 0, %s89
      %s92 = sphi 0, %s91
      %s106 = sphi 0, %s92
      %s110 = sphi 0, %s110
      %s112 = sphi 0, %s110
      %s113 = sphi 0, %s112
      %s127 = sphi 0, %s113
      %s131 = sphi 0, %s131
      %s133 = sphi 0, %s131
      %s134 = sphi 0, %s133
      %s148 = sphi 0, %s134
      %s152 = sphi 0, %s152
      %s154 = sphi 0, %s152
      %s155 = sphi 0, %s154
      %s169 = sphi 0, %s155
      %s175 = sphi 0, %s177
      %s178 = sphi 0, %s175
      %s179 = sphi 0, %s178
      %s195 = sphi 0, %s179
      %s199 = sphi 0, %s199
      %s201 = sphi 0, %s199
      %s202 = sphi 0, %s201
      %s216 = sphi 0, %s202
      %s220 = sphi 0, %s220
      %s222 = sphi 0, %s220
      %s223 = sphi 0, %s222
      %s237 = sphi 0, %s223
      %s241 = sphi 0, %s241
      %s243 = sphi 0, %s241
      %s244 = sphi 0, %s243
      %s258 = sphi 0, %s244
      %s266 = sphi 0, %s268
      %s269 = sphi 0, %s266
      %s270 = sphi 0, %s269
      %s286 = sphi 0, %s270
    $region4: #{tpu_custom_call.1} parent=1 // loop_header_branch
      %25 = sbr.rel (%p23) target = $region8
    $region5: #{tpu_custom_call.1} parent=1 // loop_body
      %s27 = ssub.s32 %s22, 1
      %s28 = ssub.s32 %s22, 2
      %s35 = sadd.s32 1, %s30
      %p36 = scmp.ge.s32.totalorder %s35, 1
      %s37 = scalar_select %p36, 0, %s35
      %s38 = sadd.s32 1, %s29
      %s39 = scalar_select %p36, %s38, %s29
      %p40 = scmp.ge.s32.totalorder %s39, 2
      %s41 = scalar_select %p40, 0, %s39
      %s42 = ssub.s32 %s29, %s41
      %p43 = scmp.eq.s32.totalorder %s42, 0
      %s45 = sadd.s32 %s44, 1
      %s46 = scalar_select %p43, %s44, %s45
      %p49 = pneg %p43
      %p50 = scmp.eq.s32.totalorder %s22, 1
      %p51 = por %p49, %p50
      %p52 = scmp.ne.s32.totalorder %s44, %s47
      %p53 = scmp.eq.s32.totalorder %s22, 0
      %p54 = por %p52, %p53
      %p55 = scmp.ne.s32.totalorder %s44, %s47
      %p56 = scmp.eq.s32.totalorder %s27, 1
      %p57 = por %p55, %p56
      %p58 = scmp.ne.s32.totalorder %s47, %s48
      %p59 = scmp.eq.s32.totalorder %s27, 0
      %p60 = por %p58, %p59
      %p61 = scmp.ne.s32.totalorder %s47, %s48
      %p62 = scmp.eq.s32.totalorder %s28, 1
      %p63 = por %p61, %p62
      %p65 = scmp.ne.s32.totalorder %s48, %s64
      %p66 = scmp.eq.s32.totalorder %s28, 0
      %p67 = por %p65, %p66
      %s69 = sadd.s32 %s68, 1
      %p72 = scmp.eq.s32.totalorder %s22, 1
      %p73 = scmp.ne.s32.totalorder %s68, %s70
      %p74 = scmp.eq.s32.totalorder %s22, 0
      %p75 = por %p73, %p74
      %p76 = scmp.ne.s32.totalorder %s68, %s70
      %p77 = scmp.eq.s32.totalorder %s27, 1
      %p78 = por %p76, %p77
      %p79 = scmp.ne.s32.totalorder %s70, %s71
      %p80 = scmp.eq.s32.totalorder %s27, 0
      %p81 = por %p79, %p80
      %p82 = scmp.ne.s32.totalorder %s70, %s71
      %p83 = scmp.eq.s32.totalorder %s28, 1
      %p84 = por %p82, %p83
      %p86 = scmp.ne.s32.totalorder %s71, %s85
      %p87 = scmp.eq.s32.totalorder %s28, 0
      %p88 = por %p86, %p87
      %s90 = sadd.s32 %s89, 1
      %p93 = scmp.eq.s32.totalorder %s22, 1
      %p94 = scmp.ne.s32.totalorder %s89, %s91
      %p95 = scmp.eq.s32.totalorder %s22, 0
      %p96 = por %p94, %p95
      %p97 = scmp.ne.s32.totalorder %s89, %s91
      %p98 = scmp.eq.s32.totalorder %s27, 1
      %p99 = por %p97, %p98
      %p100 = scmp.ne.s32.totalorder %s91, %s92
      %p101 = scmp.eq.s32.totalorder %s27, 0
      %p102 = por %p100, %p101
      %p103 = scmp.ne.s32.totalorder %s91, %s92
      %p104 = scmp.eq.s32.totalorder %s28, 1
      %p105 = por %p103, %p104
      %p107 = scmp.ne.s32.totalorder %s92, %s106
      %p108 = scmp.eq.s32.totalorder %s28, 0
      %p109 = por %p107, %p108
      %s111 = sadd.s32 %s110, 1
      %p114 = scmp.eq.s32.totalorder %s22, 1
      %p115 = scmp.ne.s32.totalorder %s110, %s112
      %p116 = scmp.eq.s32.totalorder %s22, 0
      %p117 = por %p115, %p116
      %p118 = scmp.ne.s32.totalorder %s110, %s112
      %p119 = scmp.eq.s32.totalorder %s27, 1
      %p120 = por %p118, %p119
      %p121 = scmp.ne.s32.totalorder %s112, %s113
      %p122 = scmp.eq.s32.totalorder %s27, 0
      %p123 = por %p121, %p122
      %p124 = scmp.ne.s32.totalorder %s112, %s113
      %p125 = scmp.eq.s32.totalorder %s28, 1
      %p126 = por %p124, %p125
      %p128 = scmp.ne.s32.totalorder %s113, %s127
      %p129 = scmp.eq.s32.totalorder %s28, 0
      %p130 = por %p128, %p129
      %s132 = sadd.s32 %s131, 1
      %p135 = scmp.eq.s32.totalorder %s22, 1
      %p136 = scmp.ne.s32.totalorder %s131, %s133
      %p137 = scmp.eq.s32.totalorder %s22, 0
      %p138 = por %p136, %p137
      %p139 = scmp.ne.s32.totalorder %s131, %s133
      %p140 = scmp.eq.s32.totalorder %s27, 1
      %p141 = por %p139, %p140
      %p142 = scmp.ne.s32.totalorder %s133, %s134
      %p143 = scmp.eq.s32.totalorder %s27, 0
      %p144 = por %p142, %p143
      %p145 = scmp.ne.s32.totalorder %s133, %s134
      %p146 = scmp.eq.s32.totalorder %s28, 1
      %p147 = por %p145, %p146
      %p149 = scmp.ne.s32.totalorder %s134, %s148
      %p150 = scmp.eq.s32.totalorder %s28, 0
      %p151 = por %p149, %p150
      %s153 = sadd.s32 %s152, 1
      %p156 = scmp.eq.s32.totalorder %s22, 1
      %p157 = scmp.ne.s32.totalorder %s152, %s154
      %p158 = scmp.eq.s32.totalorder %s22, 0
      %p159 = por %p157, %p158
      %p160 = scmp.ne.s32.totalorder %s152, %s154
      %p161 = scmp.eq.s32.totalorder %s27, 1
      %p162 = por %p160, %p161
      %p163 = scmp.ne.s32.totalorder %s154, %s155
      %p164 = scmp.eq.s32.totalorder %s27, 0
      %p165 = por %p163, %p164
      %p166 = scmp.ne.s32.totalorder %s154, %s155
      %p167 = scmp.eq.s32.totalorder %s28, 1
      %p168 = por %p166, %p167
      %p170 = scmp.ne.s32.totalorder %s155, %s169
      %p171 = scmp.eq.s32.totalorder %s28, 0
      %p172 = por %p170, %p171
      %s173 = ssub.s32 %s30, %s37
      %p174 = scmp.eq.s32.totalorder %s173, 0
      %s176 = sadd.s32 %s175, 1
      %s177 = scalar_select %p174, %s175, %s176
      %p180 = pneg %p174
      %p181 = scmp.eq.s32.totalorder %s22, 1
      %p182 = por %p180, %p181
      %p183 = scmp.ne.s32.totalorder %s175, %s178
      %p184 = scmp.eq.s32.totalorder %s22, 0
      %p185 = por %p183, %p184
      %p186 = scmp.ne.s32.totalorder %s175, %s178
      %p187 = scmp.eq.s32.totalorder %s27, 1
      %p188 = por %p186, %p187
      %p189 = scmp.ne.s32.totalorder %s178, %s179
      %p190 = scmp.eq.s32.totalorder %s27, 0
      %p191 = por %p189, %p190
      %p192 = scmp.ne.s32.totalorder %s178, %s179
      %p193 = scmp.eq.s32.totalorder %s28, 1
      %p194 = por %p192, %p193
      %p196 = scmp.ne.s32.totalorder %s179, %s195
      %p197 = scmp.eq.s32.totalorder %s28, 0
      %p198 = por %p196, %p197
      %s200 = sadd.s32 %s199, 1
      %p203 = scmp.eq.s32.totalorder %s22, 1
      %p204 = scmp.ne.s32.totalorder %s199, %s201
      %p205 = scmp.eq.s32.totalorder %s22, 0
      %p206 = por %p204, %p205
      %p207 = scmp.ne.s32.totalorder %s199, %s201
      %p208 = scmp.eq.s32.totalorder %s27, 1
      %p209 = por %p207, %p208
      %p210 = scmp.ne.s32.totalorder %s201, %s202
      %p211 = scmp.eq.s32.totalorder %s27, 0
      %p212 = por %p210, %p211
      %p213 = scmp.ne.s32.totalorder %s201, %s202
      %p214 = scmp.eq.s32.totalorder %s28, 1
      %p215 = por %p213, %p214
      %p217 = scmp.ne.s32.totalorder %s202, %s216
      %p218 = scmp.eq.s32.totalorder %s28, 0
      %p219 = por %p217, %p218
      %s221 = sadd.s32 %s220, 1
      %p224 = scmp.eq.s32.totalorder %s22, 1
      %p225 = scmp.ne.s32.totalorder %s220, %s222
      %p226 = scmp.eq.s32.totalorder %s22, 0
      %p227 = por %p225, %p226
      %p228 = scmp.ne.s32.totalorder %s220, %s222
      %p229 = scmp.eq.s32.totalorder %s27, 1
      %p230 = por %p228, %p229
      %p231 = scmp.ne.s32.totalorder %s222, %s223
      %p232 = scmp.eq.s32.totalorder %s27, 0
      %p233 = por %p231, %p232
      %p234 = scmp.ne.s32.totalorder %s222, %s223
      %p235 = scmp.eq.s32.totalorder %s28, 1
      %p236 = por %p234, %p235
      %p238 = scmp.ne.s32.totalorder %s223, %s237
      %p239 = scmp.eq.s32.totalorder %s28, 0
      %p240 = por %p238, %p239
      %s242 = sadd.s32 %s241, 1
      %p245 = scmp.eq.s32.totalorder %s22, 1
      %p246 = scmp.ne.s32.totalorder %s241, %s243
      %p247 = scmp.eq.s32.totalorder %s22, 0
      %p248 = por %p246, %p247
      %p249 = scmp.ne.s32.totalorder %s241, %s243
      %p250 = scmp.eq.s32.totalorder %s27, 1
      %p251 = por %p249, %p250
      %p252 = scmp.ne.s32.totalorder %s243, %s244
      %p253 = scmp.eq.s32.totalorder %s27, 0
      %p254 = por %p252, %p253
      %p255 = scmp.ne.s32.totalorder %s243, %s244
      %p256 = scmp.eq.s32.totalorder %s28, 1
      %p257 = por %p255, %p256
      %p259 = scmp.ne.s32.totalorder %s244, %s258
      %p260 = scmp.eq.s32.totalorder %s28, 0
      %p261 = por %p259, %p260
      %s262 = ssub.s32 %s29, %s41
      %s263 = ssub.s32 %s30, %s37
      %s264 = sor.u32 %s262, %s263
      %p265 = scmp.eq.s32.totalorder %s264, 0
      %s267 = sadd.s32 %s266, 1
      %s268 = scalar_select %p265, %s266, %s267
      %p271 = pneg %p265
      %p272 = scmp.eq.s32.totalorder %s22, 1
      %p273 = por %p271, %p272
      %p274 = scmp.ne.s32.totalorder %s266, %s269
      %p275 = scmp.eq.s32.totalorder %s22, 0
      %p276 = por %p274, %p275
      %p277 = scmp.ne.s32.totalorder %s266, %s269
      %p278 = scmp.eq.s32.totalorder %s27, 1
      %p279 = por %p277, %p278
      %p280 = scmp.ne.s32.totalorder %s269, %s270
      %p281 = scmp.eq.s32.totalorder %s27, 0
      %p282 = por %p280, %p281
      %p283 = scmp.ne.s32.totalorder %s269, %s270
      %p284 = scmp.eq.s32.totalorder %s28, 1
      %p285 = por %p283, %p284
      %p287 = scmp.ne.s32.totalorder %s270, %s286
      %p288 = scmp.eq.s32.totalorder %s28, 0
      %p289 = por %p287, %p288
      %p290 = scmp.le.s32.totalorder 1, %s22
      %p291 = scmp.lt.s32.totalorder %s22, 3
      %p292 = pnand %p290, %p291
      %p293 = pneg %p292
      // Predicated region
      $region9: #{tpu_custom_call.1} parent=5 // pred_check
        _
      $region10: #{tpu_custom_call.1} parent=5 // pred_check_branch
        %295 = sbr.rel (%p292) target = $region12
      $region11: #{tpu_custom_call.1} parent=5 // pred_region
        %s296 = ssub.s32 %s22, 1
        // Predicated region
        $region13: #{tpu_custom_call.1} parent=11 // pred_check
          %p297 = pneg %p60
        $region14: #{tpu_custom_call.1} parent=11 // pred_check_branch
          %299 = sbr.rel (%p297) target = $region16
        $region15: #{tpu_custom_call.1} parent=11 // pred_region
          %p300 = scmp.lt.s32.totalorder %s31, 1
          %s301 = scalar_select %p300, %s31, 1
          %s302 = smul.addr %s301, 8
          %s303 = scalar_lea.vmem %s0, %s302
        $region16: #{tpu_custom_call.1} parent=11 // pred_fallthru
          _
        // Predicated region
        $region17: #{tpu_custom_call.1} parent=11 // pred_check
          %p304 = pneg %p81
        $region18: #{tpu_custom_call.1} parent=11 // pred_check_branch
          %306 = sbr.rel (%p304) target = $region20
        $region19: #{tpu_custom_call.1} parent=11 // pred_region
          %s308 = ssub.s32 16, 16
          %309 = vsyncadd [#allocation5], %s308
          %s311 = sshll.u32 [#allocation4], 4
          %s312 = int_to_ptr.vmem [resolvable:$true] %s311
          %314 = dma.hbm_to_vmem [thread:$0]  %s1, 16, %s312, [#allocation5]
        $region20: #{tpu_custom_call.1} parent=11 // pred_fallthru
          _
        // Predicated region
        $region21: #{tpu_custom_call.1} parent=11 // pred_check
          %p315 = pneg %p102
        $region22: #{tpu_custom_call.1} parent=11 // pred_check_branch
          %317 = sbr.rel (%p315) target = $region24
        $region23: #{tpu_custom_call.1} parent=11 // pred_region
          _
        $region24: #{tpu_custom_call.1} parent=11 // pred_fallthru
          _
        // Predicated region
        $region25: #{tpu_custom_call.1} parent=11 // pred_check
          %p318 = pneg %p123
        $region26: #{tpu_custom_call.1} parent=11 // pred_check_branch
          %320 = sbr.rel (%p318) target = $region28
        $region27: #{tpu_custom_call.1} parent=11 // pred_region
          _
        $region28: #{tpu_custom_call.1} parent=11 // pred_fallthru
          _
        // Predicated region
        $region29: #{tpu_custom_call.1} parent=11 // pred_check
          %p321 = pneg %p144
        $region30: #{tpu_custom_call.1} parent=11 // pred_check_branch
          %323 = sbr.rel (%p321) target = $region32
        $region31: #{tpu_custom_call.1} parent=11 // pred_region
          _
        $region32: #{tpu_custom_call.1} parent=11 // pred_fallthru
          _
        // Predicated region
        $region33: #{tpu_custom_call.1} parent=11 // pred_check
          %p324 = pneg %p165
        $region34: #{tpu_custom_call.1} parent=11 // pred_check_branch
          %326 = sbr.rel (%p324) target = $region36
        $region35: #{tpu_custom_call.1} parent=11 // pred_region
          _
        $region36: #{tpu_custom_call.1} parent=11 // pred_fallthru
          _
        // Predicated region
        $region37: #{tpu_custom_call.1} parent=11 // pred_check
          %p327 = pneg %p191
        $region38: #{tpu_custom_call.1} parent=11 // pred_check_branch
          %329 = sbr.rel (%p327) target = $region40
        $region39: #{tpu_custom_call.1} parent=11 // pred_region
          %s331 = ssub.s32 256, 256
          %332 = vsyncadd [#allocation8], %s331
          %s333 = smul.addr %s32, 64
          %s334 = scalar_lea.hbm %s6, %s333
          %s335 = sshll.u32 [#allocation7], 4
          %s336 = int_to_ptr.vmem [resolvable:$true] %s335
          %341 = dma.hbm_to_vmem [thread:$0]  %s334, 256, %s336, [#allocation8], 64, 64, 4
        $region40: #{tpu_custom_call.1} parent=11 // pred_fallthru
          _
        // Predicated region
        $region41: #{tpu_custom_call.1} parent=11 // pred_check
          %p342 = pneg %p212
        $region42: #{tpu_custom_call.1} parent=11 // pred_check_branch
          %344 = sbr.rel (%p342) target = $region44
        $region43: #{tpu_custom_call.1} parent=11 // pred_region
          %s346 = ssub.s32 16, 16
          %347 = vsyncadd [#allocation8], %s346
          %s349 = sshll.u32 [#allocation9], 4
          %s350 = int_to_ptr.vmem [resolvable:$true] %s349
          %352 = dma.hbm_to_vmem [thread:$0]  %s7, 16, %s350, [#allocation8]
        $region44: #{tpu_custom_call.1} parent=11 // pred_fallthru
          _
        // Predicated region
        $region45: #{tpu_custom_call.1} parent=11 // pred_check
          %p353 = pneg %p233
        $region46: #{tpu_custom_call.1} parent=11 // pred_check_branch
          %355 = sbr.rel (%p353) target = $region48
        $region47: #{tpu_custom_call.1} parent=11 // pred_region
          %s357 = ssub.s32 256, 256
          %358 = vsyncadd [#allocation11], %s357
          %s359 = sshll.u32 [#allocation10], 4
          %s360 = int_to_ptr.vmem [resolvable:$true] %s359
          %365 = dma.hbm_to_vmem [thread:$0]  %s8, 256, %s360, [#allocation11], 64, 64, 4
        $region48: #{tpu_custom_call.1} parent=11 // pred_fallthru
          _
        // Predicated region
        $region49: #{tpu_custom_call.1} parent=11 // pred_check
          %p366 = pneg %p254
        $region50: #{tpu_custom_call.1} parent=11 // pred_check_branch
          %368 = sbr.rel (%p366) target = $region52
        $region51: #{tpu_custom_call.1} parent=11 // pred_region
          _
        $region52: #{tpu_custom_call.1} parent=11 // pred_fallthru
          _
      $region12: #{tpu_custom_call.1} parent=5 // pred_fallthru
        _
      %p369 = scmp.lt.s32.totalorder %s22, 2
      // Predicated region
      $region53: #{tpu_custom_call.1} parent=5 // pred_check
        %p370 = pneg %p369
      $region54: #{tpu_custom_call.1} parent=5 // pred_check_branch
        %372 = sbr.rel (%p370) target = $region56
      $region55: #{tpu_custom_call.1} parent=5 // pred_region
        _
      $region56: #{tpu_custom_call.1} parent=5 // pred_fallthru
        _
      %p373 = scmp.le.s32.totalorder 1, %s22
      %p374 = scmp.lt.s32.totalorder %s22, 3
      %p375 = pnand %p373, %p374
      %p376 = pneg %p375
      // Predicated region
      $region57: #{tpu_custom_call.1} parent=5 // pred_check
        _
      $region58: #{tpu_custom_call.1} parent=5 // pred_check_branch
        %378 = sbr.rel (%p375) target = $region60
      $region59: #{tpu_custom_call.1} parent=5 // pred_region
        %s379 = ssub.s32 %s22, 1
        // Predicated region
        $region61: #{tpu_custom_call.1} parent=59 // pred_check
          %p380 = pneg %p81
        $region62: #{tpu_custom_call.1} parent=59 // pred_check_branch
          %382 = sbr.rel (%p380) target = $region64
        $region63: #{tpu_custom_call.1} parent=59 // pred_region
          %383 = dma.done [#allocation5], 16
        $region64: #{tpu_custom_call.1} parent=59 // pred_fallthru
          _
        // Predicated region
        $region65: #{tpu_custom_call.1} parent=59 // pred_check
          %p384 = pneg %p191
        $region66: #{tpu_custom_call.1} parent=59 // pred_check_branch
          %386 = sbr.rel (%p384) target = $region68
        $region67: #{tpu_custom_call.1} parent=59 // pred_region
          %387 = dma.done [#allocation8], 256
        $region68: #{tpu_custom_call.1} parent=59 // pred_fallthru
          _
        // Predicated region
        $region69: #{tpu_custom_call.1} parent=59 // pred_check
          %p388 = pneg %p212
        $region70: #{tpu_custom_call.1} parent=59 // pred_check_branch
          %390 = sbr.rel (%p388) target = $region72
        $region71: #{tpu_custom_call.1} parent=59 // pred_region
          %391 = dma.done [#allocation8], 16
        $region72: #{tpu_custom_call.1} parent=59 // pred_fallthru
          _
        // Predicated region
        $region73: #{tpu_custom_call.1} parent=59 // pred_check
          %p392 = pneg %p233
        $region74: #{tpu_custom_call.1} parent=59 // pred_check_branch
          %394 = sbr.rel (%p392) target = $region76
        $region75: #{tpu_custom_call.1} parent=59 // pred_region
          %395 = dma.done [#allocation11], 256
        $region76: #{tpu_custom_call.1} parent=59 // pred_fallthru
          _
        %p396 = scmp.lt.s32.totalorder %s31, 1
        %s397 = scalar_select %p396, %s31, 1
        %s398 = smul.addr %s397, 8
        %s399 = scalar_lea.vmem %s0, %s398
        %p400 = pneg %p60
        %p401 = pneg %p57
        %p402 = pneg %p81
        %p403 = pneg %p78
        %p404 = pneg %p102
        %p405 = pneg %p99
        %p406 = pneg %p123
        %p407 = pneg %p120
        %p408 = pneg %p144
        %p409 = pneg %p141
        %p410 = pneg %p165
        %p411 = pneg %p162
        %p412 = pneg %p191
        %p413 = pneg %p188
        %p414 = pneg %p212
        %p415 = pneg %p209
        %p416 = pneg %p233
        %p417 = pneg %p230
        %p418 = pneg %p254
        %p419 = pneg %p251
        %p420 = pneg %p282
        %p421 = pneg %p279
        %s422 = sand.u32 %s269, 1
        %s423 = scalar_lea.sflag [#allocation6], %s422
        %s424 = sand.u32 %s269, 1
        %s425 = smul.addr %s424, 8
        %s426 = scalar_lea.vmem [#allocation12], %s425
        %p427 = scmp.lt.s32.totalorder %s31, 1
        %s428 = scalar_select %p427, %s31, 1
        %s429 = smul.addr %s428, 8
        %s430 = scalar_lea.vmem %s0, %s429
        %v432 = vld [vmem:[#allocation4] sm:$0x1]
        %p433 = scmp.eq.s32.totalorder %s32, 0
        // Predicated region
        $region77: #{tpu_custom_call.1} parent=59 // pred_check
          %p434 = pneg %p433
        $region78: #{tpu_custom_call.1} parent=59 // pred_check_branch
          %436 = sbr.rel (%p434) target = $region80
        $region79: #{tpu_custom_call.1} parent=59 // pred_region
          %v437 = vld [vmem:[%s430] sm:$0xff]
          %v438 = vmul.f32 %v437, %v437
          %vm439 = vcmask 261120
          %v440 = vsel %vm439, %v438, 0.0
          %441 = vadd.xlane.f32.xlu0 %v440
          %v442 = vpop.xlane.xlu0 %441
          %v443 = vrcp.pop 32.0
          %v444 = vmul.f32 %v442, %v443
          %v445 = vadd.f32 %v444, 1e-06
          %v446 = vrsqrt.pop %v445
          %v447 = vmul.f32 %v437, %v446
          %v449 = vlaneseq
          %v450 = vshrl.u32 %v449, 7
          %v451 = vsub.s32 0, %v450
          %v452 = vrot.slane %v432, %v451
          %v454 = vmul.f32 %v452, %v447
          %v455 = vpack.c.bf16 %v454, %v454
          %v456 = vld [vmem:[%s3] sm:$0xf]
          %v457 = vld [vmem:[%s3 + $0x4] sm:$0xf]
          %v458 = vld [vmem:[%s3 + $0x8] sm:$0xf]
          %v459 = vld [vmem:[%s3 + $0xc] sm:$0xf]
          %v464 = vunpack.c.l.b16 %v456
          %v465 = vunpack.c.l.b16 %v457
          %v466 = vunpack.c.l.b16 %v458
          %v467 = vunpack.c.l.b16 %v459
          %v468 = vpack.c.b16 %v465, %v464
          %v469 = vpack.c.b16 %v467, %v466
          %v473 = vsel %vm439, %v455, 0
          %475 = vmatprep.subr.bf16.mxu0 0
          %476 = vmatpush1.bf16.msra.mxu0 0
          %477 = vmatprep.subr.bf16.mxu0 0
          %478 = vmatpush1.bf16.msra.mxu0 0
          %479 = vmatprep.subr.bf16.mxu0 0
          %480 = vmatpush1.bf16.msra.mxu0 0
          %481 = vmatprep.subr.bf16.mxu0 0
          %482 = vmatpush1.bf16.msra.mxu0 0
          %483 = vmatprep.subr.bf16.mxu0 0
          %484 = vmatpush1.bf16.msra.mxu0 0
          %485 = vmatprep.subr.bf16.mxu0 0
          %486 = vmatpush1.bf16.msra.mxu0 0
          %487 = vmatprep.subr.bf16.mxu0 0
          %488 = vmatpush1.bf16.msra.mxu0 %v469
          %489 = vmatprep.subr.bf16.mxu0 0
          %490 = vmatpush1.bf16.msra.mxu0 %v468
          %491 = vmatprep.subr.bf16.mxu0 0
          %492 = vmatpush2.bf16.msra.mxu0 0
          %493 = vmatprep.subr.bf16.mxu0 0
          %494 = vmatpush2.bf16.msra.mxu0 0
          %495 = vmatprep.subr.bf16.mxu0 0
          %496 = vmatpush2.bf16.msra.mxu0 0
          %497 = vmatprep.subr.bf16.mxu0 0
          %498 = vmatpush2.bf16.msra.mxu0 0
          %499 = vmatprep.subr.bf16.mxu0 0
          %500 = vmatpush2.bf16.msra.mxu0 0
          %501 = vmatprep.subr.bf16.mxu0 0
          %502 = vmatpush2.bf16.msra.mxu0 0
          %503 = vmatprep.subr.bf16.mxu0 0
          %504 = vmatpush2.bf16.msra.mxu0 0
          %505 = vmatprep.subr.bf16.mxu0 0
          %506 = vmatpush2.bf16.msra.mxu0 0
          %507 = vmatprep.mubr.bf16.mxu0 0
          %508 = vmatmul.mubr.bf16.gmra.mxu0 %v473
          %v509 = vpop.f32.mrf.mxu0
          %v510 = vadd.f32 0.0, %v509
          %v511 = vpop.f32.mrf.mxu0
          %v512 = vpop.f32.mrf.mxu0
          %v513 = vpop.f32.mrf.mxu0
          %514 = vdwg.mxu0
          %v515 = vld [vmem:[%s4] sm:$0xf]
          %v516 = vld [vmem:[%s4 + $0x4] sm:$0xf]
          %v517 = vld [vmem:[%s4 + $0x8] sm:$0xf]
          %v518 = vld [vmem:[%s4 + $0xc] sm:$0xf]
          %v523 = vunpack.c.l.b16 %v515
          %v524 = vunpack.c.l.b16 %v516
          %v525 = vunpack.c.l.b16 %v517
          %v526 = vunpack.c.l.b16 %v518
          %v527 = vpack.c.b16 %v524, %v523
          %v528 = vpack.c.b16 %v526, %v525
          %531 = vmatprep.subr.bf16.mxu0 0
          %532 = vmatpush1.bf16.msra.mxu0 0
          %533 = vmatprep.subr.bf16.mxu0 0
          %534 = vmatpush1.bf16.msra.mxu0 0
          %535 = vmatprep.subr.bf16.mxu0 0
          %536 = vmatpush1.bf16.msra.mxu0 0
          %537 = vmatprep.subr.bf16.mxu0 0
          %538 = vmatpush1.bf16.msra.mxu0 0
          %539 = vmatprep.subr.bf16.mxu0 0
          %540 = vmatpush1.bf16.msra.mxu0 0
          %541 = vmatprep.subr.bf16.mxu0 0
          %542 = vmatpush1.bf16.msra.mxu0 0
          %543 = vmatprep.subr.bf16.mxu0 0
          %544 = vmatpush1.bf16.msra.mxu0 %v528
          %545 = vmatprep.subr.bf16.mxu0 0
          %546 = vmatpush1.bf16.msra.mxu0 %v527
          %547 = vmatprep.subr.bf16.mxu0 0
          %548 = vmatpush2.bf16.msra.mxu0 0
          %549 = vmatprep.subr.bf16.mxu0 0
          %550 = vmatpush2.bf16.msra.mxu0 0
          %551 = vmatprep.subr.bf16.mxu0 0
          %552 = vmatpush2.bf16.msra.mxu0 0
          %553 = vmatprep.subr.bf16.mxu0 0
          %554 = vmatpush2.bf16.msra.mxu0 0
          %555 = vmatprep.subr.bf16.mxu0 0
          %556 = vmatpush2.bf16.msra.mxu0 0
          %557 = vmatprep.subr.bf16.mxu0 0
          %558 = vmatpush2.bf16.msra.mxu0 0
          %559 = vmatprep.subr.bf16.mxu0 0
          %560 = vmatpush2.bf16.msra.mxu0 0
          %561 = vmatprep.subr.bf16.mxu0 0
          %562 = vmatpush2.bf16.msra.mxu0 0
          %563 = vmatprep.mubr.bf16.mxu0 0
          %564 = vmatmul.mubr.bf16.gmra.mxu0 %v473
          %v565 = vpop.f32.mrf.mxu0
          %v566 = vadd.f32 0.0, %v565
          %v567 = vpop.f32.mrf.mxu0
          %v568 = vpop.f32.mrf.mxu0
          %v569 = vpop.f32.mrf.mxu0
          %570 = vdwg.mxu0
          %v571 = vpack.c.bf16 %v510, %v510
          %vm572 = vcmask 60416
          %573 = vst.msk [vmem:[#allocation2] sm:$0xf] %vm572, %v571
          %v574 = vpack.c.bf16 %v566, %v566
          %575 = vst.msk [vmem:[#allocation3] sm:$0xf] %vm572, %v574
          %v577 = vunpack.c.l.b16 %v571
          %v578 = vpack.c.b16 %v577, %v577
          %579 = vrot.lane.b32.xlu0 %v578, 120
          %v580 = vpop.permute.xlu0 %579
          %s582 = scalar_lea.vmem [#allocation2], 4
          %583 = vst.msk [vmem:[%s582] sm:$0xf] %vm572, %v580
          %v585 = vunpack.c.l.b16 %v574
          %v586 = vpack.c.b16 %v585, %v585
          %587 = vrot.lane.b32.xlu0 %v586, 120
          %v588 = vpop.permute.xlu0 %587
          %s590 = scalar_lea.vmem [#allocation3], 4
          %591 = vst.msk [vmem:[%s590] sm:$0xf] %vm572, %v588
          %592 = vrot.lane.b32.xlu0 %v578, 112
          %v593 = vpop.permute.xlu0 %592
          %s595 = scalar_lea.vmem [#allocation2], 8
          %596 = vst.msk [vmem:[%s595] sm:$0xf] %vm572, %v593
          %597 = vrot.lane.b32.xlu0 %v586, 112
          %v598 = vpop.permute.xlu0 %597
          %s600 = scalar_lea.vmem [#allocation3], 8
          %601 = vst.msk [vmem:[%s600] sm:$0xf] %vm572, %v598
          %602 = vrot.lane.b32.xlu0 %v578, 104
          %v603 = vpop.permute.xlu0 %602
          %s605 = scalar_lea.vmem [#allocation2], 12
          %606 = vst.msk [vmem:[%s605] sm:$0xf] %vm572, %v603
          %607 = vrot.lane.b32.xlu0 %v586, 104
          %v608 = vpop.permute.xlu0 %607
          %s610 = scalar_lea.vmem [#allocation3], 12
          %611 = vst.msk [vmem:[%s610] sm:$0xf] %vm572, %v608
        $region80: #{tpu_custom_call.1} parent=59 // pred_fallthru
          _
        %s612 = smul.u32 %s32, 8
        %s613 = scalar_lea.vmem %s430, %s612
        %v614 = vld [vmem:[%s613] sm:$0xff]
        %v615 = vmul.f32 %v614, %v614
        %vm616 = vcmask 261120
        %v617 = vsel %vm616, %v615, 0.0
        %618 = vadd.xlane.f32.xlu0 %v617
        %v619 = vpop.xlane.xlu0 %618
        %v620 = vrcp.pop 32.0
        %v621 = vmul.f32 %v619, %v620
        %v622 = vadd.f32 %v621, 1e-06
        %v623 = vrsqrt.pop %v622
        %v624 = vmul.f32 %v614, %v623
        %v626 = vlaneseq
        %v627 = vshrl.u32 %v626, 7
        %v628 = vsub.s32 0, %v627
        %v629 = vrot.slane %v432, %v628
        %v631 = vmul.f32 %v629, %v624
        %v632 = vpack.c.bf16 %v631, %v631
        %v633 = vld [vmem:[%s2] sm:$0xf]
        %v634 = vld [vmem:[%s2 + $0x4] sm:$0xf]
        %v635 = vld [vmem:[%s2 + $0x8] sm:$0xf]
        %v636 = vld [vmem:[%s2 + $0xc] sm:$0xf]
        %v641 = vunpack.c.l.b16 %v633
        %v642 = vunpack.c.l.b16 %v634
        %v643 = vunpack.c.l.b16 %v635
        %v644 = vunpack.c.l.b16 %v636
        %v645 = vpack.c.b16 %v642, %v641
        %v646 = vpack.c.b16 %v644, %v643
        %v650 = vsel %vm616, %v632, 0
        %652 = vmatprep.subr.bf16.mxu0 0
        %653 = vmatpush1.bf16.msra.mxu0 0
        %654 = vmatprep.subr.bf16.mxu0 0
        %655 = vmatpush1.bf16.msra.mxu0 0
        %656 = vmatprep.subr.bf16.mxu0 0
        %657 = vmatpush1.bf16.msra.mxu0 0
        %658 = vmatprep.subr.bf16.mxu0 0
        %659 = vmatpush1.bf16.msra.mxu0 0
        %660 = vmatprep.subr.bf16.mxu0 0
        %661 = vmatpush1.bf16.msra.mxu0 0
        %662 = vmatprep.subr.bf16.mxu0 0
        %663 = vmatpush1.bf16.msra.mxu0 0
        %664 = vmatprep.subr.bf16.mxu0 0
        %665 = vmatpush1.bf16.msra.mxu0 %v646
        %666 = vmatprep.subr.bf16.mxu0 0
        %667 = vmatpush1.bf16.msra.mxu0 %v645
        %668 = vmatprep.subr.bf16.mxu0 0
        %669 = vmatpush2.bf16.msra.mxu0 0
        %670 = vmatprep.subr.bf16.mxu0 0
        %671 = vmatpush2.bf16.msra.mxu0 0
        %672 = vmatprep.subr.bf16.mxu0 0
        %673 = vmatpush2.bf16.msra.mxu0 0
        %674 = vmatprep.subr.bf16.mxu0 0
        %675 = vmatpush2.bf16.msra.mxu0 0
        %676 = vmatprep.subr.bf16.mxu0 0
        %677 = vmatpush2.bf16.msra.mxu0 0
        %678 = vmatprep.subr.bf16.mxu0 0
        %679 = vmatpush2.bf16.msra.mxu0 0
        %680 = vmatprep.subr.bf16.mxu0 0
        %681 = vmatpush2.bf16.msra.mxu0 0
        %682 = vmatprep.subr.bf16.mxu0 0
        %683 = vmatpush2.bf16.msra.mxu0 0
        %684 = vmatprep.mubr.bf16.mxu0 0
        %685 = vmatmul.mubr.bf16.gmra.mxu0 %v650
        %v686 = vpop.f32.mrf.mxu0
        %v687 = vadd.f32 0.0, %v686
        %v688 = vpop.f32.mrf.mxu0
        %v689 = vpop.f32.mrf.mxu0
        %v690 = vpop.f32.mrf.mxu0
        %691 = vdwg.mxu0
        %693 = vrot.lane.b32.xlu0 %v687, 120
        %v694 = vpop.permute.xlu0 %693
        %696 = vrot.lane.b32.xlu0 %v687, 112
        %v697 = vpop.permute.xlu0 %696
        %699 = vrot.lane.b32.xlu0 %v687, 104
        %v700 = vpop.permute.xlu0 %699
        %v702 = vpack.c.bf16 %v687, %v687
        %v703 = vpack.c.bf16 %v694, %v694
        %v704 = vpack.c.bf16 %v697, %v697
        %v705 = vpack.c.bf16 %v700, %v700
        %v706 = vld [vmem:[#allocation2] sm:$0xf]
        %v707 = vld [vmem:[#allocation2 + $0x4] sm:$0xf]
        %v708 = vld [vmem:[#allocation2 + $0x8] sm:$0xf]
        %v709 = vld [vmem:[#allocation2 + $0xc] sm:$0xf]
        %v710 = vld [vmem:[#allocation3] sm:$0xf]
        %v711 = vld [vmem:[#allocation3 + $0x4] sm:$0xf]
        %v712 = vld [vmem:[#allocation3 + $0x8] sm:$0xf]
        %v713 = vld [vmem:[#allocation3 + $0xc] sm:$0xf]
        %v714 = vld [vmem:[#allocation7] sm:$0xf]
        %v715 = vld [vmem:[#allocation7 + $0x4] sm:$0xf]
        %v716 = vld [vmem:[#allocation7 + $0x8] sm:$0xf]
        %v717 = vld [vmem:[#allocation7 + $0xc] sm:$0xf]
        %v718 = vunpack.c.l.bf16 %v714
        %v719 = vunpack.c.l.bf16 %v715
        %v720 = vunpack.c.l.bf16 %v716
        %v721 = vunpack.c.l.bf16 %v717
        %vm722 = vcmask 64512
        %v724 = vsel %vm722, %v702, 0
        %v727 = vsel %vm722, %v706, 0
        %729 = vmatprep.subr.bf16.mxu0 0
        %730 = vmatpush1.bf16.xpose.msra.mxu0 0
        %731 = vmatprep.subr.bf16.mxu0 0
        %732 = vmatpush1.bf16.xpose.msra.mxu0 0
        %733 = vmatprep.subr.bf16.mxu0 0
        %734 = vmatpush1.bf16.xpose.msra.mxu0 0
        %735 = vmatprep.subr.bf16.mxu0 0
        %736 = vmatpush1.bf16.xpose.msra.mxu0 0
        %737 = vmatprep.subr.bf16.mxu0 0
        %738 = vmatpush1.bf16.xpose.msra.mxu0 0
        %739 = vmatprep.subr.bf16.mxu0 0
        %740 = vmatpush1.bf16.xpose.msra.mxu0 0
        %741 = vmatprep.subr.bf16.mxu0 0
        %742 = vmatpush1.bf16.xpose.msra.mxu0 0
        %743 = vmatprep.subr.bf16.mxu0 0
        %744 = vmatpush1.bf16.xpose.msra.mxu0 %v727
        %745 = vmatprep.subr.bf16.mxu0 0
        %746 = vmatpush2.bf16.xpose.msra.mxu0 0
        %747 = vmatprep.subr.bf16.mxu0 0
        %748 = vmatpush2.bf16.xpose.msra.mxu0 0
        %749 = vmatprep.subr.bf16.mxu0 0
        %750 = vmatpush2.bf16.xpose.msra.mxu0 0
        %751 = vmatprep.subr.bf16.mxu0 0
        %752 = vmatpush2.bf16.xpose.msra.mxu0 0
        %753 = vmatprep.subr.bf16.mxu0 0
        %754 = vmatpush2.bf16.xpose.msra.mxu0 0
        %755 = vmatprep.subr.bf16.mxu0 0
        %756 = vmatpush2.bf16.xpose.msra.mxu0 0
        %757 = vmatprep.subr.bf16.mxu0 0
        %758 = vmatpush2.bf16.xpose.msra.mxu0 0
        %759 = vmatprep.subr.bf16.mxu0 0
        %760 = vmatpush2.bf16.xpose.msra.mxu0 0
        %761 = vmatprep.mubr.bf16.mxu0 0
        %762 = vmatmul.mubr.bf16.gmra.mxu0 %v724
        %v763 = vpop.f32.mrf.mxu0
        %v764 = vadd.f32 %v718, %v763
        %v765 = vpop.f32.mrf.mxu0
        %v766 = vpop.f32.mrf.mxu0
        %v767 = vpop.f32.mrf.mxu0
        %768 = vdwg.mxu0
        %v770 = vsel %vm722, %v703, 0
        %v773 = vsel %vm722, %v707, 0
        %775 = vmatprep.subr.bf16.mxu0 0
        %776 = vmatpush1.bf16.xpose.msra.mxu0 0
        %777 = vmatprep.subr.bf16.mxu0 0
        %778 = vmatpush1.bf16.xpose.msra.mxu0 0
        %779 = vmatprep.subr.bf16.mxu0 0
        %780 = vmatpush1.bf16.xpose.msra.mxu0 0
        %781 = vmatprep.subr.bf16.mxu0 0
        %782 = vmatpush1.bf16.xpose.msra.mxu0 0
        %783 = vmatprep.subr.bf16.mxu0 0
        %784 = vmatpush1.bf16.xpose.msra.mxu0 0
        %785 = vmatprep.subr.bf16.mxu0 0
        %786 = vmatpush1.bf16.xpose.msra.mxu0 0
        %787 = vmatprep.subr.bf16.mxu0 0
        %788 = vmatpush1.bf16.xpose.msra.mxu0 0
        %789 = vmatprep.subr.bf16.mxu0 0
        %790 = vmatpush1.bf16.xpose.msra.mxu0 %v773
        %791 = vmatprep.subr.bf16.mxu0 0
        %792 = vmatpush2.bf16.xpose.msra.mxu0 0
        %793 = vmatprep.subr.bf16.mxu0 0
        %794 = vmatpush2.bf16.xpose.msra.mxu0 0
        %795 = vmatprep.subr.bf16.mxu0 0
        %796 = vmatpush2.bf16.xpose.msra.mxu0 0
        %797 = vmatprep.subr.bf16.mxu0 0
        %798 = vmatpush2.bf16.xpose.msra.mxu0 0
        %799 = vmatprep.subr.bf16.mxu0 0
        %800 = vmatpush2.bf16.xpose.msra.mxu0 0
        %801 = vmatprep.subr.bf16.mxu0 0
        %802 = vmatpush2.bf16.xpose.msra.mxu0 0
        %803 = vmatprep.subr.bf16.mxu0 0
        %804 = vmatpush2.bf16.xpose.msra.mxu0 0
        %805 = vmatprep.subr.bf16.mxu0 0
        %806 = vmatpush2.bf16.xpose.msra.mxu0 0
        %807 = vmatprep.mubr.bf16.mxu0 0
        %808 = vmatmul.mubr.bf16.gmra.mxu0 %v770
        %v809 = vpop.f32.mrf.mxu0
        %v810 = vadd.f32 %v719, %v809
        %v811 = vpop.f32.mrf.mxu0
        %v812 = vpop.f32.mrf.mxu0
        %v813 = vpop.f32.mrf.mxu0
        %814 = vdwg.mxu0
        %v816 = vsel %vm722, %v704, 0
        %v819 = vsel %vm722, %v708, 0
        %821 = vmatprep.subr.bf16.mxu0 0
        %822 = vmatpush1.bf16.xpose.msra.mxu0 0
        %823 = vmatprep.subr.bf16.mxu0 0
        %824 = vmatpush1.bf16.xpose.msra.mxu0 0
        %825 = vmatprep.subr.bf16.mxu0 0
        %826 = vmatpush1.bf16.xpose.msra.mxu0 0
        %827 = vmatprep.subr.bf16.mxu0 0
        %828 = vmatpush1.bf16.xpose.msra.mxu0 0
        %829 = vmatprep.subr.bf16.mxu0 0
        %830 = vmatpush1.bf16.xpose.msra.mxu0 0
        %831 = vmatprep.subr.bf16.mxu0 0
        %832 = vmatpush1.bf16.xpose.msra.mxu0 0
        %833 = vmatprep.subr.bf16.mxu0 0
        %834 = vmatpush1.bf16.xpose.msra.mxu0 0
        %835 = vmatprep.subr.bf16.mxu0 0
        %836 = vmatpush1.bf16.xpose.msra.mxu0 %v819
        %837 = vmatprep.subr.bf16.mxu0 0
        %838 = vmatpush2.bf16.xpose.msra.mxu0 0
        %839 = vmatprep.subr.bf16.mxu0 0
        %840 = vmatpush2.bf16.xpose.msra.mxu0 0
        %841 = vmatprep.subr.bf16.mxu0 0
        %842 = vmatpush2.bf16.xpose.msra.mxu0 0
        %843 = vmatprep.subr.bf16.mxu0 0
        %844 = vmatpush2.bf16.xpose.msra.mxu0 0
        %845 = vmatprep.subr.bf16.mxu0 0
        %846 = vmatpush2.bf16.xpose.msra.mxu0 0
        %847 = vmatprep.subr.bf16.mxu0 0
        %848 = vmatpush2.bf16.xpose.msra.mxu0 0
        %849 = vmatprep.subr.bf16.mxu0 0
        %850 = vmatpush2.bf16.xpose.msra.mxu0 0
        %851 = vmatprep.subr.bf16.mxu0 0
        %852 = vmatpush2.bf16.xpose.msra.mxu0 0
        %853 = vmatprep.mubr.bf16.mxu0 0
        %854 = vmatmul.mubr.bf16.gmra.mxu0 %v816
        %v855 = vpop.f32.mrf.mxu0
        %v856 = vadd.f32 %v720, %v855
        %v857 = vpop.f32.mrf.mxu0
        %v858 = vpop.f32.mrf.mxu0
        %v859 = vpop.f32.mrf.mxu0
        %860 = vdwg.mxu0
        %v862 = vsel %vm722, %v705, 0
        %v865 = vsel %vm722, %v709, 0
        %867 = vmatprep.subr.bf16.mxu0 0
        %868 = vmatpush1.bf16.xpose.msra.mxu0 0
        %869 = vmatprep.subr.bf16.mxu0 0
        %870 = vmatpush1.bf16.xpose.msra.mxu0 0
        %871 = vmatprep.subr.bf16.mxu0 0
        %872 = vmatpush1.bf16.xpose.msra.mxu0 0
        %873 = vmatprep.subr.bf16.mxu0 0
        %874 = vmatpush1.bf16.xpose.msra.mxu0 0
        %875 = vmatprep.subr.bf16.mxu0 0
        %876 = vmatpush1.bf16.xpose.msra.mxu0 0
        %877 = vmatprep.subr.bf16.mxu0 0
        %878 = vmatpush1.bf16.xpose.msra.mxu0 0
        %879 = vmatprep.subr.bf16.mxu0 0
        %880 = vmatpush1.bf16.xpose.msra.mxu0 0
        %881 = vmatprep.subr.bf16.mxu0 0
        %882 = vmatpush1.bf16.xpose.msra.mxu0 %v865
        %883 = vmatprep.subr.bf16.mxu0 0
        %884 = vmatpush2.bf16.xpose.msra.mxu0 0
        %885 = vmatprep.subr.bf16.mxu0 0
        %886 = vmatpush2.bf16.xpose.msra.mxu0 0
        %887 = vmatprep.subr.bf16.mxu0 0
        %888 = vmatpush2.bf16.xpose.msra.mxu0 0
        %889 = vmatprep.subr.bf16.mxu0 0
        %890 = vmatpush2.bf16.xpose.msra.mxu0 0
        %891 = vmatprep.subr.bf16.mxu0 0
        %892 = vmatpush2.bf16.xpose.msra.mxu0 0
        %893 = vmatprep.subr.bf16.mxu0 0
        %894 = vmatpush2.bf16.xpose.msra.mxu0 0
        %895 = vmatprep.subr.bf16.mxu0 0
        %896 = vmatpush2.bf16.xpose.msra.mxu0 0
        %897 = vmatprep.subr.bf16.mxu0 0
        %898 = vmatpush2.bf16.xpose.msra.mxu0 0
        %899 = vmatprep.mubr.bf16.mxu0 0
        %900 = vmatmul.mubr.bf16.gmra.mxu0 %v862
        %v901 = vpop.f32.mrf.mxu0
        %v902 = vadd.f32 %v721, %v901
        %v903 = vpop.f32.mrf.mxu0
        %v904 = vpop.f32.mrf.mxu0
        %v905 = vpop.f32.mrf.mxu0
        %906 = vdwg.mxu0
        %v907 = vsel %vm722, %v764, -inf
        %908 = vmax.xlane.f32.xlu0 %v907
        %v909 = vpop.xlane.xlu0 %908
        %v910 = vsel %vm722, %v810, -inf
        %911 = vmax.xlane.f32.xlu0 %v910
        %v912 = vpop.xlane.xlu0 %911
        %v913 = vsel %vm722, %v856, -inf
        %914 = vmax.xlane.f32.xlu0 %v913
        %v915 = vpop.xlane.xlu0 %914
        %v916 = vsel %vm722, %v902, -inf
        %917 = vmax.xlane.f32.xlu0 %v916
        %v918 = vpop.xlane.xlu0 %917
        %v919 = vsub.f32 %v764, %v909
        %v920 = vsub.f32 %v810, %v912
        %v921 = vsub.f32 %v856, %v915
        %v922 = vsub.f32 %v902, %v918
        %v923 = vmul.f32 %v919, 1.442695
        %v924 = vpow.pop %v923
        %v925 = vmul.f32 %v920, 1.442695
        %v926 = vpow.pop %v925
        %v927 = vmul.f32 %v921, 1.442695
        %v928 = vpow.pop %v927
        %v929 = vmul.f32 %v922, 1.442695
        %v930 = vpow.pop %v929
        %v931 = vsel %vm722, %v924, 0.0
        %932 = vadd.xlane.f32.xlu0 %v931
        %v933 = vpop.xlane.xlu0 %932
        %v934 = vsel %vm722, %v926, 0.0
        %935 = vadd.xlane.f32.xlu0 %v934
        %v936 = vpop.xlane.xlu0 %935
        %v937 = vsel %vm722, %v928, 0.0
        %938 = vadd.xlane.f32.xlu0 %v937
        %v939 = vpop.xlane.xlu0 %938
        %v940 = vsel %vm722, %v930, 0.0
        %941 = vadd.xlane.f32.xlu0 %v940
        %v942 = vpop.xlane.xlu0 %941
        %v943 = vpack.c.bf16 %v924, %v924
        %v944 = vpack.c.bf16 %v926, %v926
        %v945 = vpack.c.bf16 %v928, %v928
        %v946 = vpack.c.bf16 %v930, %v930
        %v948 = vsel %vm722, %v943, 0
        %vm950 = vcmask 1043456
        %v952 = vsel %vm950, %v710, 0
        %954 = vmatprep.subr.bf16.mxu0 0
        %955 = vmatpush1.bf16.msra.mxu0 0
        %956 = vmatprep.subr.bf16.mxu0 0
        %957 = vmatpush1.bf16.msra.mxu0 0
        %958 = vmatprep.subr.bf16.mxu0 0
        %959 = vmatpush1.bf16.msra.mxu0 0
        %960 = vmatprep.subr.bf16.mxu0 0
        %961 = vmatpush1.bf16.msra.mxu0 0
        %962 = vmatprep.subr.bf16.mxu0 0
        %963 = vmatpush1.bf16.msra.mxu0 0
        %964 = vmatprep.subr.bf16.mxu0 0
        %965 = vmatpush1.bf16.msra.mxu0 0
        %966 = vmatprep.subr.bf16.mxu0 0
        %967 = vmatpush1.bf16.msra.mxu0 0
        %968 = vmatprep.subr.bf16.mxu0 0
        %969 = vmatpush1.bf16.msra.mxu0 %v952
        %970 = vmatprep.subr.bf16.mxu0 0
        %971 = vmatpush2.bf16.msra.mxu0 0
        %972 = vmatprep.subr.bf16.mxu0 0
        %973 = vmatpush2.bf16.msra.mxu0 0
        %974 = vmatprep.subr.bf16.mxu0 0
        %975 = vmatpush2.bf16.msra.mxu0 0
        %976 = vmatprep.subr.bf16.mxu0 0
        %977 = vmatpush2.bf16.msra.mxu0 0
        %978 = vmatprep.subr.bf16.mxu0 0
        %979 = vmatpush2.bf16.msra.mxu0 0
        %980 = vmatprep.subr.bf16.mxu0 0
        %981 = vmatpush2.bf16.msra.mxu0 0
        %982 = vmatprep.subr.bf16.mxu0 0
        %983 = vmatpush2.bf16.msra.mxu0 0
        %984 = vmatprep.subr.bf16.mxu0 0
        %985 = vmatpush2.bf16.msra.mxu0 0
        %986 = vmatprep.mubr.bf16.mxu0 0
        %987 = vmatmul.mubr.bf16.gmra.mxu0 %v948
        %v988 = vpop.f32.mrf.mxu0
        %v989 = vadd.f32 0.0, %v988
        %v990 = vpop.f32.mrf.mxu0
        %v991 = vpop.f32.mrf.mxu0
        %v992 = vpop.f32.mrf.mxu0
        %993 = vdwg.mxu0
        %v995 = vsel %vm722, %v944, 0
        %v998 = vsel %vm950, %v711, 0
        %1000 = vmatprep.subr.bf16.mxu0 0
        %1001 = vmatpush1.bf16.msra.mxu0 0
        %1002 = vmatprep.subr.bf16.mxu0 0
        %1003 = vmatpush1.bf16.msra.mxu0 0
        %1004 = vmatprep.subr.bf16.mxu0 0
        %1005 = vmatpush1.bf16.msra.mxu0 0
        %1006 = vmatprep.subr.bf16.mxu0 0
        %1007 = vmatpush1.bf16.msra.mxu0 0
        %1008 = vmatprep.subr.bf16.mxu0 0
        %1009 = vmatpush1.bf16.msra.mxu0 0
        %1010 = vmatprep.subr.bf16.mxu0 0
        %1011 = vmatpush1.bf16.msra.mxu0 0
        %1012 = vmatprep.subr.bf16.mxu0 0
        %1013 = vmatpush1.bf16.msra.mxu0 0
        %1014 = vmatprep.subr.bf16.mxu0 0
        %1015 = vmatpush1.bf16.msra.mxu0 %v998
        %1016 = vmatprep.subr.bf16.mxu0 0
        %1017 = vmatpush2.bf16.msra.mxu0 0
        %1018 = vmatprep.subr.bf16.mxu0 0
        %1019 = vmatpush2.bf16.msra.mxu0 0
        %1020 = vmatprep.subr.bf16.mxu0 0
        %1021 = vmatpush2.bf16.msra.mxu0 0
        %1022 = vmatprep.subr.bf16.mxu0 0
        %1023 = vmatpush2.bf16.msra.mxu0 0
        %1024 = vmatprep.subr.bf16.mxu0 0
        %1025 = vmatpush2.bf16.msra.mxu0 0
        %1026 = vmatprep.subr.bf16.mxu0 0
        %1027 = vmatpush2.bf16.msra.mxu0 0
        %1028 = vmatprep.subr.bf16.mxu0 0
        %1029 = vmatpush2.bf16.msra.mxu0 0
        %1030 = vmatprep.subr.bf16.mxu0 0
        %1031 = vmatpush2.bf16.msra.mxu0 0
        %1032 = vmatprep.mubr.bf16.mxu0 0
        %1033 = vmatmul.mubr.bf16.gmra.mxu0 %v995
        %v1034 = vpop.f32.mrf.mxu0
        %v1035 = vadd.f32 0.0, %v1034
        %v1036 = vpop.f32.mrf.mxu0
        %v1037 = vpop.f32.mrf.mxu0
        %v1038 = vpop.f32.mrf.mxu0
        %1039 = vdwg.mxu0
        %v1041 = vsel %vm722, %v945, 0
        %v1044 = vsel %vm950, %v712, 0
        %1046 = vmatprep.subr.bf16.mxu0 0
        %1047 = vmatpush1.bf16.msra.mxu0 0
        %1048 = vmatprep.subr.bf16.mxu0 0
        %1049 = vmatpush1.bf16.msra.mxu0 0
        %1050 = vmatprep.subr.bf16.mxu0 0
        %1051 = vmatpush1.bf16.msra.mxu0 0
        %1052 = vmatprep.subr.bf16.mxu0 0
        %1053 = vmatpush1.bf16.msra.mxu0 0
        %1054 = vmatprep.subr.bf16.mxu0 0
        %1055 = vmatpush1.bf16.msra.mxu0 0
        %1056 = vmatprep.subr.bf16.mxu0 0
        %1057 = vmatpush1.bf16.msra.mxu0 0
        %1058 = vmatprep.subr.bf16.mxu0 0
        %1059 = vmatpush1.bf16.msra.mxu0 0
        %1060 = vmatprep.subr.bf16.mxu0 0
        %1061 = vmatpush1.bf16.msra.mxu0 %v1044
        %1062 = vmatprep.subr.bf16.mxu0 0
        %1063 = vmatpush2.bf16.msra.mxu0 0
        %1064 = vmatprep.subr.bf16.mxu0 0
        %1065 = vmatpush2.bf16.msra.mxu0 0
        %1066 = vmatprep.subr.bf16.mxu0 0
        %1067 = vmatpush2.bf16.msra.mxu0 0
        %1068 = vmatprep.subr.bf16.mxu0 0
        %1069 = vmatpush2.bf16.msra.mxu0 0
        %1070 = vmatprep.subr.bf16.mxu0 0
        %1071 = vmatpush2.bf16.msra.mxu0 0
        %1072 = vmatprep.subr.bf16.mxu0 0
        %1073 = vmatpush2.bf16.msra.mxu0 0
        %1074 = vmatprep.subr.bf16.mxu0 0
        %1075 = vmatpush2.bf16.msra.mxu0 0
        %1076 = vmatprep.subr.bf16.mxu0 0
        %1077 = vmatpush2.bf16.msra.mxu0 0
        %1078 = vmatprep.mubr.bf16.mxu0 0
        %1079 = vmatmul.mubr.bf16.gmra.mxu0 %v1041
        %v1080 = vpop.f32.mrf.mxu0
        %v1081 = vadd.f32 0.0, %v1080
        %v1082 = vpop.f32.mrf.mxu0
        %v1083 = vpop.f32.mrf.mxu0
        %v1084 = vpop.f32.mrf.mxu0
        %1085 = vdwg.mxu0
        %v1087 = vsel %vm722, %v946, 0
        %v1090 = vsel %vm950, %v713, 0
        %1092 = vmatprep.subr.bf16.mxu0 0
        %1093 = vmatpush1.bf16.msra.mxu0 0
        %1094 = vmatprep.subr.bf16.mxu0 0
        %1095 = vmatpush1.bf16.msra.mxu0 0
        %1096 = vmatprep.subr.bf16.mxu0 0
        %1097 = vmatpush1.bf16.msra.mxu0 0
        %1098 = vmatprep.subr.bf16.mxu0 0
        %1099 = vmatpush1.bf16.msra.mxu0 0
        %1100 = vmatprep.subr.bf16.mxu0 0
        %1101 = vmatpush1.bf16.msra.mxu0 0
        %1102 = vmatprep.subr.bf16.mxu0 0
        %1103 = vmatpush1.bf16.msra.mxu0 0
        %1104 = vmatprep.subr.bf16.mxu0 0
        %1105 = vmatpush1.bf16.msra.mxu0 0
        %1106 = vmatprep.subr.bf16.mxu0 0
        %1107 = vmatpush1.bf16.msra.mxu0 %v1090
        %1108 = vmatprep.subr.bf16.mxu0 0
        %1109 = vmatpush2.bf16.msra.mxu0 0
        %1110 = vmatprep.subr.bf16.mxu0 0
        %1111 = vmatpush2.bf16.msra.mxu0 0
        %1112 = vmatprep.subr.bf16.mxu0 0
        %1113 = vmatpush2.bf16.msra.mxu0 0
        %1114 = vmatprep.subr.bf16.mxu0 0
        %1115 = vmatpush2.bf16.msra.mxu0 0
        %1116 = vmatprep.subr.bf16.mxu0 0
        %1117 = vmatpush2.bf16.msra.mxu0 0
        %1118 = vmatprep.subr.bf16.mxu0 0
        %1119 = vmatpush2.bf16.msra.mxu0 0
        %1120 = vmatprep.subr.bf16.mxu0 0
        %1121 = vmatpush2.bf16.msra.mxu0 0
        %1122 = vmatprep.subr.bf16.mxu0 0
        %1123 = vmatpush2.bf16.msra.mxu0 0
        %1124 = vmatprep.mubr.bf16.mxu0 0
        %1125 = vmatmul.mubr.bf16.gmra.mxu0 %v1087
        %v1126 = vpop.f32.mrf.mxu0
        %v1127 = vadd.f32 0.0, %v1126
        %v1128 = vpop.f32.mrf.mxu0
        %v1129 = vpop.f32.mrf.mxu0
        %v1130 = vpop.f32.mrf.mxu0
        %1131 = vdwg.mxu0
        %v1132 = vrcp.pop %v933
        %v1133 = vrcp.pop %v936
        %v1134 = vrcp.pop %v939
        %v1135 = vrcp.pop %v942
        %v1136 = vmul.f32 %v989, %v1132
        %v1137 = vmul.f32 %v1035, %v1133
        %v1138 = vmul.f32 %v1081, %v1134
        %v1139 = vmul.f32 %v1127, %v1135
        %1141 = vrot.lane.b32.xlu0 %v1137, 8
        %v1142 = vpop.permute.xlu0 %1141
        %1145 = vrot.lane.b32.xlu0 %v1138, 16
        %v1146 = vpop.permute.xlu0 %1145
        %1149 = vrot.lane.b32.xlu0 %v1139, 24
        %v1150 = vpop.permute.xlu0 %1149
        %v1152 = vsel %vm722, %v1136, %v1142
        %vm1153 = vcmask 130048
        %v1154 = vsel %vm1153, %v1152, %v1146
        %vm1155 = vcmask 195584
        %v1156 = vsel %vm1155, %v1154, %v1150
        %v1157 = vpack.c.bf16 %v1156, %v1156
        %v1158 = vld [vmem:[%s5] sm:$0xf]
        %v1159 = vld [vmem:[%s5 + $0x4] sm:$0xf]
        %v1160 = vld [vmem:[%s5 + $0x8] sm:$0xf]
        %v1161 = vld [vmem:[%s5 + $0xc] sm:$0xf]
        %v1166 = vunpack.c.l.b16 %v1158
        %v1167 = vunpack.c.l.b16 %v1159
        %v1168 = vunpack.c.l.b16 %v1160
        %v1169 = vunpack.c.l.b16 %v1161
        %v1170 = vpack.c.b16 %v1167, %v1166
        %v1171 = vpack.c.b16 %v1169, %v1168
        %v1175 = vsel %vm616, %v1157, 0
        %1177 = vmatprep.subr.bf16.mxu0 0
        %1178 = vmatpush1.bf16.msra.mxu0 0
        %1179 = vmatprep.subr.bf16.mxu0 0
        %1180 = vmatpush1.bf16.msra.mxu0 0
        %1181 = vmatprep.subr.bf16.mxu0 0
        %1182 = vmatpush1.bf16.msra.mxu0 0
        %1183 = vmatprep.subr.bf16.mxu0 0
        %1184 = vmatpush1.bf16.msra.mxu0 0
        %1185 = vmatprep.subr.bf16.mxu0 0
        %1186 = vmatpush1.bf16.msra.mxu0 0
        %1187 = vmatprep.subr.bf16.mxu0 0
        %1188 = vmatpush1.bf16.msra.mxu0 0
        %1189 = vmatprep.subr.bf16.mxu0 0
        %1190 = vmatpush1.bf16.msra.mxu0 %v1171
        %1191 = vmatprep.subr.bf16.mxu0 0
        %1192 = vmatpush1.bf16.msra.mxu0 %v1170
        %1193 = vmatprep.subr.bf16.mxu0 0
        %1194 = vmatpush2.bf16.msra.mxu0 0
        %1195 = vmatprep.subr.bf16.mxu0 0
        %1196 = vmatpush2.bf16.msra.mxu0 0
        %1197 = vmatprep.subr.bf16.mxu0 0
        %1198 = vmatpush2.bf16.msra.mxu0 0
        %1199 = vmatprep.subr.bf16.mxu0 0
        %1200 = vmatpush2.bf16.msra.mxu0 0
        %1201 = vmatprep.subr.bf16.mxu0 0
        %1202 = vmatpush2.bf16.msra.mxu0 0
        %1203 = vmatprep.subr.bf16.mxu0 0
        %1204 = vmatpush2.bf16.msra.mxu0 0
        %1205 = vmatprep.subr.bf16.mxu0 0
        %1206 = vmatpush2.bf16.msra.mxu0 0
        %1207 = vmatprep.subr.bf16.mxu0 0
        %1208 = vmatpush2.bf16.msra.mxu0 0
        %1209 = vmatprep.mubr.bf16.mxu0 0
        %1210 = vmatmul.mubr.bf16.gmra.mxu0 %v1175
        %v1211 = vpop.f32.mrf.mxu0
        %v1212 = vadd.f32 0.0, %v1211
        %v1213 = vpop.f32.mrf.mxu0
        %v1214 = vpop.f32.mrf.mxu0
        %v1215 = vpop.f32.mrf.mxu0
        %1216 = vdwg.mxu0
        %v1217 = vadd.f32 %v614, %v1212
        %v1218 = vmul.f32 %v1217, %v1217
        %v1219 = vsel %vm616, %v1218, 0.0
        %1220 = vadd.xlane.f32.xlu0 %v1219
        %v1221 = vpop.xlane.xlu0 %1220
        %v1222 = vmul.f32 %v1221, %v620
        %v1223 = vld [vmem:[#allocation9] sm:$0x1]
        %v1224 = vadd.f32 %v1222, 1e-06
        %v1225 = vrsqrt.pop %v1224
        %v1226 = vmul.f32 %v1217, %v1225
        %v1228 = vlaneseq
        %v1229 = vshrl.u32 %v1228, 7
        %v1230 = vsub.s32 0, %v1229
        %v1231 = vrot.slane %v1223, %v1230
        %v1233 = vmul.f32 %v1231, %v1226
        %v1234 = vpack.c.bf16 %v1233, %v1233
        %v1235 = vld [vmem:[#allocation10] sm:$0xf]
        %v1236 = vld [vmem:[#allocation10 + $0x4] sm:$0xf]
        %v1237 = vld [vmem:[#allocation10 + $0x8] sm:$0xf]
        %v1238 = vld [vmem:[#allocation10 + $0xc] sm:$0xf]
        %v1243 = vunpack.c.l.b16 %v1235
        %v1244 = vunpack.c.l.b16 %v1236
        %v1245 = vunpack.c.l.b16 %v1237
        %v1246 = vunpack.c.l.b16 %v1238
        %v1247 = vpack.c.b16 %v1244, %v1243
        %v1248 = vpack.c.b16 %v1246, %v1245
        %v1252 = vsel %vm616, %v1234, 0
        %1254 = vmatprep.subr.bf16.mxu0 0
        %1255 = vmatpush1.bf16.msra.mxu0 0
        %1256 = vmatprep.subr.bf16.mxu0 0
        %1257 = vmatpush1.bf16.msra.mxu0 0
        %1258 = vmatprep.subr.bf16.mxu0 0
        %1259 = vmatpush1.bf16.msra.mxu0 0
        %1260 = vmatprep.subr.bf16.mxu0 0
        %1261 = vmatpush1.bf16.msra.mxu0 0
        %1262 = vmatprep.subr.bf16.mxu0 0
        %1263 = vmatpush1.bf16.msra.mxu0 0
        %1264 = vmatprep.subr.bf16.mxu0 0
        %1265 = vmatpush1.bf16.msra.mxu0 0
        %1266 = vmatprep.subr.bf16.mxu0 0
        %1267 = vmatpush1.bf16.msra.mxu0 %v1248
        %1268 = vmatprep.subr.bf16.mxu0 0
        %1269 = vmatpush1.bf16.msra.mxu0 %v1247
        %1270 = vmatprep.subr.bf16.mxu0 0
        %1271 = vmatpush2.bf16.msra.mxu0 0
        %1272 = vmatprep.subr.bf16.mxu0 0
        %1273 = vmatpush2.bf16.msra.mxu0 0
        %1274 = vmatprep.subr.bf16.mxu0 0
        %1275 = vmatpush2.bf16.msra.mxu0 0
        %1276 = vmatprep.subr.bf16.mxu0 0
        %1277 = vmatpush2.bf16.msra.mxu0 0
        %1278 = vmatprep.subr.bf16.mxu0 0
        %1279 = vmatpush2.bf16.msra.mxu0 0
        %1280 = vmatprep.subr.bf16.mxu0 0
        %1281 = vmatpush2.bf16.msra.mxu0 0
        %1282 = vmatprep.subr.bf16.mxu0 0
        %1283 = vmatpush2.bf16.msra.mxu0 0
        %1284 = vmatprep.subr.bf16.mxu0 0
        %1285 = vmatpush2.bf16.msra.mxu0 0
        %1286 = vmatprep.mubr.bf16.mxu0 0
        %1287 = vmatmul.mubr.bf16.gmra.mxu0 %v1252
        %v1288 = vpop.f32.mrf.mxu0
        %v1289 = vadd.f32 0.0, %v1288
        %v1290 = vpop.f32.mrf.mxu0
        %v1291 = vpop.f32.mrf.mxu0
        %v1292 = vpop.f32.mrf.mxu0
        %1293 = vdwg.mxu0
        %v1294 = vmax.f32 %v1289, 0.0
        %v1295 = vpack.c.bf16 %v1294, %v1294
        %v1296 = vld [vmem:[%s9] sm:$0xf]
        %v1297 = vld [vmem:[%s9 + $0x4] sm:$0xf]
        %v1298 = vld [vmem:[%s9 + $0x8] sm:$0xf]
        %v1299 = vld [vmem:[%s9 + $0xc] sm:$0xf]
        %v1300 = vld [vmem:[%s9 + $0x10] sm:$0xf]
        %v1301 = vld [vmem:[%s9 + $0x14] sm:$0xf]
        %v1302 = vld [vmem:[%s9 + $0x18] sm:$0xf]
        %v1303 = vld [vmem:[%s9 + $0x1c] sm:$0xf]
        %v1304 = vld [vmem:[%s9 + $0x20] sm:$0xf]
        %v1305 = vld [vmem:[%s9 + $0x24] sm:$0xf]
        %v1306 = vld [vmem:[%s9 + $0x28] sm:$0xf]
        %v1307 = vld [vmem:[%s9 + $0x2c] sm:$0xf]
        %v1308 = vld [vmem:[%s9 + $0x30] sm:$0xf]
        %v1309 = vld [vmem:[%s9 + $0x34] sm:$0xf]
        %v1310 = vld [vmem:[%s9 + $0x38] sm:$0xf]
        %v1311 = vld [vmem:[%s9 + $0x3c] sm:$0xf]
        %v1328 = vunpack.c.l.b16 %v1296
        %v1329 = vunpack.c.l.b16 %v1297
        %v1330 = vunpack.c.l.b16 %v1298
        %v1331 = vunpack.c.l.b16 %v1299
        %v1332 = vunpack.c.l.b16 %v1300
        %v1333 = vunpack.c.l.b16 %v1301
        %v1334 = vunpack.c.l.b16 %v1302
        %v1335 = vunpack.c.l.b16 %v1303
        %v1336 = vunpack.c.l.b16 %v1304
        %v1337 = vunpack.c.l.b16 %v1305
        %v1338 = vunpack.c.l.b16 %v1306
        %v1339 = vunpack.c.l.b16 %v1307
        %v1340 = vunpack.c.l.b16 %v1308
        %v1341 = vunpack.c.l.b16 %v1309
        %v1342 = vunpack.c.l.b16 %v1310
        %v1343 = vunpack.c.l.b16 %v1311
        %v1344 = vpack.c.b16 %v1329, %v1328
        %v1345 = vpack.c.b16 %v1331, %v1330
        %v1346 = vpack.c.b16 %v1333, %v1332
        %v1347 = vpack.c.b16 %v1335, %v1334
        %v1348 = vpack.c.b16 %v1337, %v1336
        %v1349 = vpack.c.b16 %v1339, %v1338
        %v1350 = vpack.c.b16 %v1341, %v1340
        %v1351 = vpack.c.b16 %v1343, %v1342
        %1360 = vmatprep.subr.bf16.mxu0 0
        %1361 = vmatpush1.bf16.msra.mxu0 %v1351
        %1362 = vmatprep.subr.bf16.mxu0 0
        %1363 = vmatpush1.bf16.msra.mxu0 %v1350
        %1364 = vmatprep.subr.bf16.mxu0 0
        %1365 = vmatpush1.bf16.msra.mxu0 %v1349
        %1366 = vmatprep.subr.bf16.mxu0 0
        %1367 = vmatpush1.bf16.msra.mxu0 %v1348
        %1368 = vmatprep.subr.bf16.mxu0 0
        %1369 = vmatpush1.bf16.msra.mxu0 %v1347
        %1370 = vmatprep.subr.bf16.mxu0 0
        %1371 = vmatpush1.bf16.msra.mxu0 %v1346
        %1372 = vmatprep.subr.bf16.mxu0 0
        %1373 = vmatpush1.bf16.msra.mxu0 %v1345
        %1374 = vmatprep.subr.bf16.mxu0 0
        %1375 = vmatpush1.bf16.msra.mxu0 %v1344
        %1376 = vmatprep.subr.bf16.mxu0 0
        %1377 = vmatpush2.bf16.msra.mxu0 0
        %1378 = vmatprep.subr.bf16.mxu0 0
        %1379 = vmatpush2.bf16.msra.mxu0 0
        %1380 = vmatprep.subr.bf16.mxu0 0
        %1381 = vmatpush2.bf16.msra.mxu0 0
        %1382 = vmatprep.subr.bf16.mxu0 0
        %1383 = vmatpush2.bf16.msra.mxu0 0
        %1384 = vmatprep.subr.bf16.mxu0 0
        %1385 = vmatpush2.bf16.msra.mxu0 0
        %1386 = vmatprep.subr.bf16.mxu0 0
        %1387 = vmatpush2.bf16.msra.mxu0 0
        %1388 = vmatprep.subr.bf16.mxu0 0
        %1389 = vmatpush2.bf16.msra.mxu0 0
        %1390 = vmatprep.subr.bf16.mxu0 0
        %1391 = vmatpush2.bf16.msra.mxu0 0
        %1392 = vmatprep.mubr.bf16.mxu0 0
        %1393 = vmatmul.mubr.bf16.gmra.mxu0 %v1295
        %v1394 = vpop.f32.mrf.mxu0
        %v1395 = vadd.f32 0.0, %v1394
        %v1396 = vpop.f32.mrf.mxu0
        %v1397 = vpop.f32.mrf.mxu0
        %v1398 = vpop.f32.mrf.mxu0
        %1399 = vdwg.mxu0
        %v1400 = vadd.f32 %v1217, %v1395
        %1401 = vst.msk [vmem:[%s426] sm:$0xff] %vm616, %v1400
        %s1402 = sand.u32 %s269, 1
        %s1403 = scalar_lea.sflag [#allocation6], %s1402
        %s1404 = sand.u32 %s269, 1
        %s1405 = smul.addr %s1404, 8
        %s1406 = scalar_lea.vmem [#allocation12], %s1405
        // Predicated region
        $region81: #{tpu_custom_call.1} parent=59 // pred_check
          %p1407 = pneg %p279
        $region82: #{tpu_custom_call.1} parent=59 // pred_check_branch
          %1409 = sbr.rel (%p1407) target = $region84
        $region83: #{tpu_custom_call.1} parent=59 // pred_region
          %s1411 = ssub.s32 128, 128
          %1412 = vsyncadd %s1403, %s1411
          %s1413 = sadd.s32 %s32, %s31
          %s1414 = smul.addr %s1413, 128
          %s1415 = scalar_lea.hbm %s10, %s1414
          %s1417 = sshll.u32 %s1406, 4
          %s1418 = int_to_ptr.vmem [resolvable:$true] %s1417
          %1420 = dma.vmem_to_hbm [thread:$0]  %s1418, 128, %s1415, %s1403
        $region84: #{tpu_custom_call.1} parent=59 // pred_fallthru
          _
      $region60: #{tpu_custom_call.1} parent=5 // pred_fallthru
        _
      %p1421 = scmp.le.s32.totalorder 2, %s22
      // Predicated region
      $region85: #{tpu_custom_call.1} parent=5 // pred_check
        %p1422 = pneg %p1421
      $region86: #{tpu_custom_call.1} parent=5 // pred_check_branch
        %1424 = sbr.rel (%p1422) target = $region88
      $region87: #{tpu_custom_call.1} parent=5 // pred_region
        %s1425 = ssub.s32 %s22, 2
        // Predicated region
        $region89: #{tpu_custom_call.1} parent=87 // pred_check
          %p1426 = pneg %p285
        $region90: #{tpu_custom_call.1} parent=87 // pred_check_branch
          %1428 = sbr.rel (%p1426) target = $region92
        $region91: #{tpu_custom_call.1} parent=87 // pred_region
          %s1429 = sand.u32 %s270, 1
          %s1430 = scalar_lea.sflag [#allocation6], %s1429
          %s1431 = sand.u32 %s270, 1
          %s1432 = smul.addr %s1431, 8
          %s1433 = scalar_lea.vmem [#allocation12], %s1432
          %1434 = dma.done %s1430, 128
        $region92: #{tpu_custom_call.1} parent=87 // pred_fallthru
          _
      $region88: #{tpu_custom_call.1} parent=5 // pred_fallthru
        _
    $region6: #{tpu_custom_call.1} parent=1 // loop_footer
      %s26 = sadd.s32 1, %s22
    $region7: #{tpu_custom_call.1} parent=1 // loop_footer_branch
      %21 = sbr.rel target = $region3
    $region8: #{tpu_custom_call.1} parent=1 // loop_exit
      _
    %1435 = vsyncpa [#allocation5], 1
    %s1436 = scalar_lea.sflag [#allocation5], 1
    %1437 = vsyncpa %s1436, 1
    %1438 = vsyncpa [#allocation8], 1
    %1439 = vsyncpa [#allocation11], 1
    %1440 = vsyncpa [#allocation6], 1
    %s1441 = scalar_lea.sflag [#allocation6], 1
    %1442 = vsyncpa %s1441, 1

// kernel: tpu_custom_call.1
$region0: #{tpu_custom_call.1}
  #allocation0 [shape = 'u32[]', space=smem, size = 0x4, offset = 0x4, fixed_abs, tag = 'smem constant byte address 0x4 - core index']
  #allocation1 [shape = 'u32[144,128]{1,0:T(1,128)}', space=vmem, size = 0x12000, scoped, tag = 'internal scratch']
  #allocation2 [shape = 'bf16[4,8,8]{2,1,0:T(8,128)(2,1)}', space=vmem, size = 0x2000, scoped, tag = 'scratch operand']
  #allocation3 [shape = 'bf16[4,8,8]{2,1,0:T(8,128)(2,1)}', space=vmem, size = 0x2000, scoped, tag = 'scratch operand']
  %s0 = inlined_call_operand.vmem [shape: f32[2,8,32], index: 0, kind: input, shape index: {}]
  %s1 = inlined_call_operand.hbm [shape: f32[1,32], index: 1, kind: input, shape index: {}]
  %s2 = inlined_call_operand.vmem [shape: bf16[32,32], index: 2, kind: input, shape index: {}]
  %s3 = inlined_call_operand.vmem [shape: bf16[32,32], index: 3, kind: input, shape index: {}]
  %s4 = inlined_call_operand.vmem [shape: bf16[32,32], index: 4, kind: input, shape index: {}]
  %s5 = inlined_call_operand.vmem [shape: bf16[32,32], index: 5, kind: input, shape index: {}]
  %s6 = inlined_call_operand.hbm [shape: bf16[4,8,8], index: 6, kind: input, shape index: {}]
  %s7 = inlined_call_operand.hbm [shape: f32[1,32], index: 7, kind: input, shape index: {}]
  %s8 = inlined_call_operand.hbm [shape: bf16[32,128], index: 8, kind: input, shape index: {}]
  %s9 = inlined_call_operand.vmem [shape: bf16[128,32], index: 9, kind: input, shape index: {}]
  %s10 = inlined_call_operand.hbm [shape: f32[2,8,32], index: 10, kind: output, shape index: {}]
  %s11 = sld [smem:[#allocation0]]
  $region93: #{tpu_custom_call.1} parent=0
    _
  %s13 = ssub.s32 1, %s11
  %s14 = scalar_select 0, %s13, %s11
  $region1: #{tpu_custom_call.1} parent=0
    #allocation4 [shape = 'u8[512]{0}', space=vmem, size = 0x400, scoped, tag = 'input window, operand 1, single buffered']
    #allocation5 [shape = 's32[2]{0}', space=sflag, size = 0x8, scoped, tag = 'scoped memory for tpu_custom_call.1']
    #allocation6 [shape = 's32[2]{0}', space=sflag, size = 0x8, scoped, tag = 'scoped memory for tpu_custom_call.1']
    #allocation7 [shape = 'u8[8192]{0}', space=vmem, size = 0x2000, scoped, tag = 'input window, operand 6, single buffered']
    #allocation8 [shape = 's32[1]{0}', space=sflag, size = 0x4, scoped, tag = 'scoped memory for tpu_custom_call.1']
    #allocation9 [shape = 'u8[512]{0}', space=vmem, size = 0x400, scoped, tag = 'input window, operand 7, single buffered']
    #allocation10 [shape = 'u8[8192]{0}', space=vmem, size = 0x2000, scoped, tag = 'input window, operand 8, single buffered']
    #allocation11 [shape = 's32[1]{0}', space=sflag, size = 0x4, scoped, tag = 'scoped memory for tpu_custom_call.1']
    #allocation12 [shape = 'u8[8192]{0}', space=vmem, size = 0x2000, scoped, tag = 'output window, operand 0']
    %15 = vsyncpa [#allocation5], 0
    %16 = vsyncpa [#allocation8], 0
    %17 = vsyncpa [#allocation11], 0
    %18 = vsyncpa [#allocation6], 0
    %s19 = scalar_lea.sflag [#allocation6], 1
    %20 = vsyncpa %s19, 0
    loop: start=0, step=1, limit=4
    $region2: #{tpu_custom_call.1} parent=1 // loop_pre_header
      _
    $region3: #{tpu_custom_call.1} parent=1 // loop_header
      %s22 = sphi 0, %s26
      %p23 = scmp.ge.s32.totalorder %s22, 4
      %s29 = sphi 0, %s41
      %s30 = sphi 0, %s37
      %s31 = sphi 0, %s29
      %s32 = sphi 0, %s30
      %s33 = sphi 0, %s31
      %s34 = sphi 0, %s32
      %s44 = sphi 0, %s46
      %s47 = sphi 0, %s44
      %s48 = sphi 0, %s47
      %s64 = sphi 0, %s48
      %s68 = sphi 0, %s68
      %s70 = sphi 0, %s68
      %s71 = sphi 0, %s70
      %s85 = sphi 0, %s71
      %s89 = sphi 0, %s89
      %s91 = sphi 0, %s89
      %s92 = sphi 0, %s91
      %s106 = sphi 0, %s92
      %s110 = sphi 0, %s110
      %s112 = sphi 0, %s110
      %s113 = sphi 0, %s112
      %s127 = sphi 0, %s113
      %s131 = sphi 0, %s131
      %s133 = sphi 0, %s131
      %s134 = sphi 0, %s133
      %s148 = sphi 0, %s134
      %s152 = sphi 0, %s152
      %s154 = sphi 0, %s152
      %s155 = sphi 0, %s154
      %s169 = sphi 0, %s155
      %s175 = sphi 0, %s177
      %s178 = sphi 0, %s175
      %s179 = sphi 0, %s178
      %s195 = sphi 0, %s179
      %s199 = sphi 0, %s199
      %s201 = sphi 0, %s199
      %s202 = sphi 0, %s201
      %s216 = sphi 0, %s202
      %s220 = sphi 0, %s220
      %s222 = sphi 0, %s220
      %s223 = sphi 0, %s222
      %s237 = sphi 0, %s223
      %s241 = sphi 0, %s241
      %s243 = sphi 0, %s241
      %s244 = sphi 0, %s243
      %s258 = sphi 0, %s244
      %s266 = sphi 0, %s268
      %s269 = sphi 0, %s266
      %s270 = sphi 0, %s269
      %s286 = sphi 0, %s270
    $region4: #{tpu_custom_call.1} parent=1 // loop_header_branch
      %25 = sbr.rel (%p23) target = $region8
    $region5: #{tpu_custom_call.1} parent=1 // loop_body
      %s27 = ssub.s32 %s22, 1
      %s28 = ssub.s32 %s22, 2
      %s35 = sadd.s32 1, %s30
      %p36 = scmp.ge.s32.totalorder %s35, 1
      %s37 = scalar_select %p36, 0, %s35
      %s38 = sadd.s32 1, %s29
      %s39 = scalar_select %p36, %s38, %s29
      %p40 = scmp.ge.s32.totalorder %s39, 2
      %s41 = scalar_select %p40, 0, %s39
      %s42 = ssub.s32 %s29, %s41
      %p43 = scmp.eq.s32.totalorder %s42, 0
      %s45 = sadd.s32 %s44, 1
      %s46 = scalar_select %p43, %s44, %s45
      %p49 = pneg %p43
      %p50 = scmp.eq.s32.totalorder %s22, 1
      %p51 = por %p49, %p50
      %p52 = scmp.ne.s32.totalorder %s44, %s47
      %p53 = scmp.eq.s32.totalorder %s22, 0
      %p54 = por %p52, %p53
      %p55 = scmp.ne.s32.totalorder %s44, %s47
      %p56 = scmp.eq.s32.totalorder %s27, 1
      %p57 = por %p55, %p56
      %p58 = scmp.ne.s32.totalorder %s47, %s48
      %p59 = scmp.eq.s32.totalorder %s27, 0
      %p60 = por %p58, %p59
      %p61 = scmp.ne.s32.totalorder %s47, %s48
      %p62 = scmp.eq.s32.totalorder %s28, 1
      %p63 = por %p61, %p62
      %p65 = scmp.ne.s32.totalorder %s48, %s64
      %p66 = scmp.eq.s32.totalorder %s28, 0
      %p67 = por %p65, %p66
      %s69 = sadd.s32 %s68, 1
      %p72 = scmp.eq.s32.totalorder %s22, 1
      %p73 = scmp.ne.s32.totalorder %s68, %s70
      %p74 = scmp.eq.s32.totalorder %s22, 0
      %p75 = por %p73, %p74
      %p76 = scmp.ne.s32.totalorder %s68, %s70
      %p77 = scmp.eq.s32.totalorder %s27, 1
      %p78 = por %p76, %p77
      %p79 = scmp.ne.s32.totalorder %s70, %s71
      %p80 = scmp.eq.s32.totalorder %s27, 0
      %p81 = por %p79, %p80
      %p82 = scmp.ne.s32.totalorder %s70, %s71
      %p83 = scmp.eq.s32.totalorder %s28, 1
      %p84 = por %p82, %p83
      %p86 = scmp.ne.s32.totalorder %s71, %s85
      %p87 = scmp.eq.s32.totalorder %s28, 0
      %p88 = por %p86, %p87
      %s90 = sadd.s32 %s89, 1
      %p93 = scmp.eq.s32.totalorder %s22, 1
      %p94 = scmp.ne.s32.totalorder %s89, %s91
      %p95 = scmp.eq.s32.totalorder %s22, 0
      %p96 = por %p94, %p95
      %p97 = scmp.ne.s32.totalorder %s89, %s91
      %p98 = scmp.eq.s32.totalorder %s27, 1
      %p99 = por %p97, %p98
      %p100 = scmp.ne.s32.totalorder %s91, %s92
      %p101 = scmp.eq.s32.totalorder %s27, 0
      %p102 = por %p100, %p101
      %p103 = scmp.ne.s32.totalorder %s91, %s92
      %p104 = scmp.eq.s32.totalorder %s28, 1
      %p105 = por %p103, %p104
      %p107 = scmp.ne.s32.totalorder %s92, %s106
      %p108 = scmp.eq.s32.totalorder %s28, 0
      %p109 = por %p107, %p108
      %s111 = sadd.s32 %s110, 1
      %p114 = scmp.eq.s32.totalorder %s22, 1
      %p115 = scmp.ne.s32.totalorder %s110, %s112
      %p116 = scmp.eq.s32.totalorder %s22, 0
      %p117 = por %p115, %p116
      %p118 = scmp.ne.s32.totalorder %s110, %s112
      %p119 = scmp.eq.s32.totalorder %s27, 1
      %p120 = por %p118, %p119
      %p121 = scmp.ne.s32.totalorder %s112, %s113
      %p122 = scmp.eq.s32.totalorder %s27, 0
      %p123 = por %p121, %p122
      %p124 = scmp.ne.s32.totalorder %s112, %s113
      %p125 = scmp.eq.s32.totalorder %s28, 1
      %p126 = por %p124, %p125
      %p128 = scmp.ne.s32.totalorder %s113, %s127
      %p129 = scmp.eq.s32.totalorder %s28, 0
      %p130 = por %p128, %p129
      %s132 = sadd.s32 %s131, 1
      %p135 = scmp.eq.s32.totalorder %s22, 1
      %p136 = scmp.ne.s32.totalorder %s131, %s133
      %p137 = scmp.eq.s32.totalorder %s22, 0
      %p138 = por %p136, %p137
      %p139 = scmp.ne.s32.totalorder %s131, %s133
      %p140 = scmp.eq.s32.totalorder %s27, 1
      %p141 = por %p139, %p140
      %p142 = scmp.ne.s32.totalorder %s133, %s134
      %p143 = scmp.eq.s32.totalorder %s27, 0
      %p144 = por %p142, %p143
      %p145 = scmp.ne.s32.totalorder %s133, %s134
      %p146 = scmp.eq.s32.totalorder %s28, 1
      %p147 = por %p145, %p146
      %p149 = scmp.ne.s32.totalorder %s134, %s148
      %p150 = scmp.eq.s32.totalorder %s28, 0
      %p151 = por %p149, %p150
      %s153 = sadd.s32 %s152, 1
      %p156 = scmp.eq.s32.totalorder %s22, 1
      %p157 = scmp.ne.s32.totalorder %s152, %s154
      %p158 = scmp.eq.s32.totalorder %s22, 0
      %p159 = por %p157, %p158
      %p160 = scmp.ne.s32.totalorder %s152, %s154
      %p161 = scmp.eq.s32.totalorder %s27, 1
      %p162 = por %p160, %p161
      %p163 = scmp.ne.s32.totalorder %s154, %s155
      %p164 = scmp.eq.s32.totalorder %s27, 0
      %p165 = por %p163, %p164
      %p166 = scmp.ne.s32.totalorder %s154, %s155
      %p167 = scmp.eq.s32.totalorder %s28, 1
      %p168 = por %p166, %p167
      %p170 = scmp.ne.s32.totalorder %s155, %s169
      %p171 = scmp.eq.s32.totalorder %s28, 0
      %p172 = por %p170, %p171
      %s173 = ssub.s32 %s30, %s37
      %p174 = scmp.eq.s32.totalorder %s173, 0
      %s176 = sadd.s32 %s175, 1
      %s177 = scalar_select %p174, %s175, %s176
      %p180 = pneg %p174
      %p181 = scmp.eq.s32.totalorder %s22, 1
      %p182 = por %p180, %p181
      %p183 = scmp.ne.s32.totalorder %s175, %s178
      %p184 = scmp.eq.s32.totalorder %s22, 0
      %p185 = por %p183, %p184
      %p186 = scmp.ne.s32.totalorder %s175, %s178
      %p187 = scmp.eq.s32.totalorder %s27, 1
      %p188 = por %p186, %p187
      %p189 = scmp.ne.s32.totalorder %s178, %s179
      %p190 = scmp.eq.s32.totalorder %s27, 0
      %p191 = por %p189, %p190
      %p192 = scmp.ne.s32.totalorder %s178, %s179
      %p193 = scmp.eq.s32.totalorder %s28, 1
      %p194 = por %p192, %p193
      %p196 = scmp.ne.s32.totalorder %s179, %s195
      %p197 = scmp.eq.s32.totalorder %s28, 0
      %p198 = por %p196, %p197
      %s200 = sadd.s32 %s199, 1
      %p203 = scmp.eq.s32.totalorder %s22, 1
      %p204 = scmp.ne.s32.totalorder %s199, %s201
      %p205 = scmp.eq.s32.totalorder %s22, 0
      %p206 = por %p204, %p205
      %p207 = scmp.ne.s32.totalorder %s199, %s201
      %p208 = scmp.eq.s32.totalorder %s27, 1
      %p209 = por %p207, %p208
      %p210 = scmp.ne.s32.totalorder %s201, %s202
      %p211 = scmp.eq.s32.totalorder %s27, 0
      %p212 = por %p210, %p211
      %p213 = scmp.ne.s32.totalorder %s201, %s202
      %p214 = scmp.eq.s32.totalorder %s28, 1
      %p215 = por %p213, %p214
      %p217 = scmp.ne.s32.totalorder %s202, %s216
      %p218 = scmp.eq.s32.totalorder %s28, 0
      %p219 = por %p217, %p218
      %s221 = sadd.s32 %s220, 1
      %p224 = scmp.eq.s32.totalorder %s22, 1
      %p225 = scmp.ne.s32.totalorder %s220, %s222
      %p226 = scmp.eq.s32.totalorder %s22, 0
      %p227 = por %p225, %p226
      %p228 = scmp.ne.s32.totalorder %s220, %s222
      %p229 = scmp.eq.s32.totalorder %s27, 1
      %p230 = por %p228, %p229
      %p231 = scmp.ne.s32.totalorder %s222, %s223
      %p232 = scmp.eq.s32.totalorder %s27, 0
      %p233 = por %p231, %p232
      %p234 = scmp.ne.s32.totalorder %s222, %s223
      %p235 = scmp.eq.s32.totalorder %s28, 1
      %p236 = por %p234, %p235
      %p238 = scmp.ne.s32.totalorder %s223, %s237
      %p239 = scmp.eq.s32.totalorder %s28, 0
      %p240 = por %p238, %p239
      %s242 = sadd.s32 %s241, 1
      %p245 = scmp.eq.s32.totalorder %s22, 1
      %p246 = scmp.ne.s32.totalorder %s241, %s243
      %p247 = scmp.eq.s32.totalorder %s22, 0
      %p248 = por %p246, %p247
      %p249 = scmp.ne.s32.totalorder %s241, %s243
      %p250 = scmp.eq.s32.totalorder %s27, 1
      %p251 = por %p249, %p250
      %p252 = scmp.ne.s32.totalorder %s243, %s244
      %p253 = scmp.eq.s32.totalorder %s27, 0
      %p254 = por %p252, %p253
      %p255 = scmp.ne.s32.totalorder %s243, %s244
      %p256 = scmp.eq.s32.totalorder %s28, 1
      %p257 = por %p255, %p256
      %p259 = scmp.ne.s32.totalorder %s244, %s258
      %p260 = scmp.eq.s32.totalorder %s28, 0
      %p261 = por %p259, %p260
      %s262 = ssub.s32 %s29, %s41
      %s263 = ssub.s32 %s30, %s37
      %s264 = sor.u32 %s262, %s263
      %p265 = scmp.eq.s32.totalorder %s264, 0
      %s267 = sadd.s32 %s266, 1
      %s268 = scalar_select %p265, %s266, %s267
      %p271 = pneg %p265
      %p272 = scmp.eq.s32.totalorder %s22, 1
      %p273 = por %p271, %p272
      %p274 = scmp.ne.s32.totalorder %s266, %s269
      %p275 = scmp.eq.s32.totalorder %s22, 0
      %p276 = por %p274, %p275
      %p277 = scmp.ne.s32.totalorder %s266, %s269
      %p278 = scmp.eq.s32.totalorder %s27, 1
      %p279 = por %p277, %p278
      %p280 = scmp.ne.s32.totalorder %s269, %s270
      %p281 = scmp.eq.s32.totalorder %s27, 0
      %p282 = por %p280, %p281
      %p283 = scmp.ne.s32.totalorder %s269, %s270
      %p284 = scmp.eq.s32.totalorder %s28, 1
      %p285 = por %p283, %p284
      %p287 = scmp.ne.s32.totalorder %s270, %s286
      %p288 = scmp.eq.s32.totalorder %s28, 0
      %p289 = por %p287, %p288
      %p290 = scmp.le.s32.totalorder 1, %s22
      %p291 = scmp.lt.s32.totalorder %s22, 3
      %p292 = pnand %p290, %p291
      %p293 = pneg %p292
      // Predicated region
      $region9: #{tpu_custom_call.1} parent=5 // pred_check
        _
      $region10: #{tpu_custom_call.1} parent=5 // pred_check_branch
        %295 = sbr.rel (%p292) target = $region12
      $region11: #{tpu_custom_call.1} parent=5 // pred_region
        %s296 = ssub.s32 %s22, 1
        // Predicated region
        $region13: #{tpu_custom_call.1} parent=11 // pred_check
          %p297 = pneg %p81
        $region14: #{tpu_custom_call.1} parent=11 // pred_check_branch
          %299 = sbr.rel (%p297) target = $region16
        $region15: #{tpu_custom_call.1} parent=11 // pred_region
          %s301 = ssub.s32 16, 16
          %302 = vsyncadd [#allocation5], %s301
          %s304 = sshll.u32 [#allocation4], 4
          %s305 = int_to_ptr.vmem [resolvable:$true] %s304
          %307 = dma.hbm_to_vmem [thread:$0]  %s1, 16, %s305, [#allocation5]
        $region16: #{tpu_custom_call.1} parent=11 // pred_fallthru
          _
        // Predicated region
        $region17: #{tpu_custom_call.1} parent=11 // pred_check
          %p308 = pneg %p102
        $region18: #{tpu_custom_call.1} parent=11 // pred_check_branch
          %310 = sbr.rel (%p308) target = $region20
        $region19: #{tpu_custom_call.1} parent=11 // pred_region
          _
        $region20: #{tpu_custom_call.1} parent=11 // pred_fallthru
          _
        // Predicated region
        $region21: #{tpu_custom_call.1} parent=11 // pred_check
          %p311 = pneg %p123
        $region22: #{tpu_custom_call.1} parent=11 // pred_check_branch
          %313 = sbr.rel (%p311) target = $region24
        $region23: #{tpu_custom_call.1} parent=11 // pred_region
          _
        $region24: #{tpu_custom_call.1} parent=11 // pred_fallthru
          _
        // Predicated region
        $region25: #{tpu_custom_call.1} parent=11 // pred_check
          %p314 = pneg %p144
        $region26: #{tpu_custom_call.1} parent=11 // pred_check_branch
          %316 = sbr.rel (%p314) target = $region28
        $region27: #{tpu_custom_call.1} parent=11 // pred_region
          _
        $region28: #{tpu_custom_call.1} parent=11 // pred_fallthru
          _
        // Predicated region
        $region29: #{tpu_custom_call.1} parent=11 // pred_check
          %p317 = pneg %p165
        $region30: #{tpu_custom_call.1} parent=11 // pred_check_branch
          %319 = sbr.rel (%p317) target = $region32
        $region31: #{tpu_custom_call.1} parent=11 // pred_region
          _
        $region32: #{tpu_custom_call.1} parent=11 // pred_fallthru
          _
        // Predicated region
        $region33: #{tpu_custom_call.1} parent=11 // pred_check
          %p320 = pneg %p191
        $region34: #{tpu_custom_call.1} parent=11 // pred_check_branch
          %322 = sbr.rel (%p320) target = $region36
        $region35: #{tpu_custom_call.1} parent=11 // pred_region
          %s324 = ssub.s32 256, 256
          %325 = vsyncadd [#allocation8], %s324
          %s326 = smul.addr %s32, 64
          %s327 = scalar_lea.hbm %s6, %s326
          %s328 = sshll.u32 [#allocation7], 4
          %s329 = int_to_ptr.vmem [resolvable:$true] %s328
          %334 = dma.hbm_to_vmem [thread:$0]  %s327, 256, %s329, [#allocation8], 64, 64, 4
        $region36: #{tpu_custom_call.1} parent=11 // pred_fallthru
          _
        // Predicated region
        $region37: #{tpu_custom_call.1} parent=11 // pred_check
          %p335 = pneg %p212
        $region38: #{tpu_custom_call.1} parent=11 // pred_check_branch
          %337 = sbr.rel (%p335) target = $region40
        $region39: #{tpu_custom_call.1} parent=11 // pred_region
          %s339 = ssub.s32 16, 16
          %340 = vsyncadd [#allocation8], %s339
          %s342 = sshll.u32 [#allocation9], 4
          %s343 = int_to_ptr.vmem [resolvable:$true] %s342
          %345 = dma.hbm_to_vmem [thread:$0]  %s7, 16, %s343, [#allocation8]
        $region40: #{tpu_custom_call.1} parent=11 // pred_fallthru
          _
        // Predicated region
        $region41: #{tpu_custom_call.1} parent=11 // pred_check
          %p346 = pneg %p233
        $region42: #{tpu_custom_call.1} parent=11 // pred_check_branch
          %348 = sbr.rel (%p346) target = $region44
        $region43: #{tpu_custom_call.1} parent=11 // pred_region
          %s350 = ssub.s32 256, 256
          %351 = vsyncadd [#allocation11], %s350
          %s352 = sshll.u32 [#allocation10], 4
          %s353 = int_to_ptr.vmem [resolvable:$true] %s352
          %358 = dma.hbm_to_vmem [thread:$0]  %s8, 256, %s353, [#allocation11], 64, 64, 4
        $region44: #{tpu_custom_call.1} parent=11 // pred_fallthru
          _
        // Predicated region
        $region45: #{tpu_custom_call.1} parent=11 // pred_check
          %p359 = pneg %p254
        $region46: #{tpu_custom_call.1} parent=11 // pred_check_branch
          %361 = sbr.rel (%p359) target = $region48
        $region47: #{tpu_custom_call.1} parent=11 // pred_region
          _
        $region48: #{tpu_custom_call.1} parent=11 // pred_fallthru
          _
      $region12: #{tpu_custom_call.1} parent=5 // pred_fallthru
        _
      %p362 = scmp.lt.s32.totalorder %s22, 2
      // Predicated region
      $region49: #{tpu_custom_call.1} parent=5 // pred_check
        %p363 = pneg %p362
      $region50: #{tpu_custom_call.1} parent=5 // pred_check_branch
        %365 = sbr.rel (%p363) target = $region52
      $region51: #{tpu_custom_call.1} parent=5 // pred_region
        // Predicated region
        $region53: #{tpu_custom_call.1} parent=51 // pred_check
          %p366 = pneg %p54
        $region54: #{tpu_custom_call.1} parent=51 // pred_check_branch
          %368 = sbr.rel (%p366) target = $region56
        $region55: #{tpu_custom_call.1} parent=51 // pred_region
          %p369 = scmp.lt.s32.totalorder %s29, 1
          %s370 = scalar_select %p369, %s29, 1
          %s371 = smul.addr %s370, 8
          %s372 = scalar_lea.vmem %s0, %s371
        $region56: #{tpu_custom_call.1} parent=51 // pred_fallthru
          _
      $region52: #{tpu_custom_call.1} parent=5 // pred_fallthru
        _
      %p373 = scmp.le.s32.totalorder 1, %s22
      %p374 = scmp.lt.s32.totalorder %s22, 3
      %p375 = pnand %p373, %p374
      %p376 = pneg %p375
      // Predicated region
      $region57: #{tpu_custom_call.1} parent=5 // pred_check
        _
      $region58: #{tpu_custom_call.1} parent=5 // pred_check_branch
        %378 = sbr.rel (%p375) target = $region60
      $region59: #{tpu_custom_call.1} parent=5 // pred_region
        %s379 = ssub.s32 %s22, 1
        // Predicated region
        $region61: #{tpu_custom_call.1} parent=59 // pred_check
          %p380 = pneg %p81
        $region62: #{tpu_custom_call.1} parent=59 // pred_check_branch
          %382 = sbr.rel (%p380) target = $region64
        $region63: #{tpu_custom_call.1} parent=59 // pred_region
          %383 = dma.done [#allocation5], 16
        $region64: #{tpu_custom_call.1} parent=59 // pred_fallthru
          _
        // Predicated region
        $region65: #{tpu_custom_call.1} parent=59 // pred_check
          %p384 = pneg %p191
        $region66: #{tpu_custom_call.1} parent=59 // pred_check_branch
          %386 = sbr.rel (%p384) target = $region68
        $region67: #{tpu_custom_call.1} parent=59 // pred_region
          %387 = dma.done [#allocation8], 256
        $region68: #{tpu_custom_call.1} parent=59 // pred_fallthru
          _
        // Predicated region
        $region69: #{tpu_custom_call.1} parent=59 // pred_check
          %p388 = pneg %p212
        $region70: #{tpu_custom_call.1} parent=59 // pred_check_branch
          %390 = sbr.rel (%p388) target = $region72
        $region71: #{tpu_custom_call.1} parent=59 // pred_region
          %391 = dma.done [#allocation8], 16
        $region72: #{tpu_custom_call.1} parent=59 // pred_fallthru
          _
        // Predicated region
        $region73: #{tpu_custom_call.1} parent=59 // pred_check
          %p392 = pneg %p233
        $region74: #{tpu_custom_call.1} parent=59 // pred_check_branch
          %394 = sbr.rel (%p392) target = $region76
        $region75: #{tpu_custom_call.1} parent=59 // pred_region
          %395 = dma.done [#allocation11], 256
        $region76: #{tpu_custom_call.1} parent=59 // pred_fallthru
          _
        %p396 = scmp.lt.s32.totalorder %s31, 1
        %s397 = scalar_select %p396, %s31, 1
        %s398 = smul.addr %s397, 8
        %s399 = scalar_lea.vmem %s0, %s398
        %p400 = pneg %p60
        %p401 = pneg %p57
        %p402 = pneg %p81
        %p403 = pneg %p78
        %p404 = pneg %p102
        %p405 = pneg %p99
        %p406 = pneg %p123
        %p407 = pneg %p120
        %p408 = pneg %p144
        %p409 = pneg %p141
        %p410 = pneg %p165
        %p411 = pneg %p162
        %p412 = pneg %p191
        %p413 = pneg %p188
        %p414 = pneg %p212
        %p415 = pneg %p209
        %p416 = pneg %p233
        %p417 = pneg %p230
        %p418 = pneg %p254
        %p419 = pneg %p251
        %p420 = pneg %p282
        %p421 = pneg %p279
        %s422 = sand.u32 %s269, 1
        %s423 = scalar_lea.sflag [#allocation6], %s422
        %s424 = sand.u32 %s269, 1
        %s425 = smul.addr %s424, 8
        %s426 = scalar_lea.vmem [#allocation12], %s425
        %p427 = scmp.lt.s32.totalorder %s31, 1
        %s428 = scalar_select %p427, %s31, 1
        %s429 = smul.addr %s428, 8
        %s430 = scalar_lea.vmem %s0, %s429
        %v432 = vld [vmem:[#allocation4] sm:$0x1]
        %p433 = scmp.eq.s32.totalorder %s32, 0
        // Predicated region
        $region77: #{tpu_custom_call.1} parent=59 // pred_check
          %p434 = pneg %p433
        $region78: #{tpu_custom_call.1} parent=59 // pred_check_branch
          %436 = sbr.rel (%p434) target = $region80
        $region79: #{tpu_custom_call.1} parent=59 // pred_region
          %v437 = vld [vmem:[%s430] sm:$0xff]
          %v438 = vmul.f32 %v437, %v437
          %vm439 = vcmask 261120
          %v440 = vsel %vm439, %v438, 0.0
          %441 = vadd.xlane.f32.xlu0 %v440
          %v442 = vpop.xlane.xlu0 %441
          %v443 = vrcp.pop 32.0
          %v444 = vmul.f32 %v442, %v443
          %v445 = vadd.f32 %v444, 1e-06
          %v446 = vrsqrt.pop %v445
          %v447 = vmul.f32 %v437, %v446
          %v449 = vlaneseq
          %v450 = vshrl.u32 %v449, 7
          %v451 = vsub.s32 0, %v450
          %v452 = vrot.slane %v432, %v451
          %v454 = vmul.f32 %v452, %v447
          %v455 = vpack.c.bf16 %v454, %v454
          %v456 = vld [vmem:[%s3] sm:$0xf]
          %v457 = vld [vmem:[%s3 + $0x4] sm:$0xf]
          %v458 = vld [vmem:[%s3 + $0x8] sm:$0xf]
          %v459 = vld [vmem:[%s3 + $0xc] sm:$0xf]
          %v464 = vunpack.c.l.b16 %v456
          %v465 = vunpack.c.l.b16 %v457
          %v466 = vunpack.c.l.b16 %v458
          %v467 = vunpack.c.l.b16 %v459
          %v468 = vpack.c.b16 %v465, %v464
          %v469 = vpack.c.b16 %v467, %v466
          %v473 = vsel %vm439, %v455, 0
          %475 = vmatprep.subr.bf16.mxu0 0
          %476 = vmatpush1.bf16.msra.mxu0 0
          %477 = vmatprep.subr.bf16.mxu0 0
          %478 = vmatpush1.bf16.msra.mxu0 0
          %479 = vmatprep.subr.bf16.mxu0 0
          %480 = vmatpush1.bf16.msra.mxu0 0
          %481 = vmatprep.subr.bf16.mxu0 0
          %482 = vmatpush1.bf16.msra.mxu0 0
          %483 = vmatprep.subr.bf16.mxu0 0
          %484 = vmatpush1.bf16.msra.mxu0 0
          %485 = vmatprep.subr.bf16.mxu0 0
          %486 = vmatpush1.bf16.msra.mxu0 0
          %487 = vmatprep.subr.bf16.mxu0 0
          %488 = vmatpush1.bf16.msra.mxu0 %v469
          %489 = vmatprep.subr.bf16.mxu0 0
          %490 = vmatpush1.bf16.msra.mxu0 %v468
          %491 = vmatprep.subr.bf16.mxu0 0
          %492 = vmatpush2.bf16.msra.mxu0 0
          %493 = vmatprep.subr.bf16.mxu0 0
          %494 = vmatpush2.bf16.msra.mxu0 0
          %495 = vmatprep.subr.bf16.mxu0 0
          %496 = vmatpush2.bf16.msra.mxu0 0
          %497 = vmatprep.subr.bf16.mxu0 0
          %498 = vmatpush2.bf16.msra.mxu0 0
          %499 = vmatprep.subr.bf16.mxu0 0
          %500 = vmatpush2.bf16.msra.mxu0 0
          %501 = vmatprep.subr.bf16.mxu0 0
          %502 = vmatpush2.bf16.msra.mxu0 0
          %503 = vmatprep.subr.bf16.mxu0 0
          %504 = vmatpush2.bf16.msra.mxu0 0
          %505 = vmatprep.subr.bf16.mxu0 0
          %506 = vmatpush2.bf16.msra.mxu0 0
          %507 = vmatprep.mubr.bf16.mxu0 0
          %508 = vmatmul.mubr.bf16.gmra.mxu0 %v473
          %v509 = vpop.f32.mrf.mxu0
          %v510 = vadd.f32 0.0, %v509
          %v511 = vpop.f32.mrf.mxu0
          %v512 = vpop.f32.mrf.mxu0
          %v513 = vpop.f32.mrf.mxu0
          %514 = vdwg.mxu0
          %v515 = vld [vmem:[%s4] sm:$0xf]
          %v516 = vld [vmem:[%s4 + $0x4] sm:$0xf]
          %v517 = vld [vmem:[%s4 + $0x8] sm:$0xf]
          %v518 = vld [vmem:[%s4 + $0xc] sm:$0xf]
          %v523 = vunpack.c.l.b16 %v515
          %v524 = vunpack.c.l.b16 %v516
          %v525 = vunpack.c.l.b16 %v517
          %v526 = vunpack.c.l.b16 %v518
          %v527 = vpack.c.b16 %v524, %v523
          %v528 = vpack.c.b16 %v526, %v525
          %531 = vmatprep.subr.bf16.mxu0 0
          %532 = vmatpush1.bf16.msra.mxu0 0
          %533 = vmatprep.subr.bf16.mxu0 0
          %534 = vmatpush1.bf16.msra.mxu0 0
          %535 = vmatprep.subr.bf16.mxu0 0
          %536 = vmatpush1.bf16.msra.mxu0 0
          %537 = vmatprep.subr.bf16.mxu0 0
          %538 = vmatpush1.bf16.msra.mxu0 0
          %539 = vmatprep.subr.bf16.mxu0 0
          %540 = vmatpush1.bf16.msra.mxu0 0
          %541 = vmatprep.subr.bf16.mxu0 0
          %542 = vmatpush1.bf16.msra.mxu0 0
          %543 = vmatprep.subr.bf16.mxu0 0
          %544 = vmatpush1.bf16.msra.mxu0 %v528
          %545 = vmatprep.subr.bf16.mxu0 0
          %546 = vmatpush1.bf16.msra.mxu0 %v527
          %547 = vmatprep.subr.bf16.mxu0 0
          %548 = vmatpush2.bf16.msra.mxu0 0
          %549 = vmatprep.subr.bf16.mxu0 0
          %550 = vmatpush2.bf16.msra.mxu0 0
          %551 = vmatprep.subr.bf16.mxu0 0
          %552 = vmatpush2.bf16.msra.mxu0 0
          %553 = vmatprep.subr.bf16.mxu0 0
          %554 = vmatpush2.bf16.msra.mxu0 0
          %555 = vmatprep.subr.bf16.mxu0 0
          %556 = vmatpush2.bf16.msra.mxu0 0
          %557 = vmatprep.subr.bf16.mxu0 0
          %558 = vmatpush2.bf16.msra.mxu0 0
          %559 = vmatprep.subr.bf16.mxu0 0
          %560 = vmatpush2.bf16.msra.mxu0 0
          %561 = vmatprep.subr.bf16.mxu0 0
          %562 = vmatpush2.bf16.msra.mxu0 0
          %563 = vmatprep.mubr.bf16.mxu0 0
          %564 = vmatmul.mubr.bf16.gmra.mxu0 %v473
          %v565 = vpop.f32.mrf.mxu0
          %v566 = vadd.f32 0.0, %v565
          %v567 = vpop.f32.mrf.mxu0
          %v568 = vpop.f32.mrf.mxu0
          %v569 = vpop.f32.mrf.mxu0
          %570 = vdwg.mxu0
          %v571 = vpack.c.bf16 %v510, %v510
          %vm572 = vcmask 60416
          %573 = vst.msk [vmem:[#allocation2] sm:$0xf] %vm572, %v571
          %v574 = vpack.c.bf16 %v566, %v566
          %575 = vst.msk [vmem:[#allocation3] sm:$0xf] %vm572, %v574
          %v577 = vunpack.c.l.b16 %v571
          %v578 = vpack.c.b16 %v577, %v577
          %579 = vrot.lane.b32.xlu0 %v578, 120
          %v580 = vpop.permute.xlu0 %579
          %s582 = scalar_lea.vmem [#allocation2], 4
          %583 = vst.msk [vmem:[%s582] sm:$0xf] %vm572, %v580
          %v585 = vunpack.c.l.b16 %v574
          %v586 = vpack.c.b16 %v585, %v585
          %587 = vrot.lane.b32.xlu0 %v586, 120
          %v588 = vpop.permute.xlu0 %587
          %s590 = scalar_lea.vmem [#allocation3], 4
          %591 = vst.msk [vmem:[%s590] sm:$0xf] %vm572, %v588
          %592 = vrot.lane.b32.xlu0 %v578, 112
          %v593 = vpop.permute.xlu0 %592
          %s595 = scalar_lea.vmem [#allocation2], 8
          %596 = vst.msk [vmem:[%s595] sm:$0xf] %vm572, %v593
          %597 = vrot.lane.b32.xlu0 %v586, 112
          %v598 = vpop.permute.xlu0 %597
          %s600 = scalar_lea.vmem [#allocation3], 8
          %601 = vst.msk [vmem:[%s600] sm:$0xf] %vm572, %v598
          %602 = vrot.lane.b32.xlu0 %v578, 104
          %v603 = vpop.permute.xlu0 %602
          %s605 = scalar_lea.vmem [#allocation2], 12
          %606 = vst.msk [vmem:[%s605] sm:$0xf] %vm572, %v603
          %607 = vrot.lane.b32.xlu0 %v586, 104
          %v608 = vpop.permute.xlu0 %607
          %s610 = scalar_lea.vmem [#allocation3], 12
          %611 = vst.msk [vmem:[%s610] sm:$0xf] %vm572, %v608
        $region80: #{tpu_custom_call.1} parent=59 // pred_fallthru
          _
        %s612 = smul.u32 %s32, 8
        %s613 = scalar_lea.vmem %s430, %s612
        %v614 = vld [vmem:[%s613] sm:$0xff]
        %v615 = vmul.f32 %v614, %v614
        %vm616 = vcmask 261120
        %v617 = vsel %vm616, %v615, 0.0
        %618 = vadd.xlane.f32.xlu0 %v617
        %v619 = vpop.xlane.xlu0 %618
        %v620 = vrcp.pop 32.0
        %v621 = vmul.f32 %v619, %v620
        %v622 = vadd.f32 %v621, 1e-06
        %v623 = vrsqrt.pop %v622
        %v624 = vmul.f32 %v614, %v623
        %v626 = vlaneseq
        %v627 = vshrl.u32 %v626, 7
        %v628 = vsub.s32 0, %v627
        %v629 = vrot.slane %v432, %v628
        %v631 = vmul.f32 %v629, %v624
        %v632 = vpack.c.bf16 %v631, %v631
        %v633 = vld [vmem:[%s2] sm:$0xf]
        %v634 = vld [vmem:[%s2 + $0x4] sm:$0xf]
        %v635 = vld [vmem:[%s2 + $0x8] sm:$0xf]
        %v636 = vld [vmem:[%s2 + $0xc] sm:$0xf]
        %v641 = vunpack.c.l.b16 %v633
        %v642 = vunpack.c.l.b16 %v634
        %v643 = vunpack.c.l.b16 %v635
        %v644 = vunpack.c.l.b16 %v636
        %v645 = vpack.c.b16 %v642, %v641
        %v646 = vpack.c.b16 %v644, %v643
        %v650 = vsel %vm616, %v632, 0
        %652 = vmatprep.subr.bf16.mxu0 0
        %653 = vmatpush1.bf16.msra.mxu0 0
        %654 = vmatprep.subr.bf16.mxu0 0
        %655 = vmatpush1.bf16.msra.mxu0 0
        %656 = vmatprep.subr.bf16.mxu0 0
        %657 = vmatpush1.bf16.msra.mxu0 0
        %658 = vmatprep.subr.bf16.mxu0 0
        %659 = vmatpush1.bf16.msra.mxu0 0
        %660 = vmatprep.subr.bf16.mxu0 0
        %661 = vmatpush1.bf16.msra.mxu0 0
        %662 = vmatprep.subr.bf16.mxu0 0
        %663 = vmatpush1.bf16.msra.mxu0 0
        %664 = vmatprep.subr.bf16.mxu0 0
        %665 = vmatpush1.bf16.msra.mxu0 %v646
        %666 = vmatprep.subr.bf16.mxu0 0
        %667 = vmatpush1.bf16.msra.mxu0 %v645
        %668 = vmatprep.subr.bf16.mxu0 0
        %669 = vmatpush2.bf16.msra.mxu0 0
        %670 = vmatprep.subr.bf16.mxu0 0
        %671 = vmatpush2.bf16.msra.mxu0 0
        %672 = vmatprep.subr.bf16.mxu0 0
        %673 = vmatpush2.bf16.msra.mxu0 0
        %674 = vmatprep.subr.bf16.mxu0 0
        %675 = vmatpush2.bf16.msra.mxu0 0
        %676 = vmatprep.subr.bf16.mxu0 0
        %677 = vmatpush2.bf16.msra.mxu0 0
        %678 = vmatprep.subr.bf16.mxu0 0
        %679 = vmatpush2.bf16.msra.mxu0 0
        %680 = vmatprep.subr.bf16.mxu0 0
        %681 = vmatpush2.bf16.msra.mxu0 0
        %682 = vmatprep.subr.bf16.mxu0 0
        %683 = vmatpush2.bf16.msra.mxu0 0
        %684 = vmatprep.mubr.bf16.mxu0 0
        %685 = vmatmul.mubr.bf16.gmra.mxu0 %v650
        %v686 = vpop.f32.mrf.mxu0
        %v687 = vadd.f32 0.0, %v686
        %v688 = vpop.f32.mrf.mxu0
        %v689 = vpop.f32.mrf.mxu0
        %v690 = vpop.f32.mrf.mxu0
        %691 = vdwg.mxu0
        %693 = vrot.lane.b32.xlu0 %v687, 120
        %v694 = vpop.permute.xlu0 %693
        %696 = vrot.lane.b32.xlu0 %v687, 112
        %v697 = vpop.permute.xlu0 %696
        %699 = vrot.lane.b32.xlu0 %v687, 104
        %v700 = vpop.permute.xlu0 %699
        %v702 = vpack.c.bf16 %v687, %v687
        %v703 = vpack.c.bf16 %v694, %v694
        %v704 = vpack.c.bf16 %v697, %v697
        %v705 = vpack.c.bf16 %v700, %v700
        %v706 = vld [vmem:[#allocation2] sm:$0xf]
        %v707 = vld [vmem:[#allocation2 + $0x4] sm:$0xf]
        %v708 = vld [vmem:[#allocation2 + $0x8] sm:$0xf]
        %v709 = vld [vmem:[#allocation2 + $0xc] sm:$0xf]
        %v710 = vld [vmem:[#allocation3] sm:$0xf]
        %v711 = vld [vmem:[#allocation3 + $0x4] sm:$0xf]
        %v712 = vld [vmem:[#allocation3 + $0x8] sm:$0xf]
        %v713 = vld [vmem:[#allocation3 + $0xc] sm:$0xf]
        %v714 = vld [vmem:[#allocation7] sm:$0xf]
        %v715 = vld [vmem:[#allocation7 + $0x4] sm:$0xf]
        %v716 = vld [vmem:[#allocation7 + $0x8] sm:$0xf]
        %v717 = vld [vmem:[#allocation7 + $0xc] sm:$0xf]
        %v718 = vunpack.c.l.bf16 %v714
        %v719 = vunpack.c.l.bf16 %v715
        %v720 = vunpack.c.l.bf16 %v716
        %v721 = vunpack.c.l.bf16 %v717
        %vm722 = vcmask 64512
        %v724 = vsel %vm722, %v702, 0
        %v727 = vsel %vm722, %v706, 0
        %729 = vmatprep.subr.bf16.mxu0 0
        %730 = vmatpush1.bf16.xpose.msra.mxu0 0
        %731 = vmatprep.subr.bf16.mxu0 0
        %732 = vmatpush1.bf16.xpose.msra.mxu0 0
        %733 = vmatprep.subr.bf16.mxu0 0
        %734 = vmatpush1.bf16.xpose.msra.mxu0 0
        %735 = vmatprep.subr.bf16.mxu0 0
        %736 = vmatpush1.bf16.xpose.msra.mxu0 0
        %737 = vmatprep.subr.bf16.mxu0 0
        %738 = vmatpush1.bf16.xpose.msra.mxu0 0
        %739 = vmatprep.subr.bf16.mxu0 0
        %740 = vmatpush1.bf16.xpose.msra.mxu0 0
        %741 = vmatprep.subr.bf16.mxu0 0
        %742 = vmatpush1.bf16.xpose.msra.mxu0 0
        %743 = vmatprep.subr.bf16.mxu0 0
        %744 = vmatpush1.bf16.xpose.msra.mxu0 %v727
        %745 = vmatprep.subr.bf16.mxu0 0
        %746 = vmatpush2.bf16.xpose.msra.mxu0 0
        %747 = vmatprep.subr.bf16.mxu0 0
        %748 = vmatpush2.bf16.xpose.msra.mxu0 0
        %749 = vmatprep.subr.bf16.mxu0 0
        %750 = vmatpush2.bf16.xpose.msra.mxu0 0
        %751 = vmatprep.subr.bf16.mxu0 0
        %752 = vmatpush2.bf16.xpose.msra.mxu0 0
        %753 = vmatprep.subr.bf16.mxu0 0
        %754 = vmatpush2.bf16.xpose.msra.mxu0 0
        %755 = vmatprep.subr.bf16.mxu0 0
        %756 = vmatpush2.bf16.xpose.msra.mxu0 0
        %757 = vmatprep.subr.bf16.mxu0 0
        %758 = vmatpush2.bf16.xpose.msra.mxu0 0
        %759 = vmatprep.subr.bf16.mxu0 0
        %760 = vmatpush2.bf16.xpose.msra.mxu0 0
        %761 = vmatprep.mubr.bf16.mxu0 0
        %762 = vmatmul.mubr.bf16.gmra.mxu0 %v724
        %v763 = vpop.f32.mrf.mxu0
        %v764 = vadd.f32 %v718, %v763
        %v765 = vpop.f32.mrf.mxu0
        %v766 = vpop.f32.mrf.mxu0
        %v767 = vpop.f32.mrf.mxu0
        %768 = vdwg.mxu0
        %v770 = vsel %vm722, %v703, 0
        %v773 = vsel %vm722, %v707, 0
        %775 = vmatprep.subr.bf16.mxu0 0
        %776 = vmatpush1.bf16.xpose.msra.mxu0 0
        %777 = vmatprep.subr.bf16.mxu0 0
        %778 = vmatpush1.bf16.xpose.msra.mxu0 0
        %779 = vmatprep.subr.bf16.mxu0 0
        %780 = vmatpush1.bf16.xpose.msra.mxu0 0
        %781 = vmatprep.subr.bf16.mxu0 0
        %782 = vmatpush1.bf16.xpose.msra.mxu0 0
        %783 = vmatprep.subr.bf16.mxu0 0
        %784 = vmatpush1.bf16.xpose.msra.mxu0 0
        %785 = vmatprep.subr.bf16.mxu0 0
        %786 = vmatpush1.bf16.xpose.msra.mxu0 0
        %787 = vmatprep.subr.bf16.mxu0 0
        %788 = vmatpush1.bf16.xpose.msra.mxu0 0
        %789 = vmatprep.subr.bf16.mxu0 0
        %790 = vmatpush1.bf16.xpose.msra.mxu0 %v773
        %791 = vmatprep.subr.bf16.mxu0 0
        %792 = vmatpush2.bf16.xpose.msra.mxu0 0
        %793 = vmatprep.subr.bf16.mxu0 0
        %794 = vmatpush2.bf16.xpose.msra.mxu0 0
        %795 = vmatprep.subr.bf16.mxu0 0
        %796 = vmatpush2.bf16.xpose.msra.mxu0 0
        %797 = vmatprep.subr.bf16.mxu0 0
        %798 = vmatpush2.bf16.xpose.msra.mxu0 0
        %799 = vmatprep.subr.bf16.mxu0 0
        %800 = vmatpush2.bf16.xpose.msra.mxu0 0
        %801 = vmatprep.subr.bf16.mxu0 0
        %802 = vmatpush2.bf16.xpose.msra.mxu0 0
        %803 = vmatprep.subr.bf16.mxu0 0
        %804 = vmatpush2.bf16.xpose.msra.mxu0 0
        %805 = vmatprep.subr.bf16.mxu0 0
        %806 = vmatpush2.bf16.xpose.msra.mxu0 0
        %807 = vmatprep.mubr.bf16.mxu0 0
        %808 = vmatmul.mubr.bf16.gmra.mxu0 %v770
        %v809 = vpop.f32.mrf.mxu0
        %v810 = vadd.f32 %v719, %v809
        %v811 = vpop.f32.mrf.mxu0
        %v812 = vpop.f32.mrf.mxu0
        %v813 = vpop.f32.mrf.mxu0
        %814 = vdwg.mxu0
        %v816 = vsel %vm722, %v704, 0
        %v819 = vsel %vm722, %v708, 0
        %821 = vmatprep.subr.bf16.mxu0 0
        %822 = vmatpush1.bf16.xpose.msra.mxu0 0
        %823 = vmatprep.subr.bf16.mxu0 0
        %824 = vmatpush1.bf16.xpose.msra.mxu0 0
        %825 = vmatprep.subr.bf16.mxu0 0
        %826 = vmatpush1.bf16.xpose.msra.mxu0 0
        %827 = vmatprep.subr.bf16.mxu0 0
        %828 = vmatpush1.bf16.xpose.msra.mxu0 0
        %829 = vmatprep.subr.bf16.mxu0 0
        %830 = vmatpush1.bf16.xpose.msra.mxu0 0
        %831 = vmatprep.subr.bf16.mxu0 0
        %832 = vmatpush1.bf16.xpose.msra.mxu0 0
        %833 = vmatprep.subr.bf16.mxu0 0
        %834 = vmatpush1.bf16.xpose.msra.mxu0 0
        %835 = vmatprep.subr.bf16.mxu0 0
        %836 = vmatpush1.bf16.xpose.msra.mxu0 %v819
        %837 = vmatprep.subr.bf16.mxu0 0
        %838 = vmatpush2.bf16.xpose.msra.mxu0 0
        %839 = vmatprep.subr.bf16.mxu0 0
        %840 = vmatpush2.bf16.xpose.msra.mxu0 0
        %841 = vmatprep.subr.bf16.mxu0 0
        %842 = vmatpush2.bf16.xpose.msra.mxu0 0
        %843 = vmatprep.subr.bf16.mxu0 0
        %844 = vmatpush2.bf16.xpose.msra.mxu0 0
        %845 = vmatprep.subr.bf16.mxu0 0
        %846 = vmatpush2.bf16.xpose.msra.mxu0 0
        %847 = vmatprep.subr.bf16.mxu0 0
        %848 = vmatpush2.bf16.xpose.msra.mxu0 0
        %849 = vmatprep.subr.bf16.mxu0 0
        %850 = vmatpush2.bf16.xpose.msra.mxu0 0
        %851 = vmatprep.subr.bf16.mxu0 0
        %852 = vmatpush2.bf16.xpose.msra.mxu0 0
        %853 = vmatprep.mubr.bf16.mxu0 0
        %854 = vmatmul.mubr.bf16.gmra.mxu0 %v816
        %v855 = vpop.f32.mrf.mxu0
        %v856 = vadd.f32 %v720, %v855
        %v857 = vpop.f32.mrf.mxu0
        %v858 = vpop.f32.mrf.mxu0
        %v859 = vpop.f32.mrf.mxu0
        %860 = vdwg.mxu0
        %v862 = vsel %vm722, %v705, 0
        %v865 = vsel %vm722, %v709, 0
        %867 = vmatprep.subr.bf16.mxu0 0
        %868 = vmatpush1.bf16.xpose.msra.mxu0 0
        %869 = vmatprep.subr.bf16.mxu0 0
        %870 = vmatpush1.bf16.xpose.msra.mxu0 0
        %871 = vmatprep.subr.bf16.mxu0 0
        %872 = vmatpush1.bf16.xpose.msra.mxu0 0
        %873 = vmatprep.subr.bf16.mxu0 0
        %874 = vmatpush1.bf16.xpose.msra.mxu0 0
        %875 = vmatprep.subr.bf16.mxu0 0
        %876 = vmatpush1.bf16.xpose.msra.mxu0 0
        %877 = vmatprep.subr.bf16.mxu0 0
        %878 = vmatpush1.bf16.xpose.msra.mxu0 0
        %879 = vmatprep.subr.bf16.mxu0 0
        %880 = vmatpush1.bf16.xpose.msra.mxu0 0
        %881 = vmatprep.subr.bf16.mxu0 0
        %882 = vmatpush1.bf16.xpose.msra.mxu0 %v865
        %883 = vmatprep.subr.bf16.mxu0 0
        %884 = vmatpush2.bf16.xpose.msra.mxu0 0
        %885 = vmatprep.subr.bf16.mxu0 0
        %886 = vmatpush2.bf16.xpose.msra.mxu0 0
        %887 = vmatprep.subr.bf16.mxu0 0
        %888 = vmatpush2.bf16.xpose.msra.mxu0 0
        %889 = vmatprep.subr.bf16.mxu0 0
        %890 = vmatpush2.bf16.xpose.msra.mxu0 0
        %891 = vmatprep.subr.bf16.mxu0 0
        %892 = vmatpush2.bf16.xpose.msra.mxu0 0
        %893 = vmatprep.subr.bf16.mxu0 0
        %894 = vmatpush2.bf16.xpose.msra.mxu0 0
        %895 = vmatprep.subr.bf16.mxu0 0
        %896 = vmatpush2.bf16.xpose.msra.mxu0 0
        %897 = vmatprep.subr.bf16.mxu0 0
        %898 = vmatpush2.bf16.xpose.msra.mxu0 0
        %899 = vmatprep.mubr.bf16.mxu0 0
        %900 = vmatmul.mubr.bf16.gmra.mxu0 %v862
        %v901 = vpop.f32.mrf.mxu0
        %v902 = vadd.f32 %v721, %v901
        %v903 = vpop.f32.mrf.mxu0
        %v904 = vpop.f32.mrf.mxu0
        %v905 = vpop.f32.mrf.mxu0
        %906 = vdwg.mxu0
        %v907 = vsel %vm722, %v764, -inf
        %908 = vmax.xlane.f32.xlu0 %v907
        %v909 = vpop.xlane.xlu0 %908
        %v910 = vsel %vm722, %v810, -inf
        %911 = vmax.xlane.f32.xlu0 %v910
        %v912 = vpop.xlane.xlu0 %911
        %v913 = vsel %vm722, %v856, -inf
        %914 = vmax.xlane.f32.xlu0 %v913
        %v915 = vpop.xlane.xlu0 %914
        %v916 = vsel %vm722, %v902, -inf
        %917 = vmax.xlane.f32.xlu0 %v916
        %v918 = vpop.xlane.xlu0 %917
        %v919 = vsub.f32 %v764, %v909
        %v920 = vsub.f32 %v810, %v912
        %v921 = vsub.f32 %v856, %v915
        %v922 = vsub.f32 %v902, %v918
        %v923 = vmul.f32 %v919, 1.442695
        %v924 = vpow.pop %v923
        %v925 = vmul.f32 %v920, 1.442695
        %v926 = vpow.pop %v925
        %v927 = vmul.f32 %v921, 1.442695
        %v928 = vpow.pop %v927
        %v929 = vmul.f32 %v922, 1.442695
        %v930 = vpow.pop %v929
        %v931 = vsel %vm722, %v924, 0.0
        %932 = vadd.xlane.f32.xlu0 %v931
        %v933 = vpop.xlane.xlu0 %932
        %v934 = vsel %vm722, %v926, 0.0
        %935 = vadd.xlane.f32.xlu0 %v934
        %v936 = vpop.xlane.xlu0 %935
        %v937 = vsel %vm722, %v928, 0.0
        %938 = vadd.xlane.f32.xlu0 %v937
        %v939 = vpop.xlane.xlu0 %938
        %v940 = vsel %vm722, %v930, 0.0
        %941 = vadd.xlane.f32.xlu0 %v940
        %v942 = vpop.xlane.xlu0 %941
        %v943 = vpack.c.bf16 %v924, %v924
        %v944 = vpack.c.bf16 %v926, %v926
        %v945 = vpack.c.bf16 %v928, %v928
        %v946 = vpack.c.bf16 %v930, %v930
        %v948 = vsel %vm722, %v943, 0
        %vm950 = vcmask 1043456
        %v952 = vsel %vm950, %v710, 0
        %954 = vmatprep.subr.bf16.mxu0 0
        %955 = vmatpush1.bf16.msra.mxu0 0
        %956 = vmatprep.subr.bf16.mxu0 0
        %957 = vmatpush1.bf16.msra.mxu0 0
        %958 = vmatprep.subr.bf16.mxu0 0
        %959 = vmatpush1.bf16.msra.mxu0 0
        %960 = vmatprep.subr.bf16.mxu0 0
        %961 = vmatpush1.bf16.msra.mxu0 0
        %962 = vmatprep.subr.bf16.mxu0 0
        %963 = vmatpush1.bf16.msra.mxu0 0
        %964 = vmatprep.subr.bf16.mxu0 0
        %965 = vmatpush1.bf16.msra.mxu0 0
        %966 = vmatprep.subr.bf16.mxu0 0
        %967 = vmatpush1.bf16.msra.mxu0 0
        %968 = vmatprep.subr.bf16.mxu0 0
        %969 = vmatpush1.bf16.msra.mxu0 %v952
        %970 = vmatprep.subr.bf16.mxu0 0
        %971 = vmatpush2.bf16.msra.mxu0 0
        %972 = vmatprep.subr.bf16.mxu0 0
        %973 = vmatpush2.bf16.msra.mxu0 0
        %974 = vmatprep.subr.bf16.mxu0 0
        %975 = vmatpush2.bf16.msra.mxu0 0
        %976 = vmatprep.subr.bf16.mxu0 0
        %977 = vmatpush2.bf16.msra.mxu0 0
        %978 = vmatprep.subr.bf16.mxu0 0
        %979 = vmatpush2.bf16.msra.mxu0 0
        %980 = vmatprep.subr.bf16.mxu0 0
        %981 = vmatpush2.bf16.msra.mxu0 0
        %982 = vmatprep.subr.bf16.mxu0 0
        %983 = vmatpush2.bf16.msra.mxu0 0
        %984 = vmatprep.subr.bf16.mxu0 0
        %985 = vmatpush2.bf16.msra.mxu0 0
        %986 = vmatprep.mubr.bf16.mxu0 0
        %987 = vmatmul.mubr.bf16.gmra.mxu0 %v948
        %v988 = vpop.f32.mrf.mxu0
        %v989 = vadd.f32 0.0, %v988
        %v990 = vpop.f32.mrf.mxu0
        %v991 = vpop.f32.mrf.mxu0
        %v992 = vpop.f32.mrf.mxu0
        %993 = vdwg.mxu0
        %v995 = vsel %vm722, %v944, 0
        %v998 = vsel %vm950, %v711, 0
        %1000 = vmatprep.subr.bf16.mxu0 0
        %1001 = vmatpush1.bf16.msra.mxu0 0
        %1002 = vmatprep.subr.bf16.mxu0 0
        %1003 = vmatpush1.bf16.msra.mxu0 0
        %1004 = vmatprep.subr.bf16.mxu0 0
        %1005 = vmatpush1.bf16.msra.mxu0 0
        %1006 = vmatprep.subr.bf16.mxu0 0
        %1007 = vmatpush1.bf16.msra.mxu0 0
        %1008 = vmatprep.subr.bf16.mxu0 0
        %1009 = vmatpush1.bf16.msra.mxu0 0
        %1010 = vmatprep.subr.bf16.mxu0 0
        %1011 = vmatpush1.bf16.msra.mxu0 0
        %1012 = vmatprep.subr.bf16.mxu0 0
        %1013 = vmatpush1.bf16.msra.mxu0 0
        %1014 = vmatprep.subr.bf16.mxu0 0
        %1015 = vmatpush1.bf16.msra.mxu0 %v998
        %1016 = vmatprep.subr.bf16.mxu0 0
        %1017 = vmatpush2.bf16.msra.mxu0 0
        %1018 = vmatprep.subr.bf16.mxu0 0
        %1019 = vmatpush2.bf16.msra.mxu0 0
        %1020 = vmatprep.subr.bf16.mxu0 0
        %1021 = vmatpush2.bf16.msra.mxu0 0
        %1022 = vmatprep.subr.bf16.mxu0 0
        %1023 = vmatpush2.bf16.msra.mxu0 0
        %1024 = vmatprep.subr.bf16.mxu0 0
        %1025 = vmatpush2.bf16.msra.mxu0 0
        %1026 = vmatprep.subr.bf16.mxu0 0
        %1027 = vmatpush2.bf16.msra.mxu0 0
        %1028 = vmatprep.subr.bf16.mxu0 0
        %1029 = vmatpush2.bf16.msra.mxu0 0
        %1030 = vmatprep.subr.bf16.mxu0 0
        %1031 = vmatpush2.bf16.msra.mxu0 0
        %1032 = vmatprep.mubr.bf16.mxu0 0
        %1033 = vmatmul.mubr.bf16.gmra.mxu0 %v995
        %v1034 = vpop.f32.mrf.mxu0
        %v1035 = vadd.f32 0.0, %v1034
        %v1036 = vpop.f32.mrf.mxu0
        %v1037 = vpop.f32.mrf.mxu0
        %v1038 = vpop.f32.mrf.mxu0
        %1039 = vdwg.mxu0
        %v1041 = vsel %vm722, %v945, 0
        %v1044 = vsel %vm950, %v712, 0
        %1046 = vmatprep.subr.bf16.mxu0 0
        %1047 = vmatpush1.bf16.msra.mxu0 0
        %1048 = vmatprep.subr.bf16.mxu0 0
        %1049 = vmatpush1.bf16.msra.mxu0 0
        %1050 = vmatprep.subr.bf16.mxu0 0
        %1051 = vmatpush1.bf16.msra.mxu0 0
        %1052 = vmatprep.subr.bf16.mxu0 0
        %1053 = vmatpush1.bf16.msra.mxu0 0
        %1054 = vmatprep.subr.bf16.mxu0 0
        %1055 = vmatpush1.bf16.msra.mxu0 0
        %1056 = vmatprep.subr.bf16.mxu0 0
        %1057 = vmatpush1.bf16.msra.mxu0 0
        %1058 = vmatprep.subr.bf16.mxu0 0
        %1059 = vmatpush1.bf16.msra.mxu0 0
        %1060 = vmatprep.subr.bf16.mxu0 0
        %1061 = vmatpush1.bf16.msra.mxu0 %v1044
        %1062 = vmatprep.subr.bf16.mxu0 0
        %1063 = vmatpush2.bf16.msra.mxu0 0
        %1064 = vmatprep.subr.bf16.mxu0 0
        %1065 = vmatpush2.bf16.msra.mxu0 0
        %1066 = vmatprep.subr.bf16.mxu0 0
        %1067 = vmatpush2.bf16.msra.mxu0 0
        %1068 = vmatprep.subr.bf16.mxu0 0
        %1069 = vmatpush2.bf16.msra.mxu0 0
        %1070 = vmatprep.subr.bf16.mxu0 0
        %1071 = vmatpush2.bf16.msra.mxu0 0
        %1072 = vmatprep.subr.bf16.mxu0 0
        %1073 = vmatpush2.bf16.msra.mxu0 0
        %1074 = vmatprep.subr.bf16.mxu0 0
        %1075 = vmatpush2.bf16.msra.mxu0 0
        %1076 = vmatprep.subr.bf16.mxu0 0
        %1077 = vmatpush2.bf16.msra.mxu0 0
        %1078 = vmatprep.mubr.bf16.mxu0 0
        %1079 = vmatmul.mubr.bf16.gmra.mxu0 %v1041
        %v1080 = vpop.f32.mrf.mxu0
        %v1081 = vadd.f32 0.0, %v1080
        %v1082 = vpop.f32.mrf.mxu0
        %v1083 = vpop.f32.mrf.mxu0
        %v1084 = vpop.f32.mrf.mxu0
        %1085 = vdwg.mxu0
        %v1087 = vsel %vm722, %v946, 0
        %v1090 = vsel %vm950, %v713, 0
        %1092 = vmatprep.subr.bf16.mxu0 0
        %1093 = vmatpush1.bf16.msra.mxu0 0
        %1094 = vmatprep.subr.bf16.mxu0 0
        %1095 = vmatpush1.bf16.msra.mxu0 0
        %1096 = vmatprep.subr.bf16.mxu0 0
        %1097 = vmatpush1.bf16.msra.mxu0 0
        %1098 = vmatprep.subr.bf16.mxu0 0
        %1099 = vmatpush1.bf16.msra.mxu0 0
        %1100 = vmatprep.subr.bf16.mxu0 0
        %1101 = vmatpush1.bf16.msra.mxu0 0
        %1102 = vmatprep.subr.bf16.mxu0 0
        %1103 = vmatpush1.bf16.msra.mxu0 0
        %1104 = vmatprep.subr.bf16.mxu0 0
        %1105 = vmatpush1.bf16.msra.mxu0 0
        %1106 = vmatprep.subr.bf16.mxu0 0
        %1107 = vmatpush1.bf16.msra.mxu0 %v1090
        %1108 = vmatprep.subr.bf16.mxu0 0
        %1109 = vmatpush2.bf16.msra.mxu0 0
        %1110 = vmatprep.subr.bf16.mxu0 0
        %1111 = vmatpush2.bf16.msra.mxu0 0
        %1112 = vmatprep.subr.bf16.mxu0 0
        %1113 = vmatpush2.bf16.msra.mxu0 0
        %1114 = vmatprep.subr.bf16.mxu0 0
        %1115 = vmatpush2.bf16.msra.mxu0 0
        %1116 = vmatprep.subr.bf16.mxu0 0
        %1117 = vmatpush2.bf16.msra.mxu0 0
        %1118 = vmatprep.subr.bf16.mxu0 0
        %1119 = vmatpush2.bf16.msra.mxu0 0
        %1120 = vmatprep.subr.bf16.mxu0 0
        %1121 = vmatpush2.bf16.msra.mxu0 0
        %1122 = vmatprep.subr.bf16.mxu0 0
        %1123 = vmatpush2.bf16.msra.mxu0 0
        %1124 = vmatprep.mubr.bf16.mxu0 0
        %1125 = vmatmul.mubr.bf16.gmra.mxu0 %v1087
        %v1126 = vpop.f32.mrf.mxu0
        %v1127 = vadd.f32 0.0, %v1126
        %v1128 = vpop.f32.mrf.mxu0
        %v1129 = vpop.f32.mrf.mxu0
        %v1130 = vpop.f32.mrf.mxu0
        %1131 = vdwg.mxu0
        %v1132 = vrcp.pop %v933
        %v1133 = vrcp.pop %v936
        %v1134 = vrcp.pop %v939
        %v1135 = vrcp.pop %v942
        %v1136 = vmul.f32 %v989, %v1132
        %v1137 = vmul.f32 %v1035, %v1133
        %v1138 = vmul.f32 %v1081, %v1134
        %v1139 = vmul.f32 %v1127, %v1135
        %1141 = vrot.lane.b32.xlu0 %v1137, 8
        %v1142 = vpop.permute.xlu0 %1141
        %1145 = vrot.lane.b32.xlu0 %v1138, 16
        %v1146 = vpop.permute.xlu0 %1145
        %1149 = vrot.lane.b32.xlu0 %v1139, 24
        %v1150 = vpop.permute.xlu0 %1149
        %v1152 = vsel %vm722, %v1136, %v1142
        %vm1153 = vcmask 130048
        %v1154 = vsel %vm1153, %v1152, %v1146
        %vm1155 = vcmask 195584
        %v1156 = vsel %vm1155, %v1154, %v1150
        %v1157 = vpack.c.bf16 %v1156, %v1156
        %v1158 = vld [vmem:[%s5] sm:$0xf]
        %v1159 = vld [vmem:[%s5 + $0x4] sm:$0xf]
        %v1160 = vld [vmem:[%s5 + $0x8] sm:$0xf]
        %v1161 = vld [vmem:[%s5 + $0xc] sm:$0xf]
        %v1166 = vunpack.c.l.b16 %v1158
        %v1167 = vunpack.c.l.b16 %v1159
        %v1168 = vunpack.c.l.b16 %v1160
        %v1169 = vunpack.c.l.b16 %v1161
        %v1170 = vpack.c.b16 %v1167, %v1166
        %v1171 = vpack.c.b16 %v1169, %v1168
        %v1175 = vsel %vm616, %v1157, 0
        %1177 = vmatprep.subr.bf16.mxu0 0
        %1178 = vmatpush1.bf16.msra.mxu0 0
        %1179 = vmatprep.subr.bf16.mxu0 0
        %1180 = vmatpush1.bf16.msra.mxu0 0
        %1181 = vmatprep.subr.bf16.mxu0 0
        %1182 = vmatpush1.bf16.msra.mxu0 0
        %1183 = vmatprep.subr.bf16.mxu0 0
        %1184 = vmatpush1.bf16.msra.mxu0 0
        %1185 = vmatprep.subr.bf16.mxu0 0
        %1186 = vmatpush1.bf16.msra.mxu0 0
        %1187 = vmatprep.subr.bf16.mxu0 0
        %1188 = vmatpush1.bf16.msra.mxu0 0
        %1189 = vmatprep.subr.bf16.mxu0 0
        %1190 = vmatpush1.bf16.msra.mxu0 %v1171
        %1191 = vmatprep.subr.bf16.mxu0 0
        %1192 = vmatpush1.bf16.msra.mxu0 %v1170
        %1193 = vmatprep.subr.bf16.mxu0 0
        %1194 = vmatpush2.bf16.msra.mxu0 0
        %1195 = vmatprep.subr.bf16.mxu0 0
        %1196 = vmatpush2.bf16.msra.mxu0 0
        %1197 = vmatprep.subr.bf16.mxu0 0
        %1198 = vmatpush2.bf16.msra.mxu0 0
        %1199 = vmatprep.subr.bf16.mxu0 0
        %1200 = vmatpush2.bf16.msra.mxu0 0
        %1201 = vmatprep.subr.bf16.mxu0 0
        %1202 = vmatpush2.bf16.msra.mxu0 0
        %1203 = vmatprep.subr.bf16.mxu0 0
        %1204 = vmatpush2.bf16.msra.mxu0 0
        %1205 = vmatprep.subr.bf16.mxu0 0
        %1206 = vmatpush2.bf16.msra.mxu0 0
        %1207 = vmatprep.subr.bf16.mxu0 0
        %1208 = vmatpush2.bf16.msra.mxu0 0
        %1209 = vmatprep.mubr.bf16.mxu0 0
        %1210 = vmatmul.mubr.bf16.gmra.mxu0 %v1175
        %v1211 = vpop.f32.mrf.mxu0
        %v1212 = vadd.f32 0.0, %v1211
        %v1213 = vpop.f32.mrf.mxu0
        %v1214 = vpop.f32.mrf.mxu0
        %v1215 = vpop.f32.mrf.mxu0
        %1216 = vdwg.mxu0
        %v1217 = vadd.f32 %v614, %v1212
        %v1218 = vmul.f32 %v1217, %v1217
        %v1219 = vsel %vm616, %v1218, 0.0
        %1220 = vadd.xlane.f32.xlu0 %v1219
        %v1221 = vpop.xlane.xlu0 %1220
        %v1222 = vmul.f32 %v1221, %v620
        %v1223 = vld [vmem:[#allocation9] sm:$0x1]
        %v1224 = vadd.f32 %v1222, 1e-06
        %v1225 = vrsqrt.pop %v1224
        %v1226 = vmul.f32 %v1217, %v1225
        %v1228 = vlaneseq
        %v1229 = vshrl.u32 %v1228, 7
        %v1230 = vsub.s32 0, %v1229
        %v1231 = vrot.slane %v1223, %v1230
        %v1233 = vmul.f32 %v1231, %v1226
        %v1234 = vpack.c.bf16 %v1233, %v1233
        %v1235 = vld [vmem:[#allocation10] sm:$0xf]
        %v1236 = vld [vmem:[#allocation10 + $0x4] sm:$0xf]
        %v1237 = vld [vmem:[#allocation10 + $0x8] sm:$0xf]
        %v1238 = vld [vmem:[#allocation10 + $0xc] sm:$0xf]
        %v1243 = vunpack.c.l.b16 %v1235
        %v1244 = vunpack.c.l.b16 %v1236
        %v1245 = vunpack.c.l.b16 %v1237
        %v1246 = vunpack.c.l.b16 %v1238
        %v1247 = vpack.c.b16 %v1244, %v1243
        %v1248 = vpack.c.b16 %v1246, %v1245
        %v1252 = vsel %vm616, %v1234, 0
        %1254 = vmatprep.subr.bf16.mxu0 0
        %1255 = vmatpush1.bf16.msra.mxu0 0
        %1256 = vmatprep.subr.bf16.mxu0 0
        %1257 = vmatpush1.bf16.msra.mxu0 0
        %1258 = vmatprep.subr.bf16.mxu0 0
        %1259 = vmatpush1.bf16.msra.mxu0 0
        %1260 = vmatprep.subr.bf16.mxu0 0
        %1261 = vmatpush1.bf16.msra.mxu0 0
        %1262 = vmatprep.subr.bf16.mxu0 0
        %1263 = vmatpush1.bf16.msra.mxu0 0
        %1264 = vmatprep.subr.bf16.mxu0 0
        %1265 = vmatpush1.bf16.msra.mxu0 0
        %1266 = vmatprep.subr.bf16.mxu0 0
        %1267 = vmatpush1.bf16.msra.mxu0 %v1248
        %1268 = vmatprep.subr.bf16.mxu0 0
        %1269 = vmatpush1.bf16.msra.mxu0 %v1247
        %1270 = vmatprep.subr.bf16.mxu0 0
        %1271 = vmatpush2.bf16.msra.mxu0 0
        %1272 = vmatprep.subr.bf16.mxu0 0
        %1273 = vmatpush2.bf16.msra.mxu0 0
        %1274 = vmatprep.subr.bf16.mxu0 0
        %1275 = vmatpush2.bf16.msra.mxu0 0
        %1276 = vmatprep.subr.bf16.mxu0 0
        %1277 = vmatpush2.bf16.msra.mxu0 0
        %1278 = vmatprep.subr.bf16.mxu0 0
        %1279 = vmatpush2.bf16.msra.mxu0 0
        %1280 = vmatprep.subr.bf16.mxu0 0
        %1281 = vmatpush2.bf16.msra.mxu0 0
        %1282 = vmatprep.subr.bf16.mxu0 0
        %1283 = vmatpush2.bf16.msra.mxu0 0
        %1284 = vmatprep.subr.bf16.mxu0 0
        %1285 = vmatpush2.bf16.msra.mxu0 0
        %1286 = vmatprep.mubr.bf16.mxu0 0
        %1287 = vmatmul.mubr.bf16.gmra.mxu0 %v1252
        %v1288 = vpop.f32.mrf.mxu0
        %v1289 = vadd.f32 0.0, %v1288
        %v1290 = vpop.f32.mrf.mxu0
        %v1291 = vpop.f32.mrf.mxu0
        %v1292 = vpop.f32.mrf.mxu0
        %1293 = vdwg.mxu0
        %v1294 = vmax.f32 %v1289, 0.0
        %v1295 = vpack.c.bf16 %v1294, %v1294
        %v1296 = vld [vmem:[%s9] sm:$0xf]
        %v1297 = vld [vmem:[%s9 + $0x4] sm:$0xf]
        %v1298 = vld [vmem:[%s9 + $0x8] sm:$0xf]
        %v1299 = vld [vmem:[%s9 + $0xc] sm:$0xf]
        %v1300 = vld [vmem:[%s9 + $0x10] sm:$0xf]
        %v1301 = vld [vmem:[%s9 + $0x14] sm:$0xf]
        %v1302 = vld [vmem:[%s9 + $0x18] sm:$0xf]
        %v1303 = vld [vmem:[%s9 + $0x1c] sm:$0xf]
        %v1304 = vld [vmem:[%s9 + $0x20] sm:$0xf]
        %v1305 = vld [vmem:[%s9 + $0x24] sm:$0xf]
        %v1306 = vld [vmem:[%s9 + $0x28] sm:$0xf]
        %v1307 = vld [vmem:[%s9 + $0x2c] sm:$0xf]
        %v1308 = vld [vmem:[%s9 + $0x30] sm:$0xf]
        %v1309 = vld [vmem:[%s9 + $0x34] sm:$0xf]
        %v1310 = vld [vmem:[%s9 + $0x38] sm:$0xf]
        %v1311 = vld [vmem:[%s9 + $0x3c] sm:$0xf]
        %v1328 = vunpack.c.l.b16 %v1296
        %v1329 = vunpack.c.l.b16 %v1297
        %v1330 = vunpack.c.l.b16 %v1298
        %v1331 = vunpack.c.l.b16 %v1299
        %v1332 = vunpack.c.l.b16 %v1300
        %v1333 = vunpack.c.l.b16 %v1301
        %v1334 = vunpack.c.l.b16 %v1302
        %v1335 = vunpack.c.l.b16 %v1303
        %v1336 = vunpack.c.l.b16 %v1304
        %v1337 = vunpack.c.l.b16 %v1305
        %v1338 = vunpack.c.l.b16 %v1306
        %v1339 = vunpack.c.l.b16 %v1307
        %v1340 = vunpack.c.l.b16 %v1308
        %v1341 = vunpack.c.l.b16 %v1309
        %v1342 = vunpack.c.l.b16 %v1310
        %v1343 = vunpack.c.l.b16 %v1311
        %v1344 = vpack.c.b16 %v1329, %v1328
        %v1345 = vpack.c.b16 %v1331, %v1330
        %v1346 = vpack.c.b16 %v1333, %v1332
        %v1347 = vpack.c.b16 %v1335, %v1334
        %v1348 = vpack.c.b16 %v1337, %v1336
        %v1349 = vpack.c.b16 %v1339, %v1338
        %v1350 = vpack.c.b16 %v1341, %v1340
        %v1351 = vpack.c.b16 %v1343, %v1342
        %1360 = vmatprep.subr.bf16.mxu0 0
        %1361 = vmatpush1.bf16.msra.mxu0 %v1351
        %1362 = vmatprep.subr.bf16.mxu0 0
        %1363 = vmatpush1.bf16.msra.mxu0 %v1350
        %1364 = vmatprep.subr.bf16.mxu0 0
        %1365 = vmatpush1.bf16.msra.mxu0 %v1349
        %1366 = vmatprep.subr.bf16.mxu0 0
        %1367 = vmatpush1.bf16.msra.mxu0 %v1348
        %1368 = vmatprep.subr.bf16.mxu0 0
        %1369 = vmatpush1.bf16.msra.mxu0 %v1347
        %1370 = vmatprep.subr.bf16.mxu0 0
        %1371 = vmatpush1.bf16.msra.mxu0 %v1346
        %1372 = vmatprep.subr.bf16.mxu0 0
        %1373 = vmatpush1.bf16.msra.mxu0 %v1345
        %1374 = vmatprep.subr.bf16.mxu0 0
        %1375 = vmatpush1.bf16.msra.mxu0 %v1344
        %1376 = vmatprep.subr.bf16.mxu0 0
        %1377 = vmatpush2.bf16.msra.mxu0 0
        %1378 = vmatprep.subr.bf16.mxu0 0
        %1379 = vmatpush2.bf16.msra.mxu0 0
        %1380 = vmatprep.subr.bf16.mxu0 0
        %1381 = vmatpush2.bf16.msra.mxu0 0
        %1382 = vmatprep.subr.bf16.mxu0 0
        %1383 = vmatpush2.bf16.msra.mxu0 0
        %1384 = vmatprep.subr.bf16.mxu0 0
        %1385 = vmatpush2.bf16.msra.mxu0 0
        %1386 = vmatprep.subr.bf16.mxu0 0
        %1387 = vmatpush2.bf16.msra.mxu0 0
        %1388 = vmatprep.subr.bf16.mxu0 0
        %1389 = vmatpush2.bf16.msra.mxu0 0
        %1390 = vmatprep.subr.bf16.mxu0 0
        %1391 = vmatpush2.bf16.msra.mxu0 0
        %1392 = vmatprep.mubr.bf16.mxu0 0
        %1393 = vmatmul.mubr.bf16.gmra.mxu0 %v1295
        %v1394 = vpop.f32.mrf.mxu0
        %v1395 = vadd.f32 0.0, %v1394
        %v1396 = vpop.f32.mrf.mxu0
        %v1397 = vpop.f32.mrf.mxu0
        %v1398 = vpop.f32.mrf.mxu0
        %1399 = vdwg.mxu0
        %v1400 = vadd.f32 %v1217, %v1395
        %1401 = vst.msk [vmem:[%s426] sm:$0xff] %vm616, %v1400
        %s1402 = sand.u32 %s269, 1
        %s1403 = scalar_lea.sflag [#allocation6], %s1402
        %s1404 = sand.u32 %s269, 1
        %s1405 = smul.addr %s1404, 8
        %s1406 = scalar_lea.vmem [#allocation12], %s1405
        // Predicated region
        $region81: #{tpu_custom_call.1} parent=59 // pred_check
          %p1407 = pneg %p279
        $region82: #{tpu_custom_call.1} parent=59 // pred_check_branch
          %1409 = sbr.rel (%p1407) target = $region84
        $region83: #{tpu_custom_call.1} parent=59 // pred_region
          %s1411 = ssub.s32 128, 128
          %1412 = vsyncadd %s1403, %s1411
          %s1413 = sadd.s32 %s32, %s31
          %s1414 = smul.addr %s1413, 128
          %s1415 = scalar_lea.hbm %s10, %s1414
          %s1417 = sshll.u32 %s1406, 4
          %s1418 = int_to_ptr.vmem [resolvable:$true] %s1417
          %1420 = dma.vmem_to_hbm [thread:$0]  %s1418, 128, %s1415, %s1403
        $region84: #{tpu_custom_call.1} parent=59 // pred_fallthru
          _
      $region60: #{tpu_custom_call.1} parent=5 // pred_fallthru
        _
      %p1421 = scmp.le.s32.totalorder 2, %s22
      // Predicated region
      $region85: #{tpu_custom_call.1} parent=5 // pred_check
        %p1422 = pneg %p1421
      $region86: #{tpu_custom_call.1} parent=5 // pred_check_branch
        %1424 = sbr.rel (%p1422) target = $region88
      $region87: #{tpu_custom_call.1} parent=5 // pred_region
        %s1425 = ssub.s32 %s22, 2
        // Predicated region
        $region89: #{tpu_custom_call.1} parent=87 // pred_check
          %p1426 = pneg %p285
        $region90: #{tpu_custom_call.1} parent=87 // pred_check_branch
          %1428 = sbr.rel (%p1426) target = $region92
        $region91: #{tpu_custom_call.1} parent=87 // pred_region
          %s1429 = sand.u32 %s270, 1
          %s1430 = scalar_lea.sflag [#allocation6], %s1429
          %s1431 = sand.u32 %s270, 1
          %s1432 = smul.addr %s1431, 8
          %s1433 = scalar_lea.vmem [#allocation12], %s1432
          %1434 = dma.done %s1430, 128
        $region92: #{tpu_custom_call.1} parent=87 // pred_fallthru
          _
      $region88: #{tpu_custom_call.1} parent=5 // pred_fallthru
        _
    $region6: #{tpu_custom_call.1} parent=1 // loop_footer
      %s26 = sadd.s32 1, %s22
    $region7: #{tpu_custom_call.1} parent=1 // loop_footer_branch
      %21 = sbr.rel target = $region3
    $region8: #{tpu_custom_call.1} parent=1 // loop_exit
      _
    %1435 = vsyncpa [#allocation5], 1
    %s1436 = scalar_lea.sflag [#allocation5], 1
    %1437 = vsyncpa %s1436, 1
    %1438 = vsyncpa [#allocation8], 1
    %1439 = vsyncpa [#allocation11], 1
    %1440 = vsyncpa [#allocation6], 1
    %s1441 = scalar_lea.sflag [#allocation6], 1
    %1442 = vsyncpa %s1441, 1

</llo_original>
